<compile_context>
chip_gen: v7x
topology: tpu7x:2x2x1
jax: 0.10.0
libtpu: 0.0.40
codegen_flags: <defaults>
</compile_context>

<pallas_src>
import numpy as np

import jax
import jax.numpy as jnp
from jax.experimental import pallas as pl
from jax.experimental.pallas import tpu as pltpu

# ---- scaled-down dims (original: ctx=768, spk=1024, audio=512, clsNum=7),
# ---- padded to the 128-lane boundary ----
CLS_NUM  = 7
CLS_PAD  = 128       # lane-dense logits store; sliced back to CLS_NUM outside
CTX_H    = 128
SPK_H    = 128
AUD_H    = 128
SEQ_LEN  = 8
VOCAB    = 64
MAX_UTT  = 4         # static cap on per-speaker utterance history
B_PAD    = 8         # batch padded to the sublane width


# ----------------------------- fused forward kernel ---------------------------
def _alcompm_fused_kernel(
        ctx_emb_ref, spk_emb_ref, n_ref, audio_ref,
        enc_w_ref, gru_w_ref, sc_w_ref, w_head_ref, bias_ref,
        o_ref):
    f32 = jnp.float32
    bf16 = jnp.bfloat16
    B = ctx_emb_ref.shape[0]            # B_PAD (sublane-aligned)
    H = SPK_H
    T = spk_emb_ref.shape[0] // B       # MAX_UTT (time-major packing)

    # ---------- hoisted bias loads (single packed (8, 3H) slab) ----------
    bert_b = bias_ref[0:1, 0:H]
    rob_b  = bias_ref[1:2, 0:H]
    bih0   = bias_ref[2:3, :]
    bhh0   = bias_ref[3:4, :]
    bih1   = bias_ref[4:5, :]
    bhh1   = bias_ref[5:6, :]
    sc_b   = bias_ref[6:7, 0:CTX_H]
    w_b    = bias_ref[7:8, 0:CLS_PAD]

    # ---------- context branch: synthetic BERT CLS projection ----------
    ctx_cls = jnp.tanh(
        jnp.dot(ctx_emb_ref[...], enc_w_ref[:, 0:H],
                preferred_element_type=f32) + bert_b)                   # (B, CTX_H) f32

    # ---------- speaker encoder: all speakers x utterances in ONE matmul ----------
    spk_cls = jnp.tanh(
        jnp.dot(spk_emb_ref[...], enc_w_ref[:, H:2 * H],
                preferred_element_type=f32) + rob_b)                    # (T*B, H) f32

    # ---------- 2-layer GRU (torch.nn.GRU eval semantics, gate order r,z,n) ----------
    # per-step validity masks: step t counts for speaker b iff t < n_utt[b];
    # n_ref is loaded once, masks hoisted out of the recurrence.
    n_utt = n_ref[...]                                                  # (B, 1)
    masks = [n_utt > float(t) for t in range(T)]                        # bool (B, 1)

    # packed GRU weights: lane-aligned Ref views (no load until the matmul)
    wih0_v = gru_w_ref.at[:, 0 * H:3 * H]
    whh0_v = gru_w_ref.at[:, 3 * H:6 * H]
    wih1_v = gru_w_ref.at[:, 6 * H:9 * H]
    whh1_v = gru_w_ref.at[:, 9 * H:12 * H]

    def gru_cell(gi, h, whh_v, bhh):
        gh = jnp.dot(h.astype(bf16), whh_v[...], preferred_element_type=f32) + bhh
        r = jax.nn.sigmoid(gi[:, 0:H]         + gh[:, 0:H])
        z = jax.nn.sigmoid(gi[:, H:2 * H]     + gh[:, H:2 * H])
        c = jnp.tanh(gi[:, 2 * H:3 * H] + r * gh[:, 2 * H:3 * H])
        return (1.0 - z) * c + z * h

    # layer-0 input projection hoisted out of the recurrence; stays in vregs
    gi0 = (jnp.dot(spk_cls.astype(bf16), wih0_v[...],
                   preferred_element_type=f32) + bih0)                  # (T*B, 3H) f32

    # wavefront interleave: iteration t runs layer-0 step t and layer-1 step t-1
    # (the two h@Whh matmuls are independent and overlap on the MXU).
    zeros_h = jnp.zeros((B, H), f32)
    h0, h1 = zeros_h, zeros_h
    h0_prev = zeros_h                                  # never consumed at t == 0
    for t in range(T + 1):                             # static unroll (T is small)
        if t > 0:                                      # layer-1 step t-1
            gi1 = (jnp.dot(h0_prev.astype(bf16), wih1_v[...],
                           preferred_element_type=f32) + bih1)
            h1 = jnp.where(masks[t - 1], gru_cell(gi1, h1, whh1_v, bhh1), h1)
        if t < T:                                      # layer-0 step t
            gi0_t = gi0[t * B:(t + 1) * B, :]          # static, sublane-aligned slice
            h0 = jnp.where(masks[t], gru_cell(gi0_t, h0, whh0_v, bhh0), h0)
            h0_prev = h0
    spk_track = h1                                     # (B, H); zero if n_utt == 0

    # ---------- CoMPM head: lang = ctx + SC(speaker_track) ----------
    lang = (ctx_cls
            + jnp.dot(spk_track.astype(bf16), sc_w_ref[...],
                      preferred_element_type=f32) + sc_b)               # (B, CTX_H)

    # ---------- ALCoMPM head: single K=256 matmul over cat(lang, audio) ----------
    la = jnp.concatenate([lang, audio_ref[...]], axis=1).astype(bf16)   # (B, 2H)
    o_ref[...] = (jnp.dot(la, w_head_ref[...], preferred_element_type=f32)
                  + w_b)                                                # (B, CLS_PAD)


def _fused_forward(ctx_cls_emb, spk_cls_emb, n_utt, audio, p):
    B = ctx_cls_emb.shape[0]
    args = (ctx_cls_emb, spk_cls_emb, n_utt, audio,
            p["enc_w"], p["gru_w"], p["sc_w"], p["w_head"], p["bias"])
    # Single invocation (no grid): total resident footprint is well under 1 MiB.
    # TODO(synk): for production batch sizes, add a batch grid axis with
    # grid-invariant weight blocks + dimension_semantics=("parallel",) so work
    # shards across v7x's 2 TensorCores.
    return pl.pallas_call(
        _alcompm_fused_kernel,
        out_shape=jax.ShapeDtypeStruct((B, CLS_PAD), jnp.float32),
        in_specs=[pl.BlockSpec(memory_space=pltpu.MemorySpace.VMEM)] * len(args),
        out_specs=pl.BlockSpec(memory_space=pltpu.MemorySpace.VMEM),
    )(*args)


# ------------------------------- parameters -----------------------------------
def init_params(key):
    ks = jax.random.split(key, 18)
    s = 0.05

    def nrm(k, shape):
        return s * jax.random.normal(k, shape, jnp.float32)

    # encoder CLS projections packed side-by-side: [:, 0:H]=BERT, [:, H:2H]=RoBERTa
    bert_w = nrm(ks[1], (CTX_H, CTX_H))
    rob_w  = nrm(ks[4], (SPK_H, SPK_H))
    enc_w  = jnp.concatenate([bert_w, rob_w], axis=1).astype(jnp.bfloat16)

    # speakerGRU: 2 layers, hidden = SPK_H; weights pre-transposed to (H, 3H)
    # and packed along lanes as [wih0 | whh0 | wih1 | whh1] -> (H, 12H)
    wih0 = nrm(ks[6],  (SPK_H, 3 * SPK_H))
    whh0 = nrm(ks[7],  (SPK_H, 3 * SPK_H))
    wih1 = nrm(ks[10], (SPK_H, 3 * SPK_H))
    whh1 = nrm(ks[11], (SPK_H, 3 * SPK_H))
    gru_w = jnp.concatenate([wih0, whh0, wih1, whh1], axis=1).astype(jnp.bfloat16)

    # final W: cat(lang, audio) -> clsNum; only the first CLS_NUM output lanes
    # are real classes, the rest are zero padding for a lane-dense 128-wide store.
    w_lang = jnp.zeros((CTX_H, CLS_PAD), jnp.float32).at[:, :CLS_NUM].set(
        nrm(ks[15], (CTX_H, CLS_NUM)))
    w_aud = jnp.zeros((AUD_H, CLS_PAD), jnp.float32).at[:, :CLS_NUM].set(
        nrm(ks[16], (AUD_H, CLS_NUM)))
    w_head = jnp.concatenate([w_lang, w_aud], axis=0).astype(jnp.bfloat16)  # (2H, CLS_PAD)

    # all 1-row biases packed into one (8, 3H) f32 slab (one DMA, one VMEM tile row-group)
    bias = jnp.zeros((8, 3 * SPK_H), jnp.float32)
    bias = bias.at[0, :CTX_H].set(nrm(ks[2],  (CTX_H,)))        # bert_b
    bias = bias.at[1, :SPK_H].set(nrm(ks[5],  (SPK_H,)))        # rob_b
    bias = bias.at[2, :].set(nrm(ks[8],  (3 * SPK_H,)))         # bih0
    bias = bias.at[3, :].set(nrm(ks[9],  (3 * SPK_H,)))         # bhh0
    bias = bias.at[4, :].set(nrm(ks[12], (3 * SPK_H,)))         # bih1
    bias = bias.at[5, :].set(nrm(ks[13], (3 * SPK_H,)))         # bhh1
    # row 6: sc_b = 0, row 7: w_b = 0 (as in nn.Linear default-zero bias stand-in)

    return {
        # synthetic encoder embedding tables (bf16: halves gather + DMA bytes)
        "bert_emb": nrm(ks[0], (VOCAB, CTX_H)).astype(jnp.bfloat16),
        "rob_emb":  nrm(ks[3], (VOCAB, SPK_H)).astype(jnp.bfloat16),
        "enc_w":    enc_w,
        "gru_w":    gru_w,
        "sc_w":     nrm(ks[14], (SPK_H, CTX_H)).astype(jnp.bfloat16),
        "w_head":   w_head,
        "bias":     bias,
    }


# ------------------------------ full forward ----------------------------------
def alcompm_forward(params, batch_input_tokens, batch_speaker_tokens, batch_audio_output):
    B = batch_input_tokens.shape[0]
    assert B <= B_PAD, "TODO(synk): tile over the batch for B > B_PAD"

    # Context branch: the encoder head only consumes last_hidden_state[:, 0, :],
    # so gather ONLY the token-0 (CLS) embeddings; batch padded to B_PAD sublanes.
    tok0 = np.zeros((B_PAD,), np.int32)
    tok0[:B] = np.asarray(batch_input_tokens[:, 0])
    ctx_cls_emb = params["bert_emb"][jnp.asarray(tok0)]                  # (B_PAD, CTX_H) bf16

    # Speaker branch: host-side numpy packing of the ragged per-speaker
    # histories into one dense (B_PAD, MAX_UTT) block of CLS token ids.
    spk_tok0 = np.zeros((B_PAD, MAX_UTT), np.int32)
    counts = np.zeros((B_PAD, 1), np.float32)
    for b, spk_tokens in enumerate(batch_speaker_tokens):
        n = int(spk_tokens.shape[0])
        assert n <= MAX_UTT, "TODO(synk): chunk utterance histories longer than MAX_UTT"
        counts[b, 0] = float(n)
        if n > 0:
            spk_tok0[b, :n] = np.asarray(spk_tokens[:, 0])

    spk_cls_emb = params["rob_emb"][jnp.asarray(spk_tok0)]               # (B_PAD, MAX_UTT, SPK_H)
    # time-major flatten so GRU step t is the contiguous row range [t*B_PAD, (t+1)*B_PAD)
    spk_cls_emb = spk_cls_emb.transpose(1, 0, 2).reshape(MAX_UTT * B_PAD, SPK_H)

    n_utt = jnp.asarray(counts)                                          # (B_PAD, 1) f32
    audio = jnp.zeros((B_PAD, AUD_H), jnp.float32).at[:B].set(batch_audio_output)

    logits_padded = _fused_forward(ctx_cls_emb, spk_cls_emb, n_utt, audio, params)
    return logits_padded[:B, :CLS_NUM]                                   # (B, clsNum)


if __name__ == "__main__":
    key = jax.random.PRNGKey(0)
    kp, k1, k2, k3 = jax.random.split(key, 4)

    params = init_params(kp)

    B = 2
    batch_input_tokens = jax.random.randint(k1, (B, SEQ_LEN), 0, VOCAB, jnp.int32)
    # one speaker with 3 prior utterances, one with none (exercises both branches)
    batch_speaker_tokens = [
        jax.random.randint(k2, (3, SEQ_LEN), 0, VOCAB, jnp.int32),
        jnp.zeros((0, SEQ_LEN), jnp.int32),
    ]
    batch_audio_output = jax.random.normal(k3, (B, AUD_H), jnp.float32)

    logits = alcompm_forward(params, batch_input_tokens,
                             batch_speaker_tokens, batch_audio_output)
    logits = jax.block_until_ready(logits)

    assert logits.shape == (B, CLS_NUM), logits.shape
    assert bool(jnp.all(jnp.isfinite(logits)))
    print("KERNEL_OK")
</pallas_src>

<mosaic_0001>
module attributes {stable_mosaic.version = 11 : i64} {
  func.func @_alcompm_fused_kernel(%arg0: memref<8x128xbf16, #tpu.memory_space<vmem>>, %arg1: memref<32x128xbf16, #tpu.memory_space<vmem>>, %arg2: memref<8x1xf32, #tpu.memory_space<vmem>>, %arg3: memref<8x128xf32, #tpu.memory_space<vmem>>, %arg4: memref<128x256xbf16, #tpu.memory_space<vmem>>, %arg5: memref<128x1536xbf16, #tpu.memory_space<vmem>>, %arg6: memref<128x128xbf16, #tpu.memory_space<vmem>>, %arg7: memref<256x128xbf16, #tpu.memory_space<vmem>>, %arg8: memref<8x384xf32, #tpu.memory_space<vmem>>, %arg9: memref<8x128xf32, #tpu.memory_space<vmem>>) attributes {dimension_semantics = [], scalar_prefetch = 0 : i64, scratch_operands = 0 : i64, tpu.core_type = #tpu.core_type<tc>} {
    %c0 = arith.constant 0 : index
    %c0_0 = arith.constant 0 : index
    %0 = vector.load %arg8[%c0, %c0_0] : memref<8x384xf32, #tpu.memory_space<vmem>>, vector<1x128xf32>
    %c1 = arith.constant 1 : index
    %c0_1 = arith.constant 0 : index
    %1 = vector.load %arg8[%c1, %c0_1] : memref<8x384xf32, #tpu.memory_space<vmem>>, vector<1x128xf32>
    %c2 = arith.constant 2 : index
    %c0_2 = arith.constant 0 : index
    %2 = vector.load %arg8[%c2, %c0_2] : memref<8x384xf32, #tpu.memory_space<vmem>>, vector<1x384xf32>
    %c3 = arith.constant 3 : index
    %c0_3 = arith.constant 0 : index
    %3 = vector.load %arg8[%c3, %c0_3] : memref<8x384xf32, #tpu.memory_space<vmem>>, vector<1x384xf32>
    %c4 = arith.constant 4 : index
    %c0_4 = arith.constant 0 : index
    %4 = vector.load %arg8[%c4, %c0_4] : memref<8x384xf32, #tpu.memory_space<vmem>>, vector<1x384xf32>
    %c5 = arith.constant 5 : index
    %c0_5 = arith.constant 0 : index
    %5 = vector.load %arg8[%c5, %c0_5] : memref<8x384xf32, #tpu.memory_space<vmem>>, vector<1x384xf32>
    %c6 = arith.constant 6 : index
    %c0_6 = arith.constant 0 : index
    %6 = vector.load %arg8[%c6, %c0_6] : memref<8x384xf32, #tpu.memory_space<vmem>>, vector<1x128xf32>
    %c7 = arith.constant 7 : index
    %c0_7 = arith.constant 0 : index
    %7 = vector.load %arg8[%c7, %c0_7] : memref<8x384xf32, #tpu.memory_space<vmem>>, vector<1x128xf32>
    %c0_8 = arith.constant 0 : index
    %c0_9 = arith.constant 0 : index
    %8 = vector.load %arg0[%c0_8, %c0_9] : memref<8x128xbf16, #tpu.memory_space<vmem>>, vector<8x128xbf16>
    %c0_10 = arith.constant 0 : index
    %c0_11 = arith.constant 0 : index
    %9 = vector.load %arg4[%c0_10, %c0_11] : memref<128x256xbf16, #tpu.memory_space<vmem>>, vector<128x128xbf16>
    %cst = arith.constant dense<0.000000e+00> : vector<8x128xf32>
    %10 = tpu.matmul %8, %9, %cst {dimension_numbers = #tpu.dot_dimension_numbers<[1], [0], [0], [1], [0, 0, 1, 1], [], []>} : vector<8x128xbf16>, vector<128x128xbf16>, vector<8x128xf32> -> vector<8x128xf32>
    %11 = vector.broadcast %0 : vector<1x128xf32> to vector<8x128xf32>
    %12 = arith.addf %10, %11 : vector<8x128xf32>
    %13 = math.tanh %12 : vector<8x128xf32>
    %c0_12 = arith.constant 0 : index
    %c0_13 = arith.constant 0 : index
    %14 = vector.load %arg1[%c0_12, %c0_13] : memref<32x128xbf16, #tpu.memory_space<vmem>>, vector<32x128xbf16>
    %c0_14 = arith.constant 0 : index
    %c128 = arith.constant 128 : index
    %15 = vector.load %arg4[%c0_14, %c128] : memref<128x256xbf16, #tpu.memory_space<vmem>>, vector<128x128xbf16>
    %cst_15 = arith.constant dense<0.000000e+00> : vector<32x128xf32>
    %16 = tpu.matmul %14, %15, %cst_15 {dimension_numbers = #tpu.dot_dimension_numbers<[1], [0], [0], [1], [0, 0, 1, 1], [], []>} : vector<32x128xbf16>, vector<128x128xbf16>, vector<32x128xf32> -> vector<32x128xf32>
    %17 = vector.broadcast %1 : vector<1x128xf32> to vector<32x128xf32>
    %18 = arith.addf %16, %17 : vector<32x128xf32>
    %19 = math.tanh %18 : vector<32x128xf32>
    %c0_16 = arith.constant 0 : index
    %c0_17 = arith.constant 0 : index
    %20 = vector.load %arg2[%c0_16, %c0_17] : memref<8x1xf32, #tpu.memory_space<vmem>>, vector<8x1xf32>
    %cst_18 = arith.constant 0.000000e+00 : f32
    %21 = vector.broadcast %cst_18 : f32 to vector<8x1xf32>
    %22 = arith.cmpf ogt, %20, %21 : vector<8x1xf32>
    %cst_19 = arith.constant 1.000000e+00 : f32
    %23 = vector.broadcast %cst_19 : f32 to vector<8x1xf32>
    %24 = arith.cmpf ogt, %20, %23 : vector<8x1xf32>
    %cst_20 = arith.constant 2.000000e+00 : f32
    %25 = vector.broadcast %cst_20 : f32 to vector<8x1xf32>
    %26 = arith.cmpf ogt, %20, %25 : vector<8x1xf32>
    %cst_21 = arith.constant 3.000000e+00 : f32
    %27 = vector.broadcast %cst_21 : f32 to vector<8x1xf32>
    %28 = arith.cmpf ogt, %20, %27 : vector<8x1xf32>
    %29 = arith.truncf %19 : vector<32x128xf32> to vector<32x128xbf16>
    %c0_22 = arith.constant 0 : index
    %c0_23 = arith.constant 0 : index
    %30 = vector.load %arg5[%c0_22, %c0_23] : memref<128x1536xbf16, #tpu.memory_space<vmem>>, vector<128x384xbf16>
    %cst_24 = arith.constant dense<0.000000e+00> : vector<32x384xf32>
    %31 = tpu.matmul %29, %30, %cst_24 {dimension_numbers = #tpu.dot_dimension_numbers<[1], [0], [0], [1], [0, 0, 1, 1], [], []>} : vector<32x128xbf16>, vector<128x384xbf16>, vector<32x384xf32> -> vector<32x384xf32>
    %32 = vector.broadcast %2 : vector<1x384xf32> to vector<32x384xf32>
    %33 = arith.addf %31, %32 : vector<32x384xf32>
    %cst_25 = arith.constant 0.000000e+00 : f32
    %34 = vector.broadcast %cst_25 : f32 to vector<8x128xf32>
    %35 = vector.extract_strided_slice %33 {offsets = [0, 0], sizes = [8, 384], strides = [1, 1]} : vector<32x384xf32> to vector<8x384xf32>
    %36 = arith.truncf %34 : vector<8x128xf32> to vector<8x128xbf16>
    %c0_26 = arith.constant 0 : index
    %c384 = arith.constant 384 : index
    %37 = vector.load %arg5[%c0_26, %c384] : memref<128x1536xbf16, #tpu.memory_space<vmem>>, vector<128x384xbf16>
    %cst_27 = arith.constant dense<0.000000e+00> : vector<8x384xf32>
    %38 = tpu.matmul %36, %37, %cst_27 {dimension_numbers = #tpu.dot_dimension_numbers<[1], [0], [0], [1], [0, 0, 1, 1], [], []>} : vector<8x128xbf16>, vector<128x384xbf16>, vector<8x384xf32> -> vector<8x384xf32>
    %39 = vector.broadcast %3 : vector<1x384xf32> to vector<8x384xf32>
    %40 = arith.addf %38, %39 : vector<8x384xf32>
    %41 = vector.extract_strided_slice %35 {offsets = [0, 0], sizes = [8, 128], strides = [1, 1]} : vector<8x384xf32> to vector<8x128xf32>
    %42 = vector.extract_strided_slice %40 {offsets = [0, 0], sizes = [8, 128], strides = [1, 1]} : vector<8x384xf32> to vector<8x128xf32>
    %43 = arith.addf %41, %42 : vector<8x128xf32>
    %44 = arith.negf %43 : vector<8x128xf32>
    %45 = math.exp %44 : vector<8x128xf32>
    %cst_28 = arith.constant 1.000000e+00 : f32
    %46 = vector.broadcast %cst_28 : f32 to vector<8x128xf32>
    %47 = arith.addf %46, %45 : vector<8x128xf32>
    %48 = arith.divf %46, %47 : vector<8x128xf32>
    %49 = vector.extract_strided_slice %35 {offsets = [0, 128], sizes = [8, 128], strides = [1, 1]} : vector<8x384xf32> to vector<8x128xf32>
    %50 = vector.extract_strided_slice %40 {offsets = [0, 128], sizes = [8, 128], strides = [1, 1]} : vector<8x384xf32> to vector<8x128xf32>
    %51 = arith.addf %49, %50 : vector<8x128xf32>
    %52 = arith.negf %51 : vector<8x128xf32>
    %53 = math.exp %52 : vector<8x128xf32>
    %cst_29 = arith.constant 1.000000e+00 : f32
    %54 = vector.broadcast %cst_29 : f32 to vector<8x128xf32>
    %55 = arith.addf %54, %53 : vector<8x128xf32>
    %56 = arith.divf %54, %55 : vector<8x128xf32>
    %57 = vector.extract_strided_slice %35 {offsets = [0, 256], sizes = [8, 128], strides = [1, 1]} : vector<8x384xf32> to vector<8x128xf32>
    %58 = vector.extract_strided_slice %40 {offsets = [0, 256], sizes = [8, 128], strides = [1, 1]} : vector<8x384xf32> to vector<8x128xf32>
    %59 = arith.mulf %48, %58 : vector<8x128xf32>
    %60 = arith.addf %57, %59 : vector<8x128xf32>
    %61 = math.tanh %60 : vector<8x128xf32>
    %cst_30 = arith.constant 1.000000e+00 : f32
    %62 = vector.broadcast %cst_30 : f32 to vector<8x128xf32>
    %63 = arith.subf %62, %56 : vector<8x128xf32>
    %64 = arith.mulf %63, %61 : vector<8x128xf32>
    %65 = arith.mulf %56, %34 : vector<8x128xf32>
    %66 = arith.addf %64, %65 : vector<8x128xf32>
    %67 = vector.shape_cast %22 : vector<8x1xi1> to vector<8x1xi1>
    %68 = vector.broadcast %67 : vector<8x1xi1> to vector<8x128xi1>
    %69 = arith.select %68, %66, %34 : vector<8x128xi1>, vector<8x128xf32>
    %70 = arith.truncf %69 : vector<8x128xf32> to vector<8x128xbf16>
    %c0_31 = arith.constant 0 : index
    %c768 = arith.constant 768 : index
    %71 = vector.load %arg5[%c0_31, %c768] : memref<128x1536xbf16, #tpu.memory_space<vmem>>, vector<128x384xbf16>
    %cst_32 = arith.constant dense<0.000000e+00> : vector<8x384xf32>
    %72 = tpu.matmul %70, %71, %cst_32 {dimension_numbers = #tpu.dot_dimension_numbers<[1], [0], [0], [1], [0, 0, 1, 1], [], []>} : vector<8x128xbf16>, vector<128x384xbf16>, vector<8x384xf32> -> vector<8x384xf32>
    %73 = vector.broadcast %4 : vector<1x384xf32> to vector<8x384xf32>
    %74 = arith.addf %72, %73 : vector<8x384xf32>
    %75 = arith.truncf %34 : vector<8x128xf32> to vector<8x128xbf16>
    %c0_33 = arith.constant 0 : index
    %c1152 = arith.constant 1152 : index
    %76 = vector.load %arg5[%c0_33, %c1152] : memref<128x1536xbf16, #tpu.memory_space<vmem>>, vector<128x384xbf16>
    %cst_34 = arith.constant dense<0.000000e+00> : vector<8x384xf32>
    %77 = tpu.matmul %75, %76, %cst_34 {dimension_numbers = #tpu.dot_dimension_numbers<[1], [0], [0], [1], [0, 0, 1, 1], [], []>} : vector<8x128xbf16>, vector<128x384xbf16>, vector<8x384xf32> -> vector<8x384xf32>
    %78 = vector.broadcast %5 : vector<1x384xf32> to vector<8x384xf32>
    %79 = arith.addf %77, %78 : vector<8x384xf32>
    %80 = vector.extract_strided_slice %74 {offsets = [0, 0], sizes = [8, 128], strides = [1, 1]} : vector<8x384xf32> to vector<8x128xf32>
    %81 = vector.extract_strided_slice %79 {offsets = [0, 0], sizes = [8, 128], strides = [1, 1]} : vector<8x384xf32> to vector<8x128xf32>
    %82 = arith.addf %80, %81 : vector<8x128xf32>
    %83 = arith.negf %82 : vector<8x128xf32>
    %84 = math.exp %83 : vector<8x128xf32>
    %cst_35 = arith.constant 1.000000e+00 : f32
    %85 = vector.broadcast %cst_35 : f32 to vector<8x128xf32>
    %86 = arith.addf %85, %84 : vector<8x128xf32>
    %87 = arith.divf %85, %86 : vector<8x128xf32>
    %88 = vector.extract_strided_slice %74 {offsets = [0, 128], sizes = [8, 128], strides = [1, 1]} : vector<8x384xf32> to vector<8x128xf32>
    %89 = vector.extract_strided_slice %79 {offsets = [0, 128], sizes = [8, 128], strides = [1, 1]} : vector<8x384xf32> to vector<8x128xf32>
    %90 = arith.addf %88, %89 : vector<8x128xf32>
    %91 = arith.negf %90 : vector<8x128xf32>
    %92 = math.exp %91 : vector<8x128xf32>
    %cst_36 = arith.constant 1.000000e+00 : f32
    %93 = vector.broadcast %cst_36 : f32 to vector<8x128xf32>
    %94 = arith.addf %93, %92 : vector<8x128xf32>
    %95 = arith.divf %93, %94 : vector<8x128xf32>
    %96 = vector.extract_strided_slice %74 {offsets = [0, 256], sizes = [8, 128], strides = [1, 1]} : vector<8x384xf32> to vector<8x128xf32>
    %97 = vector.extract_strided_slice %79 {offsets = [0, 256], sizes = [8, 128], strides = [1, 1]} : vector<8x384xf32> to vector<8x128xf32>
    %98 = arith.mulf %87, %97 : vector<8x128xf32>
    %99 = arith.addf %96, %98 : vector<8x128xf32>
    %100 = math.tanh %99 : vector<8x128xf32>
    %cst_37 = arith.constant 1.000000e+00 : f32
    %101 = vector.broadcast %cst_37 : f32 to vector<8x128xf32>
    %102 = arith.subf %101, %95 : vector<8x128xf32>
    %103 = arith.mulf %102, %100 : vector<8x128xf32>
    %104 = arith.mulf %95, %34 : vector<8x128xf32>
    %105 = arith.addf %103, %104 : vector<8x128xf32>
    %106 = vector.shape_cast %22 : vector<8x1xi1> to vector<8x1xi1>
    %107 = vector.broadcast %106 : vector<8x1xi1> to vector<8x128xi1>
    %108 = arith.select %107, %105, %34 : vector<8x128xi1>, vector<8x128xf32>
    %109 = vector.extract_strided_slice %33 {offsets = [8, 0], sizes = [8, 384], strides = [1, 1]} : vector<32x384xf32> to vector<8x384xf32>
    %110 = arith.truncf %69 : vector<8x128xf32> to vector<8x128xbf16>
    %c0_38 = arith.constant 0 : index
    %c384_39 = arith.constant 384 : index
    %111 = vector.load %arg5[%c0_38, %c384_39] : memref<128x1536xbf16, #tpu.memory_space<vmem>>, vector<128x384xbf16>
    %cst_40 = arith.constant dense<0.000000e+00> : vector<8x384xf32>
    %112 = tpu.matmul %110, %111, %cst_40 {dimension_numbers = #tpu.dot_dimension_numbers<[1], [0], [0], [1], [0, 0, 1, 1], [], []>} : vector<8x128xbf16>, vector<128x384xbf16>, vector<8x384xf32> -> vector<8x384xf32>
    %113 = vector.broadcast %3 : vector<1x384xf32> to vector<8x384xf32>
    %114 = arith.addf %112, %113 : vector<8x384xf32>
    %115 = vector.extract_strided_slice %109 {offsets = [0, 0], sizes = [8, 128], strides = [1, 1]} : vector<8x384xf32> to vector<8x128xf32>
    %116 = vector.extract_strided_slice %114 {offsets = [0, 0], sizes = [8, 128], strides = [1, 1]} : vector<8x384xf32> to vector<8x128xf32>
    %117 = arith.addf %115, %116 : vector<8x128xf32>
    %118 = arith.negf %117 : vector<8x128xf32>
    %119 = math.exp %118 : vector<8x128xf32>
    %cst_41 = arith.constant 1.000000e+00 : f32
    %120 = vector.broadcast %cst_41 : f32 to vector<8x128xf32>
    %121 = arith.addf %120, %119 : vector<8x128xf32>
    %122 = arith.divf %120, %121 : vector<8x128xf32>
    %123 = vector.extract_strided_slice %109 {offsets = [0, 128], sizes = [8, 128], strides = [1, 1]} : vector<8x384xf32> to vector<8x128xf32>
    %124 = vector.extract_strided_slice %114 {offsets = [0, 128], sizes = [8, 128], strides = [1, 1]} : vector<8x384xf32> to vector<8x128xf32>
    %125 = arith.addf %123, %124 : vector<8x128xf32>
    %126 = arith.negf %125 : vector<8x128xf32>
    %127 = math.exp %126 : vector<8x128xf32>
    %cst_42 = arith.constant 1.000000e+00 : f32
    %128 = vector.broadcast %cst_42 : f32 to vector<8x128xf32>
    %129 = arith.addf %128, %127 : vector<8x128xf32>
    %130 = arith.divf %128, %129 : vector<8x128xf32>
    %131 = vector.extract_strided_slice %109 {offsets = [0, 256], sizes = [8, 128], strides = [1, 1]} : vector<8x384xf32> to vector<8x128xf32>
    %132 = vector.extract_strided_slice %114 {offsets = [0, 256], sizes = [8, 128], strides = [1, 1]} : vector<8x384xf32> to vector<8x128xf32>
    %133 = arith.mulf %122, %132 : vector<8x128xf32>
    %134 = arith.addf %131, %133 : vector<8x128xf32>
    %135 = math.tanh %134 : vector<8x128xf32>
    %cst_43 = arith.constant 1.000000e+00 : f32
    %136 = vector.broadcast %cst_43 : f32 to vector<8x128xf32>
    %137 = arith.subf %136, %130 : vector<8x128xf32>
    %138 = arith.mulf %137, %135 : vector<8x128xf32>
    %139 = arith.mulf %130, %69 : vector<8x128xf32>
    %140 = arith.addf %138, %139 : vector<8x128xf32>
    %141 = vector.shape_cast %24 : vector<8x1xi1> to vector<8x1xi1>
    %142 = vector.broadcast %141 : vector<8x1xi1> to vector<8x128xi1>
    %143 = arith.select %142, %140, %69 : vector<8x128xi1>, vector<8x128xf32>
    %144 = arith.truncf %143 : vector<8x128xf32> to vector<8x128xbf16>
    %c0_44 = arith.constant 0 : index
    %c768_45 = arith.constant 768 : index
    %145 = vector.load %arg5[%c0_44, %c768_45] : memref<128x1536xbf16, #tpu.memory_space<vmem>>, vector<128x384xbf16>
    %cst_46 = arith.constant dense<0.000000e+00> : vector<8x384xf32>
    %146 = tpu.matmul %144, %145, %cst_46 {dimension_numbers = #tpu.dot_dimension_numbers<[1], [0], [0], [1], [0, 0, 1, 1], [], []>} : vector<8x128xbf16>, vector<128x384xbf16>, vector<8x384xf32> -> vector<8x384xf32>
    %147 = vector.broadcast %4 : vector<1x384xf32> to vector<8x384xf32>
    %148 = arith.addf %146, %147 : vector<8x384xf32>
    %149 = arith.truncf %108 : vector<8x128xf32> to vector<8x128xbf16>
    %c0_47 = arith.constant 0 : index
    %c1152_48 = arith.constant 1152 : index
    %150 = vector.load %arg5[%c0_47, %c1152_48] : memref<128x1536xbf16, #tpu.memory_space<vmem>>, vector<128x384xbf16>
    %cst_49 = arith.constant dense<0.000000e+00> : vector<8x384xf32>
    %151 = tpu.matmul %149, %150, %cst_49 {dimension_numbers = #tpu.dot_dimension_numbers<[1], [0], [0], [1], [0, 0, 1, 1], [], []>} : vector<8x128xbf16>, vector<128x384xbf16>, vector<8x384xf32> -> vector<8x384xf32>
    %152 = vector.broadcast %5 : vector<1x384xf32> to vector<8x384xf32>
    %153 = arith.addf %151, %152 : vector<8x384xf32>
    %154 = vector.extract_strided_slice %148 {offsets = [0, 0], sizes = [8, 128], strides = [1, 1]} : vector<8x384xf32> to vector<8x128xf32>
    %155 = vector.extract_strided_slice %153 {offsets = [0, 0], sizes = [8, 128], strides = [1, 1]} : vector<8x384xf32> to vector<8x128xf32>
    %156 = arith.addf %154, %155 : vector<8x128xf32>
    %157 = arith.negf %156 : vector<8x128xf32>
    %158 = math.exp %157 : vector<8x128xf32>
    %cst_50 = arith.constant 1.000000e+00 : f32
    %159 = vector.broadcast %cst_50 : f32 to vector<8x128xf32>
    %160 = arith.addf %159, %158 : vector<8x128xf32>
    %161 = arith.divf %159, %160 : vector<8x128xf32>
    %162 = vector.extract_strided_slice %148 {offsets = [0, 128], sizes = [8, 128], strides = [1, 1]} : vector<8x384xf32> to vector<8x128xf32>
    %163 = vector.extract_strided_slice %153 {offsets = [0, 128], sizes = [8, 128], strides = [1, 1]} : vector<8x384xf32> to vector<8x128xf32>
    %164 = arith.addf %162, %163 : vector<8x128xf32>
    %165 = arith.negf %164 : vector<8x128xf32>
    %166 = math.exp %165 : vector<8x128xf32>
    %cst_51 = arith.constant 1.000000e+00 : f32
    %167 = vector.broadcast %cst_51 : f32 to vector<8x128xf32>
    %168 = arith.addf %167, %166 : vector<8x128xf32>
    %169 = arith.divf %167, %168 : vector<8x128xf32>
    %170 = vector.extract_strided_slice %148 {offsets = [0, 256], sizes = [8, 128], strides = [1, 1]} : vector<8x384xf32> to vector<8x128xf32>
    %171 = vector.extract_strided_slice %153 {offsets = [0, 256], sizes = [8, 128], strides = [1, 1]} : vector<8x384xf32> to vector<8x128xf32>
    %172 = arith.mulf %161, %171 : vector<8x128xf32>
    %173 = arith.addf %170, %172 : vector<8x128xf32>
    %174 = math.tanh %173 : vector<8x128xf32>
    %cst_52 = arith.constant 1.000000e+00 : f32
    %175 = vector.broadcast %cst_52 : f32 to vector<8x128xf32>
    %176 = arith.subf %175, %169 : vector<8x128xf32>
    %177 = arith.mulf %176, %174 : vector<8x128xf32>
    %178 = arith.mulf %169, %108 : vector<8x128xf32>
    %179 = arith.addf %177, %178 : vector<8x128xf32>
    %180 = vector.shape_cast %24 : vector<8x1xi1> to vector<8x1xi1>
    %181 = vector.broadcast %180 : vector<8x1xi1> to vector<8x128xi1>
    %182 = arith.select %181, %179, %108 : vector<8x128xi1>, vector<8x128xf32>
    %183 = vector.extract_strided_slice %33 {offsets = [16, 0], sizes = [8, 384], strides = [1, 1]} : vector<32x384xf32> to vector<8x384xf32>
    %184 = arith.truncf %143 : vector<8x128xf32> to vector<8x128xbf16>
    %c0_53 = arith.constant 0 : index
    %c384_54 = arith.constant 384 : index
    %185 = vector.load %arg5[%c0_53, %c384_54] : memref<128x1536xbf16, #tpu.memory_space<vmem>>, vector<128x384xbf16>
    %cst_55 = arith.constant dense<0.000000e+00> : vector<8x384xf32>
    %186 = tpu.matmul %184, %185, %cst_55 {dimension_numbers = #tpu.dot_dimension_numbers<[1], [0], [0], [1], [0, 0, 1, 1], [], []>} : vector<8x128xbf16>, vector<128x384xbf16>, vector<8x384xf32> -> vector<8x384xf32>
    %187 = vector.broadcast %3 : vector<1x384xf32> to vector<8x384xf32>
    %188 = arith.addf %186, %187 : vector<8x384xf32>
    %189 = vector.extract_strided_slice %183 {offsets = [0, 0], sizes = [8, 128], strides = [1, 1]} : vector<8x384xf32> to vector<8x128xf32>
    %190 = vector.extract_strided_slice %188 {offsets = [0, 0], sizes = [8, 128], strides = [1, 1]} : vector<8x384xf32> to vector<8x128xf32>
    %191 = arith.addf %189, %190 : vector<8x128xf32>
    %192 = arith.negf %191 : vector<8x128xf32>
    %193 = math.exp %192 : vector<8x128xf32>
    %cst_56 = arith.constant 1.000000e+00 : f32
    %194 = vector.broadcast %cst_56 : f32 to vector<8x128xf32>
    %195 = arith.addf %194, %193 : vector<8x128xf32>
    %196 = arith.divf %194, %195 : vector<8x128xf32>
    %197 = vector.extract_strided_slice %183 {offsets = [0, 128], sizes = [8, 128], strides = [1, 1]} : vector<8x384xf32> to vector<8x128xf32>
    %198 = vector.extract_strided_slice %188 {offsets = [0, 128], sizes = [8, 128], strides = [1, 1]} : vector<8x384xf32> to vector<8x128xf32>
    %199 = arith.addf %197, %198 : vector<8x128xf32>
    %200 = arith.negf %199 : vector<8x128xf32>
    %201 = math.exp %200 : vector<8x128xf32>
    %cst_57 = arith.constant 1.000000e+00 : f32
    %202 = vector.broadcast %cst_57 : f32 to vector<8x128xf32>
    %203 = arith.addf %202, %201 : vector<8x128xf32>
    %204 = arith.divf %202, %203 : vector<8x128xf32>
    %205 = vector.extract_strided_slice %183 {offsets = [0, 256], sizes = [8, 128], strides = [1, 1]} : vector<8x384xf32> to vector<8x128xf32>
    %206 = vector.extract_strided_slice %188 {offsets = [0, 256], sizes = [8, 128], strides = [1, 1]} : vector<8x384xf32> to vector<8x128xf32>
    %207 = arith.mulf %196, %206 : vector<8x128xf32>
    %208 = arith.addf %205, %207 : vector<8x128xf32>
    %209 = math.tanh %208 : vector<8x128xf32>
    %cst_58 = arith.constant 1.000000e+00 : f32
    %210 = vector.broadcast %cst_58 : f32 to vector<8x128xf32>
    %211 = arith.subf %210, %204 : vector<8x128xf32>
    %212 = arith.mulf %211, %209 : vector<8x128xf32>
    %213 = arith.mulf %204, %143 : vector<8x128xf32>
    %214 = arith.addf %212, %213 : vector<8x128xf32>
    %215 = vector.shape_cast %26 : vector<8x1xi1> to vector<8x1xi1>
    %216 = vector.broadcast %215 : vector<8x1xi1> to vector<8x128xi1>
    %217 = arith.select %216, %214, %143 : vector<8x128xi1>, vector<8x128xf32>
    %218 = arith.truncf %217 : vector<8x128xf32> to vector<8x128xbf16>
    %c0_59 = arith.constant 0 : index
    %c768_60 = arith.constant 768 : index
    %219 = vector.load %arg5[%c0_59, %c768_60] : memref<128x1536xbf16, #tpu.memory_space<vmem>>, vector<128x384xbf16>
    %cst_61 = arith.constant dense<0.000000e+00> : vector<8x384xf32>
    %220 = tpu.matmul %218, %219, %cst_61 {dimension_numbers = #tpu.dot_dimension_numbers<[1], [0], [0], [1], [0, 0, 1, 1], [], []>} : vector<8x128xbf16>, vector<128x384xbf16>, vector<8x384xf32> -> vector<8x384xf32>
    %221 = vector.broadcast %4 : vector<1x384xf32> to vector<8x384xf32>
    %222 = arith.addf %220, %221 : vector<8x384xf32>
    %223 = arith.truncf %182 : vector<8x128xf32> to vector<8x128xbf16>
    %c0_62 = arith.constant 0 : index
    %c1152_63 = arith.constant 1152 : index
    %224 = vector.load %arg5[%c0_62, %c1152_63] : memref<128x1536xbf16, #tpu.memory_space<vmem>>, vector<128x384xbf16>
    %cst_64 = arith.constant dense<0.000000e+00> : vector<8x384xf32>
    %225 = tpu.matmul %223, %224, %cst_64 {dimension_numbers = #tpu.dot_dimension_numbers<[1], [0], [0], [1], [0, 0, 1, 1], [], []>} : vector<8x128xbf16>, vector<128x384xbf16>, vector<8x384xf32> -> vector<8x384xf32>
    %226 = vector.broadcast %5 : vector<1x384xf32> to vector<8x384xf32>
    %227 = arith.addf %225, %226 : vector<8x384xf32>
    %228 = vector.extract_strided_slice %222 {offsets = [0, 0], sizes = [8, 128], strides = [1, 1]} : vector<8x384xf32> to vector<8x128xf32>
    %229 = vector.extract_strided_slice %227 {offsets = [0, 0], sizes = [8, 128], strides = [1, 1]} : vector<8x384xf32> to vector<8x128xf32>
    %230 = arith.addf %228, %229 : vector<8x128xf32>
    %231 = arith.negf %230 : vector<8x128xf32>
    %232 = math.exp %231 : vector<8x128xf32>
    %cst_65 = arith.constant 1.000000e+00 : f32
    %233 = vector.broadcast %cst_65 : f32 to vector<8x128xf32>
    %234 = arith.addf %233, %232 : vector<8x128xf32>
    %235 = arith.divf %233, %234 : vector<8x128xf32>
    %236 = vector.extract_strided_slice %222 {offsets = [0, 128], sizes = [8, 128], strides = [1, 1]} : vector<8x384xf32> to vector<8x128xf32>
    %237 = vector.extract_strided_slice %227 {offsets = [0, 128], sizes = [8, 128], strides = [1, 1]} : vector<8x384xf32> to vector<8x128xf32>
    %238 = arith.addf %236, %237 : vector<8x128xf32>
    %239 = arith.negf %238 : vector<8x128xf32>
    %240 = math.exp %239 : vector<8x128xf32>
    %cst_66 = arith.constant 1.000000e+00 : f32
    %241 = vector.broadcast %cst_66 : f32 to vector<8x128xf32>
    %242 = arith.addf %241, %240 : vector<8x128xf32>
    %243 = arith.divf %241, %242 : vector<8x128xf32>
    %244 = vector.extract_strided_slice %222 {offsets = [0, 256], sizes = [8, 128], strides = [1, 1]} : vector<8x384xf32> to vector<8x128xf32>
    %245 = vector.extract_strided_slice %227 {offsets = [0, 256], sizes = [8, 128], strides = [1, 1]} : vector<8x384xf32> to vector<8x128xf32>
    %246 = arith.mulf %235, %245 : vector<8x128xf32>
    %247 = arith.addf %244, %246 : vector<8x128xf32>
    %248 = math.tanh %247 : vector<8x128xf32>
    %cst_67 = arith.constant 1.000000e+00 : f32
    %249 = vector.broadcast %cst_67 : f32 to vector<8x128xf32>
    %250 = arith.subf %249, %243 : vector<8x128xf32>
    %251 = arith.mulf %250, %248 : vector<8x128xf32>
    %252 = arith.mulf %243, %182 : vector<8x128xf32>
    %253 = arith.addf %251, %252 : vector<8x128xf32>
    %254 = vector.shape_cast %26 : vector<8x1xi1> to vector<8x1xi1>
    %255 = vector.broadcast %254 : vector<8x1xi1> to vector<8x128xi1>
    %256 = arith.select %255, %253, %182 : vector<8x128xi1>, vector<8x128xf32>
    %257 = vector.extract_strided_slice %33 {offsets = [24, 0], sizes = [8, 384], strides = [1, 1]} : vector<32x384xf32> to vector<8x384xf32>
    %258 = arith.truncf %217 : vector<8x128xf32> to vector<8x128xbf16>
    %c0_68 = arith.constant 0 : index
    %c384_69 = arith.constant 384 : index
    %259 = vector.load %arg5[%c0_68, %c384_69] : memref<128x1536xbf16, #tpu.memory_space<vmem>>, vector<128x384xbf16>
    %cst_70 = arith.constant dense<0.000000e+00> : vector<8x384xf32>
    %260 = tpu.matmul %258, %259, %cst_70 {dimension_numbers = #tpu.dot_dimension_numbers<[1], [0], [0], [1], [0, 0, 1, 1], [], []>} : vector<8x128xbf16>, vector<128x384xbf16>, vector<8x384xf32> -> vector<8x384xf32>
    %261 = vector.broadcast %3 : vector<1x384xf32> to vector<8x384xf32>
    %262 = arith.addf %260, %261 : vector<8x384xf32>
    %263 = vector.extract_strided_slice %257 {offsets = [0, 0], sizes = [8, 128], strides = [1, 1]} : vector<8x384xf32> to vector<8x128xf32>
    %264 = vector.extract_strided_slice %262 {offsets = [0, 0], sizes = [8, 128], strides = [1, 1]} : vector<8x384xf32> to vector<8x128xf32>
    %265 = arith.addf %263, %264 : vector<8x128xf32>
    %266 = arith.negf %265 : vector<8x128xf32>
    %267 = math.exp %266 : vector<8x128xf32>
    %cst_71 = arith.constant 1.000000e+00 : f32
    %268 = vector.broadcast %cst_71 : f32 to vector<8x128xf32>
    %269 = arith.addf %268, %267 : vector<8x128xf32>
    %270 = arith.divf %268, %269 : vector<8x128xf32>
    %271 = vector.extract_strided_slice %257 {offsets = [0, 128], sizes = [8, 128], strides = [1, 1]} : vector<8x384xf32> to vector<8x128xf32>
    %272 = vector.extract_strided_slice %262 {offsets = [0, 128], sizes = [8, 128], strides = [1, 1]} : vector<8x384xf32> to vector<8x128xf32>
    %273 = arith.addf %271, %272 : vector<8x128xf32>
    %274 = arith.negf %273 : vector<8x128xf32>
    %275 = math.exp %274 : vector<8x128xf32>
    %cst_72 = arith.constant 1.000000e+00 : f32
    %276 = vector.broadcast %cst_72 : f32 to vector<8x128xf32>
    %277 = arith.addf %276, %275 : vector<8x128xf32>
    %278 = arith.divf %276, %277 : vector<8x128xf32>
    %279 = vector.extract_strided_slice %257 {offsets = [0, 256], sizes = [8, 128], strides = [1, 1]} : vector<8x384xf32> to vector<8x128xf32>
    %280 = vector.extract_strided_slice %262 {offsets = [0, 256], sizes = [8, 128], strides = [1, 1]} : vector<8x384xf32> to vector<8x128xf32>
    %281 = arith.mulf %270, %280 : vector<8x128xf32>
    %282 = arith.addf %279, %281 : vector<8x128xf32>
    %283 = math.tanh %282 : vector<8x128xf32>
    %cst_73 = arith.constant 1.000000e+00 : f32
    %284 = vector.broadcast %cst_73 : f32 to vector<8x128xf32>
    %285 = arith.subf %284, %278 : vector<8x128xf32>
    %286 = arith.mulf %285, %283 : vector<8x128xf32>
    %287 = arith.mulf %278, %217 : vector<8x128xf32>
    %288 = arith.addf %286, %287 : vector<8x128xf32>
    %289 = vector.shape_cast %28 : vector<8x1xi1> to vector<8x1xi1>
    %290 = vector.broadcast %289 : vector<8x1xi1> to vector<8x128xi1>
    %291 = arith.select %290, %288, %217 : vector<8x128xi1>, vector<8x128xf32>
    %292 = arith.truncf %291 : vector<8x128xf32> to vector<8x128xbf16>
    %c0_74 = arith.constant 0 : index
    %c768_75 = arith.constant 768 : index
    %293 = vector.load %arg5[%c0_74, %c768_75] : memref<128x1536xbf16, #tpu.memory_space<vmem>>, vector<128x384xbf16>
    %cst_76 = arith.constant dense<0.000000e+00> : vector<8x384xf32>
    %294 = tpu.matmul %292, %293, %cst_76 {dimension_numbers = #tpu.dot_dimension_numbers<[1], [0], [0], [1], [0, 0, 1, 1], [], []>} : vector<8x128xbf16>, vector<128x384xbf16>, vector<8x384xf32> -> vector<8x384xf32>
    %295 = vector.broadcast %4 : vector<1x384xf32> to vector<8x384xf32>
    %296 = arith.addf %294, %295 : vector<8x384xf32>
    %297 = arith.truncf %256 : vector<8x128xf32> to vector<8x128xbf16>
    %c0_77 = arith.constant 0 : index
    %c1152_78 = arith.constant 1152 : index
    %298 = vector.load %arg5[%c0_77, %c1152_78] : memref<128x1536xbf16, #tpu.memory_space<vmem>>, vector<128x384xbf16>
    %cst_79 = arith.constant dense<0.000000e+00> : vector<8x384xf32>
    %299 = tpu.matmul %297, %298, %cst_79 {dimension_numbers = #tpu.dot_dimension_numbers<[1], [0], [0], [1], [0, 0, 1, 1], [], []>} : vector<8x128xbf16>, vector<128x384xbf16>, vector<8x384xf32> -> vector<8x384xf32>
    %300 = vector.broadcast %5 : vector<1x384xf32> to vector<8x384xf32>
    %301 = arith.addf %299, %300 : vector<8x384xf32>
    %302 = vector.extract_strided_slice %296 {offsets = [0, 0], sizes = [8, 128], strides = [1, 1]} : vector<8x384xf32> to vector<8x128xf32>
    %303 = vector.extract_strided_slice %301 {offsets = [0, 0], sizes = [8, 128], strides = [1, 1]} : vector<8x384xf32> to vector<8x128xf32>
    %304 = arith.addf %302, %303 : vector<8x128xf32>
    %305 = arith.negf %304 : vector<8x128xf32>
    %306 = math.exp %305 : vector<8x128xf32>
    %cst_80 = arith.constant 1.000000e+00 : f32
    %307 = vector.broadcast %cst_80 : f32 to vector<8x128xf32>
    %308 = arith.addf %307, %306 : vector<8x128xf32>
    %309 = arith.divf %307, %308 : vector<8x128xf32>
    %310 = vector.extract_strided_slice %296 {offsets = [0, 128], sizes = [8, 128], strides = [1, 1]} : vector<8x384xf32> to vector<8x128xf32>
    %311 = vector.extract_strided_slice %301 {offsets = [0, 128], sizes = [8, 128], strides = [1, 1]} : vector<8x384xf32> to vector<8x128xf32>
    %312 = arith.addf %310, %311 : vector<8x128xf32>
    %313 = arith.negf %312 : vector<8x128xf32>
    %314 = math.exp %313 : vector<8x128xf32>
    %cst_81 = arith.constant 1.000000e+00 : f32
    %315 = vector.broadcast %cst_81 : f32 to vector<8x128xf32>
    %316 = arith.addf %315, %314 : vector<8x128xf32>
    %317 = arith.divf %315, %316 : vector<8x128xf32>
    %318 = vector.extract_strided_slice %296 {offsets = [0, 256], sizes = [8, 128], strides = [1, 1]} : vector<8x384xf32> to vector<8x128xf32>
    %319 = vector.extract_strided_slice %301 {offsets = [0, 256], sizes = [8, 128], strides = [1, 1]} : vector<8x384xf32> to vector<8x128xf32>
    %320 = arith.mulf %309, %319 : vector<8x128xf32>
    %321 = arith.addf %318, %320 : vector<8x128xf32>
    %322 = math.tanh %321 : vector<8x128xf32>
    %cst_82 = arith.constant 1.000000e+00 : f32
    %323 = vector.broadcast %cst_82 : f32 to vector<8x128xf32>
    %324 = arith.subf %323, %317 : vector<8x128xf32>
    %325 = arith.mulf %324, %322 : vector<8x128xf32>
    %326 = arith.mulf %317, %256 : vector<8x128xf32>
    %327 = arith.addf %325, %326 : vector<8x128xf32>
    %328 = vector.shape_cast %28 : vector<8x1xi1> to vector<8x1xi1>
    %329 = vector.broadcast %328 : vector<8x1xi1> to vector<8x128xi1>
    %330 = arith.select %329, %327, %256 : vector<8x128xi1>, vector<8x128xf32>
    %331 = arith.truncf %330 : vector<8x128xf32> to vector<8x128xbf16>
    %c0_83 = arith.constant 0 : index
    %c0_84 = arith.constant 0 : index
    %332 = vector.load %arg6[%c0_83, %c0_84] : memref<128x128xbf16, #tpu.memory_space<vmem>>, vector<128x128xbf16>
    %cst_85 = arith.constant dense<0.000000e+00> : vector<8x128xf32>
    %333 = tpu.matmul %331, %332, %cst_85 {dimension_numbers = #tpu.dot_dimension_numbers<[1], [0], [0], [1], [0, 0, 1, 1], [], []>} : vector<8x128xbf16>, vector<128x128xbf16>, vector<8x128xf32> -> vector<8x128xf32>
    %334 = arith.addf %13, %333 : vector<8x128xf32>
    %335 = vector.broadcast %6 : vector<1x128xf32> to vector<8x128xf32>
    %336 = arith.addf %334, %335 : vector<8x128xf32>
    %c0_86 = arith.constant 0 : index
    %c0_87 = arith.constant 0 : index
    %337 = vector.load %arg3[%c0_86, %c0_87] : memref<8x128xf32, #tpu.memory_space<vmem>>, vector<8x128xf32>
    %338 = tpu.concatenate %336, %337 in 1 : vector<8x128xf32>, vector<8x128xf32> -> vector<8x256xf32>
    %339 = arith.truncf %338 : vector<8x256xf32> to vector<8x256xbf16>
    %c0_88 = arith.constant 0 : index
    %c0_89 = arith.constant 0 : index
    %340 = vector.load %arg7[%c0_88, %c0_89] : memref<256x128xbf16, #tpu.memory_space<vmem>>, vector<256x128xbf16>
    %cst_90 = arith.constant dense<0.000000e+00> : vector<8x128xf32>
    %341 = tpu.matmul %339, %340, %cst_90 {dimension_numbers = #tpu.dot_dimension_numbers<[1], [0], [0], [1], [0, 0, 1, 1], [], []>} : vector<8x256xbf16>, vector<256x128xbf16>, vector<8x128xf32> -> vector<8x128xf32>
    %342 = vector.broadcast %7 : vector<1x128xf32> to vector<8x128xf32>
    %343 = arith.addf %341, %342 : vector<8x128xf32>
    %c0_91 = arith.constant 0 : index
    %c0_92 = arith.constant 0 : index
    %344 = vector.load %arg9[%c0_91, %c0_92] : memref<8x128xf32, #tpu.memory_space<vmem>>, vector<8x128xf32>
    tpu.vector_store %arg9[%c0_91, %c0_92], %343 {strides = array<i32>} : memref<8x128xf32, #tpu.memory_space<vmem>>, vector<8x128xf32>,
    return
  }
}

</mosaic_0001>

<llo_original>
// kernel: tpu_custom_call.1
$region0: #{tpu_custom_call.1}
  #allocation0 [shape = 'u32[]', space=smem, size = 0x4, offset = 0x4, fixed_abs, tag = 'smem constant byte address 0x4 - core index']
  #allocation1 [shape = 'u32[144,128]{1,0:T(1,128)}', space=vmem, size = 0x12000, scoped, tag = 'internal scratch']
  %s0 = inlined_call_operand.vmem [shape: bf16[8,128], index: 0, kind: input, shape index: {}]
  %s1 = inlined_call_operand.hbm [shape: bf16[32,128], index: 1, kind: input, shape index: {}]
  %s2 = inlined_call_operand.vmem [shape: f32[8,1], index: 2, kind: input, shape index: {}]
  %s3 = inlined_call_operand.vmem [shape: f32[8,128], index: 3, kind: input, shape index: {}]
  %s4 = inlined_call_operand.hbm [shape: bf16[128,256], index: 4, kind: input, shape index: {}]
  %s5 = inlined_call_operand.hbm [shape: bf16[128,1536], index: 5, kind: input, shape index: {}]
  %s6 = inlined_call_operand.hbm [shape: bf16[128,128], index: 6, kind: input, shape index: {}]
  %s7 = inlined_call_operand.hbm [shape: bf16[256,128], index: 7, kind: input, shape index: {}]
  %s8 = inlined_call_operand.vmem [shape: f32[8,384], index: 8, kind: input, shape index: {}]
  %s9 = inlined_call_operand.hbm [shape: f32[8,128], index: 9, kind: output, shape index: {}]
  %s10 = sld [smem:[#allocation0]]
  $region66: #{tpu_custom_call.1} parent=0
    _
  %s12 = ssub.s32 1, %s10
  %s13 = scalar_select 0, %s12, %s10
  $region1: #{tpu_custom_call.1} parent=0
    #allocation2 [shape = 'u8[8192]{0}', space=vmem, size = 0x2000, scoped, tag = 'input window, operand 1, single buffered']
    #allocation3 [shape = 's32[1]{0}', space=sflag, size = 0x4, scoped, tag = 'scoped memory for tpu_custom_call.1']
    #allocation4 [shape = 's32[1]{0}', space=sflag, size = 0x4, scoped, tag = 'scoped memory for tpu_custom_call.1']
    #allocation5 [shape = 'u8[65536]{0}', space=vmem, size = 0x10000, scoped, tag = 'input window, operand 4, single buffered']
    #allocation6 [shape = 's32[1]{0}', space=sflag, size = 0x4, scoped, tag = 'scoped memory for tpu_custom_call.1']
    #allocation7 [shape = 'u8[393216]{0}', space=vmem, size = 0x60000, scoped, tag = 'input window, operand 5, single buffered']
    #allocation8 [shape = 'u8[32768]{0}', space=vmem, size = 0x8000, scoped, tag = 'input window, operand 6, single buffered']
    #allocation9 [shape = 's32[1]{0}', space=sflag, size = 0x4, scoped, tag = 'scoped memory for tpu_custom_call.1']
    #allocation10 [shape = 'u8[65536]{0}', space=vmem, size = 0x10000, scoped, tag = 'input window, operand 7, single buffered']
    #allocation11 [shape = 'u8[4096]{0}', space=vmem, size = 0x1000, scoped, tag = 'output window, operand 0, single buffered']
    %14 = vsyncpa [#allocation3], 0
    %15 = vsyncpa [#allocation6], 0
    %16 = vsyncpa [#allocation9], 0
    %17 = vsyncpa [#allocation4], 0
    // Predicated region
    $region2: #{tpu_custom_call.1} parent=1 // pred_check
      _
    $region3: #{tpu_custom_call.1} parent=1 // pred_check_branch
      %19 = sbr.rel (0) target = $region5
    $region4: #{tpu_custom_call.1} parent=1 // pred_region
      _
    $region5: #{tpu_custom_call.1} parent=1 // pred_fallthru
      _
    // Predicated region
    $region6: #{tpu_custom_call.1} parent=1 // pred_check
      _
    $region7: #{tpu_custom_call.1} parent=1 // pred_check_branch
      %21 = sbr.rel (0) target = $region9
    $region8: #{tpu_custom_call.1} parent=1 // pred_region
      %s23 = ssub.s32 256, 256
      %24 = vsyncadd [#allocation3], %s23
      %s25 = sshll.u32 [#allocation2], 4
      %s26 = int_to_ptr.vmem [resolvable:$true] %s25
      %31 = dma.hbm_to_vmem [thread:$0]  %s1, 256, %s26, [#allocation3], 64, 64, 4
    $region9: #{tpu_custom_call.1} parent=1 // pred_fallthru
      _
    // Predicated region
    $region10: #{tpu_custom_call.1} parent=1 // pred_check
      _
    $region11: #{tpu_custom_call.1} parent=1 // pred_check_branch
      %33 = sbr.rel (0) target = $region13
    $region12: #{tpu_custom_call.1} parent=1 // pred_region
      _
    $region13: #{tpu_custom_call.1} parent=1 // pred_fallthru
      _
    // Predicated region
    $region14: #{tpu_custom_call.1} parent=1 // pred_check
      _
    $region15: #{tpu_custom_call.1} parent=1 // pred_check_branch
      %35 = sbr.rel (0) target = $region17
    $region16: #{tpu_custom_call.1} parent=1 // pred_region
      _
    $region17: #{tpu_custom_call.1} parent=1 // pred_fallthru
      _
    // Predicated region
    $region18: #{tpu_custom_call.1} parent=1 // pred_check
      _
    $region19: #{tpu_custom_call.1} parent=1 // pred_check_branch
      %37 = sbr.rel (0) target = $region21
    $region20: #{tpu_custom_call.1} parent=1 // pred_region
      %s39 = ssub.s32 2048, 2048
      %40 = vsyncadd [#allocation6], %s39
      %s41 = sshll.u32 [#allocation5], 4
      %s42 = int_to_ptr.vmem [resolvable:$true] %s41
      %47 = dma.hbm_to_vmem [thread:$0]  %s4, 2048, %s42, [#allocation6], 128, 128, 8
    $region21: #{tpu_custom_call.1} parent=1 // pred_fallthru
      _
    // Predicated region
    $region22: #{tpu_custom_call.1} parent=1 // pred_check
      _
    $region23: #{tpu_custom_call.1} parent=1 // pred_check_branch
      %49 = sbr.rel (0) target = $region25
    $region24: #{tpu_custom_call.1} parent=1 // pred_region
      %s51 = ssub.s32 12288, 12288
      %52 = vsyncadd [#allocation6], %s51
      %s53 = sshll.u32 [#allocation7], 4
      %s54 = int_to_ptr.vmem [resolvable:$true] %s53
      %59 = dma.hbm_to_vmem [thread:$0]  %s5, 12288, %s54, [#allocation6], 768, 768, 48
    $region25: #{tpu_custom_call.1} parent=1 // pred_fallthru
      _
    // Predicated region
    $region26: #{tpu_custom_call.1} parent=1 // pred_check
      _
    $region27: #{tpu_custom_call.1} parent=1 // pred_check_branch
      %61 = sbr.rel (0) target = $region29
    $region28: #{tpu_custom_call.1} parent=1 // pred_region
      %s63 = ssub.s32 1024, 1024
      %64 = vsyncadd [#allocation9], %s63
      %s65 = sshll.u32 [#allocation8], 4
      %s66 = int_to_ptr.vmem [resolvable:$true] %s65
      %71 = dma.hbm_to_vmem [thread:$0]  %s6, 1024, %s66, [#allocation9], 64, 64, 4
    $region29: #{tpu_custom_call.1} parent=1 // pred_fallthru
      _
    // Predicated region
    $region30: #{tpu_custom_call.1} parent=1 // pred_check
      _
    $region31: #{tpu_custom_call.1} parent=1 // pred_check_branch
      %73 = sbr.rel (0) target = $region33
    $region32: #{tpu_custom_call.1} parent=1 // pred_region
      %s75 = ssub.s32 2048, 2048
      %76 = vsyncadd [#allocation9], %s75
      %s77 = sshll.u32 [#allocation10], 4
      %s78 = int_to_ptr.vmem [resolvable:$true] %s77
      %83 = dma.hbm_to_vmem [thread:$0]  %s7, 2048, %s78, [#allocation9], 64, 64, 4
    $region33: #{tpu_custom_call.1} parent=1 // pred_fallthru
      _
    // Predicated region
    $region34: #{tpu_custom_call.1} parent=1 // pred_check
      _
    $region35: #{tpu_custom_call.1} parent=1 // pred_check_branch
      %85 = sbr.rel (0) target = $region37
    $region36: #{tpu_custom_call.1} parent=1 // pred_region
      _
    $region37: #{tpu_custom_call.1} parent=1 // pred_fallthru
      _
    // Predicated region
    $region38: #{tpu_custom_call.1} parent=1 // pred_check
      _
    $region39: #{tpu_custom_call.1} parent=1 // pred_check_branch
      %87 = sbr.rel (0) target = $region41
    $region40: #{tpu_custom_call.1} parent=1 // pred_region
      %88 = dma.done [#allocation3], 256
    $region41: #{tpu_custom_call.1} parent=1 // pred_fallthru
      _
    // Predicated region
    $region42: #{tpu_custom_call.1} parent=1 // pred_check
      _
    $region43: #{tpu_custom_call.1} parent=1 // pred_check_branch
      %90 = sbr.rel (0) target = $region45
    $region44: #{tpu_custom_call.1} parent=1 // pred_region
      %91 = dma.done [#allocation6], 2048
    $region45: #{tpu_custom_call.1} parent=1 // pred_fallthru
      _
    // Predicated region
    $region46: #{tpu_custom_call.1} parent=1 // pred_check
      _
    $region47: #{tpu_custom_call.1} parent=1 // pred_check_branch
      %93 = sbr.rel (0) target = $region49
    $region48: #{tpu_custom_call.1} parent=1 // pred_region
      %94 = dma.done [#allocation6], 12288
    $region49: #{tpu_custom_call.1} parent=1 // pred_fallthru
      _
    // Predicated region
    $region50: #{tpu_custom_call.1} parent=1 // pred_check
      _
    $region51: #{tpu_custom_call.1} parent=1 // pred_check_branch
      %96 = sbr.rel (0) target = $region53
    $region52: #{tpu_custom_call.1} parent=1 // pred_region
      %97 = dma.done [#allocation9], 1024
    $region53: #{tpu_custom_call.1} parent=1 // pred_fallthru
      _
    // Predicated region
    $region54: #{tpu_custom_call.1} parent=1 // pred_check
      _
    $region55: #{tpu_custom_call.1} parent=1 // pred_check_branch
      %99 = sbr.rel (0) target = $region57
    $region56: #{tpu_custom_call.1} parent=1 // pred_region
      %100 = dma.done [#allocation9], 2048
    $region57: #{tpu_custom_call.1} parent=1 // pred_fallthru
      _
    %v102 = vld [vmem:[%s8] ss:$0 sm:$0xff]
    %v103 = vld [vmem:[%s8 + $0x1] ss:$0 sm:$0xff]
    %s104 = scalar_lea.vmem %s8, 2
    %v105 = vld [vmem:[%s104] ss:$8 sm:$0x7]
    %s106 = scalar_lea.vmem %s8, 3
    %v107 = vld [vmem:[%s106] ss:$8 sm:$0x7]
    %s108 = scalar_lea.vmem %s8, 4
    %v109 = vld [vmem:[%s108] ss:$8 sm:$0x7]
    %s110 = scalar_lea.vmem %s8, 5
    %v111 = vld [vmem:[%s110] ss:$8 sm:$0x7]
    %v112 = vld [vmem:[%s8 + $0x6] ss:$0 sm:$0xff]
    %v113 = vld [vmem:[%s8 + $0x7] ss:$0 sm:$0xff]
    %v114 = vld [vmem:[%s0] sm:$0xf]
    %v115 = vld [vmem:[#allocation5] sm:$0xf]
    %v116 = vld [vmem:[#allocation5 + $0x8] sm:$0xf]
    %v117 = vld [vmem:[#allocation5 + $0x10] sm:$0xf]
    %v118 = vld [vmem:[#allocation5 + $0x18] sm:$0xf]
    %v119 = vld [vmem:[#allocation5 + $0x20] sm:$0xf]
    %v120 = vld [vmem:[#allocation5 + $0x28] sm:$0xf]
    %v121 = vld [vmem:[#allocation5 + $0x30] sm:$0xf]
    %v122 = vld [vmem:[#allocation5 + $0x38] sm:$0xf]
    %v123 = vld [vmem:[#allocation5 + $0x40] sm:$0xf]
    %v124 = vld [vmem:[#allocation5 + $0x48] sm:$0xf]
    %v125 = vld [vmem:[#allocation5 + $0x50] sm:$0xf]
    %v126 = vld [vmem:[#allocation5 + $0x58] sm:$0xf]
    %v127 = vld [vmem:[#allocation5 + $0x60] sm:$0xf]
    %v128 = vld [vmem:[#allocation5 + $0x68] sm:$0xf]
    %v129 = vld [vmem:[#allocation5 + $0x70] sm:$0xf]
    %v130 = vld [vmem:[#allocation5 + $0x78] sm:$0xf]
    %v147 = vunpack.c.l.b16 %v115
    %v148 = vunpack.c.l.b16 %v116
    %v149 = vunpack.c.l.b16 %v117
    %v150 = vunpack.c.l.b16 %v118
    %v151 = vunpack.c.l.b16 %v119
    %v152 = vunpack.c.l.b16 %v120
    %v153 = vunpack.c.l.b16 %v121
    %v154 = vunpack.c.l.b16 %v122
    %v155 = vunpack.c.l.b16 %v123
    %v156 = vunpack.c.l.b16 %v124
    %v157 = vunpack.c.l.b16 %v125
    %v158 = vunpack.c.l.b16 %v126
    %v159 = vunpack.c.l.b16 %v127
    %v160 = vunpack.c.l.b16 %v128
    %v161 = vunpack.c.l.b16 %v129
    %v162 = vunpack.c.l.b16 %v130
    %v163 = vpack.c.b16 %v148, %v147
    %v164 = vpack.c.b16 %v150, %v149
    %v165 = vpack.c.b16 %v152, %v151
    %v166 = vpack.c.b16 %v154, %v153
    %v167 = vpack.c.b16 %v156, %v155
    %v168 = vpack.c.b16 %v158, %v157
    %v169 = vpack.c.b16 %v160, %v159
    %v170 = vpack.c.b16 %v162, %v161
    %179 = vmatprep.subr.bf16.mxu0 0
    %180 = vmatpush1.bf16.msra.mxu0 %v163
    %181 = vmatprep.subr.bf16.mxu0 0
    %182 = vmatpush1.bf16.msra.mxu0 %v164
    %183 = vmatprep.subr.bf16.mxu0 0
    %184 = vmatpush1.bf16.msra.mxu0 %v165
    %185 = vmatprep.subr.bf16.mxu0 0
    %186 = vmatpush1.bf16.msra.mxu0 %v166
    %187 = vmatprep.subr.bf16.mxu0 0
    %188 = vmatpush1.bf16.msra.mxu0 %v167
    %189 = vmatprep.subr.bf16.mxu0 0
    %190 = vmatpush1.bf16.msra.mxu0 %v168
    %191 = vmatprep.subr.bf16.mxu0 0
    %192 = vmatpush1.bf16.msra.mxu0 %v169
    %193 = vmatprep.subr.bf16.mxu0 0
    %194 = vmatpush1.bf16.msra.mxu0 %v170
    %195 = vmatprep.subr.bf16.mxu0 0
    %196 = vmatpush1.bf16.msra.mxu0 0
    %197 = vmatprep.subr.bf16.mxu0 0
    %198 = vmatpush1.bf16.msra.mxu0 0
    %199 = vmatprep.subr.bf16.mxu0 0
    %200 = vmatpush1.bf16.msra.mxu0 0
    %201 = vmatprep.subr.bf16.mxu0 0
    %202 = vmatpush1.bf16.msra.mxu0 0
    %203 = vmatprep.subr.bf16.mxu0 0
    %204 = vmatpush1.bf16.msra.mxu0 0
    %205 = vmatprep.subr.bf16.mxu0 0
    %206 = vmatpush1.bf16.msra.mxu0 0
    %207 = vmatprep.subr.bf16.mxu0 0
    %208 = vmatpush1.bf16.msra.mxu0 0
    %209 = vmatprep.subr.bf16.mxu0 0
    %210 = vmatpush1.bf16.msra.mxu0 0
    %211 = vmatprep.mubr.bf16.mxu0 0
    %212 = vmatmul.mubr.bf16.gmra.mrb[0].mxu0 %v114
    %v213 = vpop.f32.mrb[0].mxu0
    %v214 = vadd.f32 %v102, %v213
    %v215 = vpop.f32.mrb[0].mxu0
    %v216 = vpop.f32.mrb[0].mxu0
    %v217 = vpop.f32.mrb[0].mxu0
    %218 = vdwg.mxu0
    %v219 = vtanh.pop %v214
    %v220 = vld [vmem:[#allocation2] sm:$0xf]
    %v221 = vld [vmem:[#allocation2 + $0x4] sm:$0xf]
    %v222 = vld [vmem:[#allocation2 + $0x8] sm:$0xf]
    %v223 = vld [vmem:[#allocation2 + $0xc] sm:$0xf]
    %v224 = vld [vmem:[#allocation5 + $0x4] sm:$0xf]
    %v225 = vld [vmem:[#allocation5 + $0xc] sm:$0xf]
    %v226 = vld [vmem:[#allocation5 + $0x14] sm:$0xf]
    %v227 = vld [vmem:[#allocation5 + $0x1c] sm:$0xf]
    %v228 = vld [vmem:[#allocation5 + $0x24] sm:$0xf]
    %v229 = vld [vmem:[#allocation5 + $0x2c] sm:$0xf]
    %v230 = vld [vmem:[#allocation5 + $0x34] sm:$0xf]
    %v231 = vld [vmem:[#allocation5 + $0x3c] sm:$0xf]
    %v232 = vld [vmem:[#allocation5 + $0x44] sm:$0xf]
    %v233 = vld [vmem:[#allocation5 + $0x4c] sm:$0xf]
    %v234 = vld [vmem:[#allocation5 + $0x54] sm:$0xf]
    %v235 = vld [vmem:[#allocation5 + $0x5c] sm:$0xf]
    %v236 = vld [vmem:[#allocation5 + $0x64] sm:$0xf]
    %v237 = vld [vmem:[#allocation5 + $0x6c] sm:$0xf]
    %v238 = vld [vmem:[#allocation5 + $0x74] sm:$0xf]
    %v239 = vld [vmem:[#allocation5 + $0x7c] sm:$0xf]
    %v244 = vunpack.c.l.b16 %v220
    %v245 = vunpack.c.l.b16 %v221
    %v246 = vunpack.c.l.b16 %v222
    %v247 = vunpack.c.l.b16 %v223
    %v248 = vpack.c.b16 %v245, %v244
    %v249 = vpack.c.b16 %v247, %v246
    %v268 = vunpack.c.l.b16 %v224
    %v269 = vunpack.c.l.b16 %v225
    %v270 = vunpack.c.l.b16 %v226
    %v271 = vunpack.c.l.b16 %v227
    %v272 = vunpack.c.l.b16 %v228
    %v273 = vunpack.c.l.b16 %v229
    %v274 = vunpack.c.l.b16 %v230
    %v275 = vunpack.c.l.b16 %v231
    %v276 = vunpack.c.l.b16 %v232
    %v277 = vunpack.c.l.b16 %v233
    %v278 = vunpack.c.l.b16 %v234
    %v279 = vunpack.c.l.b16 %v235
    %v280 = vunpack.c.l.b16 %v236
    %v281 = vunpack.c.l.b16 %v237
    %v282 = vunpack.c.l.b16 %v238
    %v283 = vunpack.c.l.b16 %v239
    %v284 = vpack.c.b16 %v269, %v268
    %v285 = vpack.c.b16 %v271, %v270
    %v286 = vpack.c.b16 %v273, %v272
    %v287 = vpack.c.b16 %v275, %v274
    %v288 = vpack.c.b16 %v277, %v276
    %v289 = vpack.c.b16 %v279, %v278
    %v290 = vpack.c.b16 %v281, %v280
    %v291 = vpack.c.b16 %v283, %v282
    %300 = vmatprep.subr.bf16.mxu0 0
    %301 = vmatpush1.bf16.msra.mxu0 %v284
    %302 = vmatprep.subr.bf16.mxu0 0
    %303 = vmatpush1.bf16.msra.mxu0 %v285
    %304 = vmatprep.subr.bf16.mxu0 0
    %305 = vmatpush1.bf16.msra.mxu0 %v286
    %306 = vmatprep.subr.bf16.mxu0 0
    %307 = vmatpush1.bf16.msra.mxu0 %v287
    %308 = vmatprep.subr.bf16.mxu0 0
    %309 = vmatpush1.bf16.msra.mxu0 %v288
    %310 = vmatprep.subr.bf16.mxu0 0
    %311 = vmatpush1.bf16.msra.mxu0 %v289
    %312 = vmatprep.subr.bf16.mxu0 0
    %313 = vmatpush1.bf16.msra.mxu0 %v290
    %314 = vmatprep.subr.bf16.mxu0 0
    %315 = vmatpush1.bf16.msra.mxu0 %v291
    %316 = vmatprep.subr.bf16.mxu0 0
    %317 = vmatpush1.bf16.msra.mxu0 0
    %318 = vmatprep.subr.bf16.mxu0 0
    %319 = vmatpush1.bf16.msra.mxu0 0
    %320 = vmatprep.subr.bf16.mxu0 0
    %321 = vmatpush1.bf16.msra.mxu0 0
    %322 = vmatprep.subr.bf16.mxu0 0
    %323 = vmatpush1.bf16.msra.mxu0 0
    %324 = vmatprep.subr.bf16.mxu0 0
    %325 = vmatpush1.bf16.msra.mxu0 0
    %326 = vmatprep.subr.bf16.mxu0 0
    %327 = vmatpush1.bf16.msra.mxu0 0
    %328 = vmatprep.subr.bf16.mxu0 0
    %329 = vmatpush1.bf16.msra.mxu0 0
    %330 = vmatprep.subr.bf16.mxu0 0
    %331 = vmatpush1.bf16.msra.mxu0 0
    %332 = vmatprep.mubr.bf16.mxu0 0
    %333 = vmatmul.mubr.bf16.gmra.mrb[0].mxu0 %v248
    %v334 = vpop.f32.mrb[0].mxu0
    %v335 = vadd.f32 %v103, %v334
    %v336 = vpop.f32.mrb[0].mxu0
    %v337 = vpop.f32.mrb[0].mxu0
    %v338 = vadd.f32 %v103, %v337
    %v339 = vpop.f32.mrb[0].mxu0
    %340 = vmatprep.mubr.bf16.mxu0 0
    %341 = vmatmul.mubr.bf16.gmra.mrb[0].mxu0 %v249
    %v342 = vpop.f32.mrb[0].mxu0
    %v343 = vadd.f32 %v103, %v342
    %v344 = vpop.f32.mrb[0].mxu0
    %v345 = vpop.f32.mrb[0].mxu0
    %v346 = vadd.f32 %v103, %v345
    %v347 = vpop.f32.mrb[0].mxu0
    %348 = vdwg.mxu0
    %v349 = vtanh.pop %v335
    %v350 = vtanh.pop %v338
    %v351 = vtanh.pop %v343
    %v352 = vtanh.pop %v346
    %v353 = vld [vmem:[%s2] sm:$0xff]
    %vm354 = vcmp.gt.f32.partialorder %v353, 0.0
    %vm355 = vcmp.gt.f32.partialorder %v353, 1.0
    %vm356 = vcmp.gt.f32.partialorder %v353, 2.0
    %vm357 = vcmp.gt.f32.partialorder %v353, 3.0
    %v358 = vpack.c.bf16 %v350, %v349
    %v359 = vpack.c.bf16 %v352, %v351
    %v360 = vld [vmem:[#allocation7] sm:$0xff]
    %v361 = vld [vmem:[#allocation7 + $0x8] sm:$0xf]
    %v362 = vld [vmem:[#allocation7 + $0x30] sm:$0xff]
    %v363 = vld [vmem:[#allocation7 + $0x38] sm:$0xf]
    %v364 = vld [vmem:[#allocation7 + $0x60] sm:$0xff]
    %v365 = vld [vmem:[#allocation7 + $0x68] sm:$0xf]
    %v366 = vld [vmem:[#allocation7 + $0x90] sm:$0xff]
    %v367 = vld [vmem:[#allocation7 + $0x98] sm:$0xf]
    %v368 = vld [vmem:[#allocation7 + $0xc0] sm:$0xff]
    %v369 = vld [vmem:[#allocation7 + $0xc8] sm:$0xf]
    %v370 = vld [vmem:[#allocation7 + $0xf0] sm:$0xff]
    %v371 = vld [vmem:[#allocation7 + $0xf8] sm:$0xf]
    %v372 = vld [vmem:[#allocation7 + $0x120] sm:$0xff]
    %v373 = vld [vmem:[#allocation7 + $0x128] sm:$0xf]
    %v374 = vld [vmem:[#allocation7 + $0x150] sm:$0xff]
    %v375 = vld [vmem:[#allocation7 + $0x158] sm:$0xf]
    %v376 = vld [vmem:[#allocation7 + $0x180] sm:$0xff]
    %v377 = vld [vmem:[#allocation7 + $0x188] sm:$0xf]
    %v378 = vld [vmem:[#allocation7 + $0x1b0] sm:$0xff]
    %v379 = vld [vmem:[#allocation7 + $0x1b8] sm:$0xf]
    %v380 = vld [vmem:[#allocation7 + $0x1e0] sm:$0xff]
    %v381 = vld [vmem:[#allocation7 + $0x1e8] sm:$0xf]
    %v382 = vld [vmem:[#allocation7 + $0x210] sm:$0xff]
    %v383 = vld [vmem:[#allocation7 + $0x218] sm:$0xf]
    %v384 = vld [vmem:[#allocation7 + $0x240] sm:$0xff]
    %v385 = vld [vmem:[#allocation7 + $0x248] sm:$0xf]
    %v386 = vld [vmem:[#allocation7 + $0x270] sm:$0xff]
    %v387 = vld [vmem:[#allocation7 + $0x278] sm:$0xf]
    %v388 = vld [vmem:[#allocation7 + $0x2a0] sm:$0xff]
    %v389 = vld [vmem:[#allocation7 + $0x2a8] sm:$0xf]
    %v390 = vld [vmem:[#allocation7 + $0x2d0] sm:$0xff]
    %v391 = vld [vmem:[#allocation7 + $0x2d8] sm:$0xf]
    %v393 = vlaneseq
    %v394 = vshrl.u32 %v393, 7
    %v395 = vsub.s32 0, %v394
    %v396 = vrot.slane %v105, %v395
    %v397 = vlaneseq
    %v398 = vshrl.u32 %v397, 7
    %v399 = vsub.s32 1, %v398
    %v400 = vrot.slane %v105, %v399
    %v401 = vlaneseq
    %v402 = vshrl.u32 %v401, 7
    %v403 = vsub.s32 2, %v402
    %v404 = vrot.slane %v105, %v403
    %v440 = vunpack.c.l.b16 %v360
    %v441 = vunpack.c.h.b16 %v360
    %v442 = vunpack.c.l.b16 %v361
    %v443 = vunpack.c.l.b16 %v362
    %v444 = vunpack.c.h.b16 %v362
    %v445 = vunpack.c.l.b16 %v363
    %v446 = vunpack.c.l.b16 %v364
    %v447 = vunpack.c.h.b16 %v364
    %v448 = vunpack.c.l.b16 %v365
    %v449 = vunpack.c.l.b16 %v366
    %v450 = vunpack.c.h.b16 %v366
    %v451 = vunpack.c.l.b16 %v367
    %v452 = vunpack.c.l.b16 %v368
    %v453 = vunpack.c.h.b16 %v368
    %v454 = vunpack.c.l.b16 %v369
    %v455 = vunpack.c.l.b16 %v370
    %v456 = vunpack.c.h.b16 %v370
    %v457 = vunpack.c.l.b16 %v371
    %v458 = vunpack.c.l.b16 %v372
    %v459 = vunpack.c.h.b16 %v372
    %v460 = vunpack.c.l.b16 %v373
    %v461 = vunpack.c.l.b16 %v374
    %v462 = vunpack.c.h.b16 %v374
    %v463 = vunpack.c.l.b16 %v375
    %v464 = vunpack.c.l.b16 %v376
    %v465 = vunpack.c.h.b16 %v376
    %v466 = vunpack.c.l.b16 %v377
    %v467 = vunpack.c.l.b16 %v378
    %v468 = vunpack.c.h.b16 %v378
    %v469 = vunpack.c.l.b16 %v379
    %v470 = vunpack.c.l.b16 %v380
    %v471 = vunpack.c.h.b16 %v380
    %v472 = vunpack.c.l.b16 %v381
    %v473 = vunpack.c.l.b16 %v382
    %v474 = vunpack.c.h.b16 %v382
    %v475 = vunpack.c.l.b16 %v383
    %v476 = vunpack.c.l.b16 %v384
    %v477 = vunpack.c.h.b16 %v384
    %v478 = vunpack.c.l.b16 %v385
    %v479 = vunpack.c.l.b16 %v386
    %v480 = vunpack.c.h.b16 %v386
    %v481 = vunpack.c.l.b16 %v387
    %v482 = vunpack.c.l.b16 %v388
    %v483 = vunpack.c.h.b16 %v388
    %v484 = vunpack.c.l.b16 %v389
    %v485 = vunpack.c.l.b16 %v390
    %v486 = vunpack.c.h.b16 %v390
    %v487 = vunpack.c.l.b16 %v391
    %v488 = vpack.c.b16 %v443, %v440
    %v489 = vpack.c.b16 %v444, %v441
    %v490 = vpack.c.b16 %v445, %v442
    %v491 = vpack.c.b16 %v449, %v446
    %v492 = vpack.c.b16 %v450, %v447
    %v493 = vpack.c.b16 %v451, %v448
    %v494 = vpack.c.b16 %v455, %v452
    %v495 = vpack.c.b16 %v456, %v453
    %v496 = vpack.c.b16 %v457, %v454
    %v497 = vpack.c.b16 %v461, %v458
    %v498 = vpack.c.b16 %v462, %v459
    %v499 = vpack.c.b16 %v463, %v460
    %v500 = vpack.c.b16 %v467, %v464
    %v501 = vpack.c.b16 %v468, %v465
    %v502 = vpack.c.b16 %v469, %v466
    %v503 = vpack.c.b16 %v473, %v470
    %v504 = vpack.c.b16 %v474, %v471
    %v505 = vpack.c.b16 %v475, %v472
    %v506 = vpack.c.b16 %v479, %v476
    %v507 = vpack.c.b16 %v480, %v477
    %v508 = vpack.c.b16 %v481, %v478
    %v509 = vpack.c.b16 %v485, %v482
    %v510 = vpack.c.b16 %v486, %v483
    %v511 = vpack.c.b16 %v487, %v484
    %536 = vmatprep.subr.bf16.mxu0 %v489
    %537 = vmatpush1.bf16.msra.mxu0 %v488
    %538 = vmatprep.subr.bf16.mxu0 %v492
    %539 = vmatpush1.bf16.msra.mxu0 %v491
    %540 = vmatprep.subr.bf16.mxu0 %v495
    %541 = vmatpush1.bf16.msra.mxu0 %v494
    %542 = vmatprep.subr.bf16.mxu0 %v498
    %543 = vmatpush1.bf16.msra.mxu0 %v497
    %544 = vmatprep.subr.bf16.mxu0 %v501
    %545 = vmatpush1.bf16.msra.mxu0 %v500
    %546 = vmatprep.subr.bf16.mxu0 %v504
    %547 = vmatpush1.bf16.msra.mxu0 %v503
    %548 = vmatprep.subr.bf16.mxu0 %v507
    %549 = vmatpush1.bf16.msra.mxu0 %v506
    %550 = vmatprep.subr.bf16.mxu0 %v510
    %551 = vmatpush1.bf16.msra.mxu0 %v509
    %552 = vmatprep.subr.bf16.mxu0 0
    %553 = vmatpush1.bf16.msra.mxu0 0
    %554 = vmatprep.subr.bf16.mxu0 0
    %555 = vmatpush1.bf16.msra.mxu0 0
    %556 = vmatprep.subr.bf16.mxu0 0
    %557 = vmatpush1.bf16.msra.mxu0 0
    %558 = vmatprep.subr.bf16.mxu0 0
    %559 = vmatpush1.bf16.msra.mxu0 0
    %560 = vmatprep.subr.bf16.mxu0 0
    %561 = vmatpush1.bf16.msra.mxu0 0
    %562 = vmatprep.subr.bf16.mxu0 0
    %563 = vmatpush1.bf16.msra.mxu0 0
    %564 = vmatprep.subr.bf16.mxu0 0
    %565 = vmatpush1.bf16.msra.mxu0 0
    %566 = vmatprep.subr.bf16.mxu0 0
    %567 = vmatpush1.bf16.msra.mxu0 0
    %568 = vmatprep.mubr.bf16.mxu0 0
    %569 = vmatmul.mubr.bf16.gmra.mrb[0].mxu0 %v358
    %v570 = vpop.f32.mrb[0].mxu0
    %v571 = vadd.f32 %v396, %v570
    %v572 = vpop.f32.mrb[0].mxu0
    %v573 = vadd.f32 %v400, %v572
    %v574 = vpop.f32.mrb[0].mxu0
    %v575 = vadd.f32 %v396, %v574
    %v576 = vpop.f32.mrb[0].mxu0
    %v577 = vadd.f32 %v400, %v576
    %578 = vmatprep.mubr.bf16.mxu0 0
    %579 = vmatmul.mubr.bf16.gmra.mrb[0].mxu0 %v359
    %v580 = vpop.f32.mrb[0].mxu0
    %v581 = vadd.f32 %v396, %v580
    %v582 = vpop.f32.mrb[0].mxu0
    %v583 = vadd.f32 %v400, %v582
    %v584 = vpop.f32.mrb[0].mxu0
    %v585 = vadd.f32 %v396, %v584
    %v586 = vpop.f32.mrb[0].mxu0
    %v587 = vadd.f32 %v400, %v586
    %588 = vdwg.mxu0
    %589 = vmatprep.subr.bf16.mxu0 0
    %590 = vmatpush1.bf16.msra.mxu0 %v490
    %591 = vmatprep.subr.bf16.mxu0 0
    %592 = vmatpush1.bf16.msra.mxu0 %v493
    %593 = vmatprep.subr.bf16.mxu0 0
    %594 = vmatpush1.bf16.msra.mxu0 %v496
    %595 = vmatprep.subr.bf16.mxu0 0
    %596 = vmatpush1.bf16.msra.mxu0 %v499
    %597 = vmatprep.subr.bf16.mxu0 0
    %598 = vmatpush1.bf16.msra.mxu0 %v502
    %599 = vmatprep.subr.bf16.mxu0 0
    %600 = vmatpush1.bf16.msra.mxu0 %v505
    %601 = vmatprep.subr.bf16.mxu0 0
    %602 = vmatpush1.bf16.msra.mxu0 %v508
    %603 = vmatprep.subr.bf16.mxu0 0
    %604 = vmatpush1.bf16.msra.mxu0 %v511
    %605 = vmatprep.subr.bf16.mxu0 0
    %606 = vmatpush1.bf16.msra.mxu0 0
    %607 = vmatprep.subr.bf16.mxu0 0
    %608 = vmatpush1.bf16.msra.mxu0 0
    %609 = vmatprep.subr.bf16.mxu0 0
    %610 = vmatpush1.bf16.msra.mxu0 0
    %611 = vmatprep.subr.bf16.mxu0 0
    %612 = vmatpush1.bf16.msra.mxu0 0
    %613 = vmatprep.subr.bf16.mxu0 0
    %614 = vmatpush1.bf16.msra.mxu0 0
    %615 = vmatprep.subr.bf16.mxu0 0
    %616 = vmatpush1.bf16.msra.mxu0 0
    %617 = vmatprep.subr.bf16.mxu0 0
    %618 = vmatpush1.bf16.msra.mxu0 0
    %619 = vmatprep.subr.bf16.mxu0 0
    %620 = vmatpush1.bf16.msra.mxu0 0
    %621 = vmatprep.mubr.bf16.mxu0 0
    %622 = vmatmul.mubr.bf16.gmra.mrb[0].mxu0 %v358
    %v623 = vpop.f32.mrb[0].mxu0
    %v624 = vadd.f32 %v404, %v623
    %v625 = vpop.f32.mrb[0].mxu0
    %v626 = vpop.f32.mrb[0].mxu0
    %v627 = vadd.f32 %v404, %v626
    %v628 = vpop.f32.mrb[0].mxu0
    %629 = vmatprep.mubr.bf16.mxu0 0
    %630 = vmatmul.mubr.bf16.gmra.mrb[0].mxu0 %v359
    %v631 = vpop.f32.mrb[0].mxu0
    %v632 = vadd.f32 %v404, %v631
    %v633 = vpop.f32.mrb[0].mxu0
    %v634 = vpop.f32.mrb[0].mxu0
    %v635 = vadd.f32 %v404, %v634
    %v636 = vpop.f32.mrb[0].mxu0
    %637 = vdwg.mxu0
    %v638 = vld [vmem:[#allocation7 + $0xc] sm:$0xff]
    %v639 = vld [vmem:[#allocation7 + $0x14] sm:$0xf]
    %v640 = vld [vmem:[#allocation7 + $0x3c] sm:$0xff]
    %v641 = vld [vmem:[#allocation7 + $0x44] sm:$0xf]
    %v642 = vld [vmem:[#allocation7 + $0x6c] sm:$0xff]
    %v643 = vld [vmem:[#allocation7 + $0x74] sm:$0xf]
    %v644 = vld [vmem:[#allocation7 + $0x9c] sm:$0xff]
    %v645 = vld [vmem:[#allocation7 + $0xa4] sm:$0xf]
    %v646 = vld [vmem:[#allocation7 + $0xcc] sm:$0xff]
    %v647 = vld [vmem:[#allocation7 + $0xd4] sm:$0xf]
    %v648 = vld [vmem:[#allocation7 + $0xfc] sm:$0xff]
    %v649 = vld [vmem:[#allocation7 + $0x104] sm:$0xf]
    %v650 = vld [vmem:[#allocation7 + $0x12c] sm:$0xff]
    %v651 = vld [vmem:[#allocation7 + $0x134] sm:$0xf]
    %v652 = vld [vmem:[#allocation7 + $0x15c] sm:$0xff]
    %v653 = vld [vmem:[#allocation7 + $0x164] sm:$0xf]
    %v654 = vld [vmem:[#allocation7 + $0x18c] sm:$0xff]
    %v655 = vld [vmem:[#allocation7 + $0x194] sm:$0xf]
    %v656 = vld [vmem:[#allocation7 + $0x1bc] sm:$0xff]
    %v657 = vld [vmem:[#allocation7 + $0x1c4] sm:$0xf]
    %v658 = vld [vmem:[#allocation7 + $0x1ec] sm:$0xff]
    %v659 = vld [vmem:[#allocation7 + $0x1f4] sm:$0xf]
    %v660 = vld [vmem:[#allocation7 + $0x21c] sm:$0xff]
    %v661 = vld [vmem:[#allocation7 + $0x224] sm:$0xf]
    %v662 = vld [vmem:[#allocation7 + $0x24c] sm:$0xff]
    %v663 = vld [vmem:[#allocation7 + $0x254] sm:$0xf]
    %v664 = vld [vmem:[#allocation7 + $0x27c] sm:$0xff]
    %v665 = vld [vmem:[#allocation7 + $0x284] sm:$0xf]
    %v666 = vld [vmem:[#allocation7 + $0x2ac] sm:$0xff]
    %v667 = vld [vmem:[#allocation7 + $0x2b4] sm:$0xf]
    %v668 = vld [vmem:[#allocation7 + $0x2dc] sm:$0xff]
    %v669 = vld [vmem:[#allocation7 + $0x2e4] sm:$0xf]
    %v671 = vlaneseq
    %v672 = vshrl.u32 %v671, 7
    %v673 = vsub.s32 0, %v672
    %v674 = vrot.slane %v107, %v673
    %v675 = vlaneseq
    %v676 = vshrl.u32 %v675, 7
    %v677 = vsub.s32 1, %v676
    %v678 = vrot.slane %v107, %v677
    %v679 = vlaneseq
    %v680 = vshrl.u32 %v679, 7
    %v681 = vsub.s32 2, %v680
    %v682 = vrot.slane %v107, %v681
    %v718 = vunpack.c.l.b16 %v638
    %v719 = vunpack.c.h.b16 %v638
    %v720 = vunpack.c.l.b16 %v639
    %v721 = vunpack.c.l.b16 %v640
    %v722 = vunpack.c.h.b16 %v640
    %v723 = vunpack.c.l.b16 %v641
    %v724 = vunpack.c.l.b16 %v642
    %v725 = vunpack.c.h.b16 %v642
    %v726 = vunpack.c.l.b16 %v643
    %v727 = vunpack.c.l.b16 %v644
    %v728 = vunpack.c.h.b16 %v644
    %v729 = vunpack.c.l.b16 %v645
    %v730 = vunpack.c.l.b16 %v646
    %v731 = vunpack.c.h.b16 %v646
    %v732 = vunpack.c.l.b16 %v647
    %v733 = vunpack.c.l.b16 %v648
    %v734 = vunpack.c.h.b16 %v648
    %v735 = vunpack.c.l.b16 %v649
    %v736 = vunpack.c.l.b16 %v650
    %v737 = vunpack.c.h.b16 %v650
    %v738 = vunpack.c.l.b16 %v651
    %v739 = vunpack.c.l.b16 %v652
    %v740 = vunpack.c.h.b16 %v652
    %v741 = vunpack.c.l.b16 %v653
    %v742 = vunpack.c.l.b16 %v654
    %v743 = vunpack.c.h.b16 %v654
    %v744 = vunpack.c.l.b16 %v655
    %v745 = vunpack.c.l.b16 %v656
    %v746 = vunpack.c.h.b16 %v656
    %v747 = vunpack.c.l.b16 %v657
    %v748 = vunpack.c.l.b16 %v658
    %v749 = vunpack.c.h.b16 %v658
    %v750 = vunpack.c.l.b16 %v659
    %v751 = vunpack.c.l.b16 %v660
    %v752 = vunpack.c.h.b16 %v660
    %v753 = vunpack.c.l.b16 %v661
    %v754 = vunpack.c.l.b16 %v662
    %v755 = vunpack.c.h.b16 %v662
    %v756 = vunpack.c.l.b16 %v663
    %v757 = vunpack.c.l.b16 %v664
    %v758 = vunpack.c.h.b16 %v664
    %v759 = vunpack.c.l.b16 %v665
    %v760 = vunpack.c.l.b16 %v666
    %v761 = vunpack.c.h.b16 %v666
    %v762 = vunpack.c.l.b16 %v667
    %v763 = vunpack.c.l.b16 %v668
    %v764 = vunpack.c.h.b16 %v668
    %v765 = vunpack.c.l.b16 %v669
    %v766 = vpack.c.b16 %v721, %v718
    %v767 = vpack.c.b16 %v722, %v719
    %v768 = vpack.c.b16 %v723, %v720
    %v769 = vpack.c.b16 %v727, %v724
    %v770 = vpack.c.b16 %v728, %v725
    %v771 = vpack.c.b16 %v729, %v726
    %v772 = vpack.c.b16 %v733, %v730
    %v773 = vpack.c.b16 %v734, %v731
    %v774 = vpack.c.b16 %v735, %v732
    %v775 = vpack.c.b16 %v739, %v736
    %v776 = vpack.c.b16 %v740, %v737
    %v777 = vpack.c.b16 %v741, %v738
    %v778 = vpack.c.b16 %v745, %v742
    %v779 = vpack.c.b16 %v746, %v743
    %v780 = vpack.c.b16 %v747, %v744
    %v781 = vpack.c.b16 %v751, %v748
    %v782 = vpack.c.b16 %v752, %v749
    %v783 = vpack.c.b16 %v753, %v750
    %v784 = vpack.c.b16 %v757, %v754
    %v785 = vpack.c.b16 %v758, %v755
    %v786 = vpack.c.b16 %v759, %v756
    %v787 = vpack.c.b16 %v763, %v760
    %v788 = vpack.c.b16 %v764, %v761
    %v789 = vpack.c.b16 %v765, %v762
    %814 = vmatprep.subr.bf16.mxu0 %v767
    %815 = vmatpush1.bf16.msra.mxu0 %v766
    %816 = vmatprep.subr.bf16.mxu0 %v770
    %817 = vmatpush1.bf16.msra.mxu0 %v769
    %818 = vmatprep.subr.bf16.mxu0 %v773
    %819 = vmatpush1.bf16.msra.mxu0 %v772
    %820 = vmatprep.subr.bf16.mxu0 %v776
    %821 = vmatpush1.bf16.msra.mxu0 %v775
    %822 = vmatprep.subr.bf16.mxu0 %v779
    %823 = vmatpush1.bf16.msra.mxu0 %v778
    %824 = vmatprep.subr.bf16.mxu0 %v782
    %825 = vmatpush1.bf16.msra.mxu0 %v781
    %826 = vmatprep.subr.bf16.mxu0 %v785
    %827 = vmatpush1.bf16.msra.mxu0 %v784
    %828 = vmatprep.subr.bf16.mxu0 %v788
    %829 = vmatpush1.bf16.msra.mxu0 %v787
    %830 = vmatprep.subr.bf16.mxu0 0
    %831 = vmatpush1.bf16.msra.mxu0 0
    %832 = vmatprep.subr.bf16.mxu0 0
    %833 = vmatpush1.bf16.msra.mxu0 0
    %834 = vmatprep.subr.bf16.mxu0 0
    %835 = vmatpush1.bf16.msra.mxu0 0
    %836 = vmatprep.subr.bf16.mxu0 0
    %837 = vmatpush1.bf16.msra.mxu0 0
    %838 = vmatprep.subr.bf16.mxu0 0
    %839 = vmatpush1.bf16.msra.mxu0 0
    %840 = vmatprep.subr.bf16.mxu0 0
    %841 = vmatpush1.bf16.msra.mxu0 0
    %842 = vmatprep.subr.bf16.mxu0 0
    %843 = vmatpush1.bf16.msra.mxu0 0
    %844 = vmatprep.subr.bf16.mxu0 0
    %845 = vmatpush1.bf16.msra.mxu0 0
    %846 = vmatprep.mubr.bf16.mxu0 0
    %847 = vmatmul.mubr.bf16.gmra.mrb[0].mxu0 0
    %v848 = vpop.f32.mrb[0].mxu0
    %v849 = vadd.f32 %v674, %v848
    %v850 = vpop.f32.mrb[0].mxu0
    %v851 = vadd.f32 %v678, %v850
    %v852 = vpop.f32.mrb[0].mxu0
    %v853 = vpop.f32.mrb[0].mxu0
    %854 = vdwg.mxu0
    %855 = vmatprep.subr.bf16.mxu0 0
    %856 = vmatpush1.bf16.msra.mxu0 %v768
    %857 = vmatprep.subr.bf16.mxu0 0
    %858 = vmatpush1.bf16.msra.mxu0 %v771
    %859 = vmatprep.subr.bf16.mxu0 0
    %860 = vmatpush1.bf16.msra.mxu0 %v774
    %861 = vmatprep.subr.bf16.mxu0 0
    %862 = vmatpush1.bf16.msra.mxu0 %v777
    %863 = vmatprep.subr.bf16.mxu0 0
    %864 = vmatpush1.bf16.msra.mxu0 %v780
    %865 = vmatprep.subr.bf16.mxu0 0
    %866 = vmatpush1.bf16.msra.mxu0 %v783
    %867 = vmatprep.subr.bf16.mxu0 0
    %868 = vmatpush1.bf16.msra.mxu0 %v786
    %869 = vmatprep.subr.bf16.mxu0 0
    %870 = vmatpush1.bf16.msra.mxu0 %v789
    %871 = vmatprep.subr.bf16.mxu0 0
    %872 = vmatpush1.bf16.msra.mxu0 0
    %873 = vmatprep.subr.bf16.mxu0 0
    %874 = vmatpush1.bf16.msra.mxu0 0
    %875 = vmatprep.subr.bf16.mxu0 0
    %876 = vmatpush1.bf16.msra.mxu0 0
    %877 = vmatprep.subr.bf16.mxu0 0
    %878 = vmatpush1.bf16.msra.mxu0 0
    %879 = vmatprep.subr.bf16.mxu0 0
    %880 = vmatpush1.bf16.msra.mxu0 0
    %881 = vmatprep.subr.bf16.mxu0 0
    %882 = vmatpush1.bf16.msra.mxu0 0
    %883 = vmatprep.subr.bf16.mxu0 0
    %884 = vmatpush1.bf16.msra.mxu0 0
    %885 = vmatprep.subr.bf16.mxu0 0
    %886 = vmatpush1.bf16.msra.mxu0 0
    %887 = vmatprep.mubr.bf16.mxu0 0
    %888 = vmatmul.mubr.bf16.gmra.mrb[0].mxu0 0
    %v889 = vpop.f32.mrb[0].mxu0
    %v890 = vadd.f32 %v682, %v889
    %v891 = vpop.f32.mrb[0].mxu0
    %v892 = vpop.f32.mrb[0].mxu0
    %v893 = vpop.f32.mrb[0].mxu0
    %894 = vdwg.mxu0
    %v895 = vadd.f32 %v571, %v849
    %v896 = vxor.u32 %v895, 2147483648
    %v897 = vmul.f32 %v896, 1.442695
    %v898 = vpow.pop %v897
    %v899 = vadd.f32 %v898, 1.0
    %v900 = vrcp.pop %v899
    %v901 = vmul.f32 1.0, %v900
    %v902 = vadd.f32 %v573, %v851
    %v903 = vxor.u32 %v902, 2147483648
    %v904 = vmul.f32 %v903, 1.442695
    %v905 = vpow.pop %v904
    %v906 = vadd.f32 %v905, 1.0
    %v907 = vrcp.pop %v906
    %v908 = vmul.f32 1.0, %v907
    %v909 = vmul.f32 %v901, %v890
    %v910 = vadd.f32 %v624, %v909
    %v911 = vtanh.pop %v910
    %v912 = vsub.f32 1.0, %v908
    %v913 = vmul.f32 %v912, %v911
    %v914 = vmul.f32 %v908, 0.0
    %v915 = vadd.f32 %v913, %v914
    %v916 = vsel %vm354, 1, 0
    %917 = vset.pattern.permute.xlu0 0
    %918 = vperm.xlu0 %917, %v916
    %v919 = vpop.permute.xlu0 %918
    %vm920 = vcmp.eq.s32.totalorder %v919, 1
    %v921 = vsel %vm920, %v915, 0.0
    %v922 = vpack.c.bf16 %v921, %v921
    %v923 = vld [vmem:[#allocation7 + $0x18] sm:$0xff]
    %v924 = vld [vmem:[#allocation7 + $0x20] sm:$0xf]
    %v925 = vld [vmem:[#allocation7 + $0x48] sm:$0xff]
    %v926 = vld [vmem:[#allocation7 + $0x50] sm:$0xf]
    %v927 = vld [vmem:[#allocation7 + $0x78] sm:$0xff]
    %v928 = vld [vmem:[#allocation7 + $0x80] sm:$0xf]
    %v929 = vld [vmem:[#allocation7 + $0xa8] sm:$0xff]
    %v930 = vld [vmem:[#allocation7 + $0xb0] sm:$0xf]
    %v931 = vld [vmem:[#allocation7 + $0xd8] sm:$0xff]
    %v932 = vld [vmem:[#allocation7 + $0xe0] sm:$0xf]
    %v933 = vld [vmem:[#allocation7 + $0x108] sm:$0xff]
    %v934 = vld [vmem:[#allocation7 + $0x110] sm:$0xf]
    %v935 = vld [vmem:[#allocation7 + $0x138] sm:$0xff]
    %v936 = vld [vmem:[#allocation7 + $0x140] sm:$0xf]
    %v937 = vld [vmem:[#allocation7 + $0x168] sm:$0xff]
    %v938 = vld [vmem:[#allocation7 + $0x170] sm:$0xf]
    %v939 = vld [vmem:[#allocation7 + $0x198] sm:$0xff]
    %v940 = vld [vmem:[#allocation7 + $0x1a0] sm:$0xf]
    %v941 = vld [vmem:[#allocation7 + $0x1c8] sm:$0xff]
    %v942 = vld [vmem:[#allocation7 + $0x1d0] sm:$0xf]
    %v943 = vld [vmem:[#allocation7 + $0x1f8] sm:$0xff]
    %v944 = vld [vmem:[#allocation7 + $0x200] sm:$0xf]
    %v945 = vld [vmem:[#allocation7 + $0x228] sm:$0xff]
    %v946 = vld [vmem:[#allocation7 + $0x230] sm:$0xf]
    %v947 = vld [vmem:[#allocation7 + $0x258] sm:$0xff]
    %v948 = vld [vmem:[#allocation7 + $0x260] sm:$0xf]
    %v949 = vld [vmem:[#allocation7 + $0x288] sm:$0xff]
    %v950 = vld [vmem:[#allocation7 + $0x290] sm:$0xf]
    %v951 = vld [vmem:[#allocation7 + $0x2b8] sm:$0xff]
    %v952 = vld [vmem:[#allocation7 + $0x2c0] sm:$0xf]
    %v953 = vld [vmem:[#allocation7 + $0x2e8] sm:$0xff]
    %v954 = vld [vmem:[#allocation7 + $0x2f0] sm:$0xf]
    %v956 = vlaneseq
    %v957 = vshrl.u32 %v956, 7
    %v958 = vsub.s32 0, %v957
    %v959 = vrot.slane %v109, %v958
    %v960 = vlaneseq
    %v961 = vshrl.u32 %v960, 7
    %v962 = vsub.s32 1, %v961
    %v963 = vrot.slane %v109, %v962
    %v964 = vlaneseq
    %v965 = vshrl.u32 %v964, 7
    %v966 = vsub.s32 2, %v965
    %v967 = vrot.slane %v109, %v966
    %v1003 = vunpack.c.l.b16 %v923
    %v1004 = vunpack.c.h.b16 %v923
    %v1005 = vunpack.c.l.b16 %v924
    %v1006 = vunpack.c.l.b16 %v925
    %v1007 = vunpack.c.h.b16 %v925
    %v1008 = vunpack.c.l.b16 %v926
    %v1009 = vunpack.c.l.b16 %v927
    %v1010 = vunpack.c.h.b16 %v927
    %v1011 = vunpack.c.l.b16 %v928
    %v1012 = vunpack.c.l.b16 %v929
    %v1013 = vunpack.c.h.b16 %v929
    %v1014 = vunpack.c.l.b16 %v930
    %v1015 = vunpack.c.l.b16 %v931
    %v1016 = vunpack.c.h.b16 %v931
    %v1017 = vunpack.c.l.b16 %v932
    %v1018 = vunpack.c.l.b16 %v933
    %v1019 = vunpack.c.h.b16 %v933
    %v1020 = vunpack.c.l.b16 %v934
    %v1021 = vunpack.c.l.b16 %v935
    %v1022 = vunpack.c.h.b16 %v935
    %v1023 = vunpack.c.l.b16 %v936
    %v1024 = vunpack.c.l.b16 %v937
    %v1025 = vunpack.c.h.b16 %v937
    %v1026 = vunpack.c.l.b16 %v938
    %v1027 = vunpack.c.l.b16 %v939
    %v1028 = vunpack.c.h.b16 %v939
    %v1029 = vunpack.c.l.b16 %v940
    %v1030 = vunpack.c.l.b16 %v941
    %v1031 = vunpack.c.h.b16 %v941
    %v1032 = vunpack.c.l.b16 %v942
    %v1033 = vunpack.c.l.b16 %v943
    %v1034 = vunpack.c.h.b16 %v943
    %v1035 = vunpack.c.l.b16 %v944
    %v1036 = vunpack.c.l.b16 %v945
    %v1037 = vunpack.c.h.b16 %v945
    %v1038 = vunpack.c.l.b16 %v946
    %v1039 = vunpack.c.l.b16 %v947
    %v1040 = vunpack.c.h.b16 %v947
    %v1041 = vunpack.c.l.b16 %v948
    %v1042 = vunpack.c.l.b16 %v949
    %v1043 = vunpack.c.h.b16 %v949
    %v1044 = vunpack.c.l.b16 %v950
    %v1045 = vunpack.c.l.b16 %v951
    %v1046 = vunpack.c.h.b16 %v951
    %v1047 = vunpack.c.l.b16 %v952
    %v1048 = vunpack.c.l.b16 %v953
    %v1049 = vunpack.c.h.b16 %v953
    %v1050 = vunpack.c.l.b16 %v954
    %v1051 = vpack.c.b16 %v1006, %v1003
    %v1052 = vpack.c.b16 %v1007, %v1004
    %v1053 = vpack.c.b16 %v1008, %v1005
    %v1054 = vpack.c.b16 %v1012, %v1009
    %v1055 = vpack.c.b16 %v1013, %v1010
    %v1056 = vpack.c.b16 %v1014, %v1011
    %v1057 = vpack.c.b16 %v1018, %v1015
    %v1058 = vpack.c.b16 %v1019, %v1016
    %v1059 = vpack.c.b16 %v1020, %v1017
    %v1060 = vpack.c.b16 %v1024, %v1021
    %v1061 = vpack.c.b16 %v1025, %v1022
    %v1062 = vpack.c.b16 %v1026, %v1023
    %v1063 = vpack.c.b16 %v1030, %v1027
    %v1064 = vpack.c.b16 %v1031, %v1028
    %v1065 = vpack.c.b16 %v1032, %v1029
    %v1066 = vpack.c.b16 %v1036, %v1033
    %v1067 = vpack.c.b16 %v1037, %v1034
    %v1068 = vpack.c.b16 %v1038, %v1035
    %v1069 = vpack.c.b16 %v1042, %v1039
    %v1070 = vpack.c.b16 %v1043, %v1040
    %v1071 = vpack.c.b16 %v1044, %v1041
    %v1072 = vpack.c.b16 %v1048, %v1045
    %v1073 = vpack.c.b16 %v1049, %v1046
    %v1074 = vpack.c.b16 %v1050, %v1047
    %1099 = vmatprep.subr.bf16.mxu0 %v1052
    %1100 = vmatpush1.bf16.msra.mxu0 %v1051
    %1101 = vmatprep.subr.bf16.mxu0 %v1055
    %1102 = vmatpush1.bf16.msra.mxu0 %v1054
    %1103 = vmatprep.subr.bf16.mxu0 %v1058
    %1104 = vmatpush1.bf16.msra.mxu0 %v1057
    %1105 = vmatprep.subr.bf16.mxu0 %v1061
    %1106 = vmatpush1.bf16.msra.mxu0 %v1060
    %1107 = vmatprep.subr.bf16.mxu0 %v1064
    %1108 = vmatpush1.bf16.msra.mxu0 %v1063
    %1109 = vmatprep.subr.bf16.mxu0 %v1067
    %1110 = vmatpush1.bf16.msra.mxu0 %v1066
    %1111 = vmatprep.subr.bf16.mxu0 %v1070
    %1112 = vmatpush1.bf16.msra.mxu0 %v1069
    %1113 = vmatprep.subr.bf16.mxu0 %v1073
    %1114 = vmatpush1.bf16.msra.mxu0 %v1072
    %1115 = vmatprep.subr.bf16.mxu0 0
    %1116 = vmatpush1.bf16.msra.mxu0 0
    %1117 = vmatprep.subr.bf16.mxu0 0
    %1118 = vmatpush1.bf16.msra.mxu0 0
    %1119 = vmatprep.subr.bf16.mxu0 0
    %1120 = vmatpush1.bf16.msra.mxu0 0
    %1121 = vmatprep.subr.bf16.mxu0 0
    %1122 = vmatpush1.bf16.msra.mxu0 0
    %1123 = vmatprep.subr.bf16.mxu0 0
    %1124 = vmatpush1.bf16.msra.mxu0 0
    %1125 = vmatprep.subr.bf16.mxu0 0
    %1126 = vmatpush1.bf16.msra.mxu0 0
    %1127 = vmatprep.subr.bf16.mxu0 0
    %1128 = vmatpush1.bf16.msra.mxu0 0
    %1129 = vmatprep.subr.bf16.mxu0 0
    %1130 = vmatpush1.bf16.msra.mxu0 0
    %1131 = vmatprep.mubr.bf16.mxu0 0
    %1132 = vmatmul.mubr.bf16.gmra.mrb[0].mxu0 %v922
    %v1133 = vpop.f32.mrb[0].mxu0
    %v1134 = vadd.f32 %v959, %v1133
    %v1135 = vpop.f32.mrb[0].mxu0
    %v1136 = vadd.f32 %v963, %v1135
    %v1137 = vpop.f32.mrb[0].mxu0
    %v1138 = vpop.f32.mrb[0].mxu0
    %1139 = vdwg.mxu0
    %1140 = vmatprep.subr.bf16.mxu0 0
    %1141 = vmatpush1.bf16.msra.mxu0 %v1053
    %1142 = vmatprep.subr.bf16.mxu0 0
    %1143 = vmatpush1.bf16.msra.mxu0 %v1056
    %1144 = vmatprep.subr.bf16.mxu0 0
    %1145 = vmatpush1.bf16.msra.mxu0 %v1059
    %1146 = vmatprep.subr.bf16.mxu0 0
    %1147 = vmatpush1.bf16.msra.mxu0 %v1062
    %1148 = vmatprep.subr.bf16.mxu0 0
    %1149 = vmatpush1.bf16.msra.mxu0 %v1065
    %1150 = vmatprep.subr.bf16.mxu0 0
    %1151 = vmatpush1.bf16.msra.mxu0 %v1068
    %1152 = vmatprep.subr.bf16.mxu0 0
    %1153 = vmatpush1.bf16.msra.mxu0 %v1071
    %1154 = vmatprep.subr.bf16.mxu0 0
    %1155 = vmatpush1.bf16.msra.mxu0 %v1074
    %1156 = vmatprep.subr.bf16.mxu0 0
    %1157 = vmatpush1.bf16.msra.mxu0 0
    %1158 = vmatprep.subr.bf16.mxu0 0
    %1159 = vmatpush1.bf16.msra.mxu0 0
    %1160 = vmatprep.subr.bf16.mxu0 0
    %1161 = vmatpush1.bf16.msra.mxu0 0
    %1162 = vmatprep.subr.bf16.mxu0 0
    %1163 = vmatpush1.bf16.msra.mxu0 0
    %1164 = vmatprep.subr.bf16.mxu0 0
    %1165 = vmatpush1.bf16.msra.mxu0 0
    %1166 = vmatprep.subr.bf16.mxu0 0
    %1167 = vmatpush1.bf16.msra.mxu0 0
    %1168 = vmatprep.subr.bf16.mxu0 0
    %1169 = vmatpush1.bf16.msra.mxu0 0
    %1170 = vmatprep.subr.bf16.mxu0 0
    %1171 = vmatpush1.bf16.msra.mxu0 0
    %1172 = vmatprep.mubr.bf16.mxu0 0
    %1173 = vmatmul.mubr.bf16.gmra.mrb[0].mxu0 %v922
    %v1174 = vpop.f32.mrb[0].mxu0
    %v1175 = vadd.f32 %v967, %v1174
    %v1176 = vpop.f32.mrb[0].mxu0
    %v1177 = vpop.f32.mrb[0].mxu0
    %v1178 = vpop.f32.mrb[0].mxu0
    %1179 = vdwg.mxu0
    %v1180 = vld [vmem:[#allocation7 + $0x24] sm:$0xff]
    %v1181 = vld [vmem:[#allocation7 + $0x2c] sm:$0xf]
    %v1182 = vld [vmem:[#allocation7 + $0x54] sm:$0xff]
    %v1183 = vld [vmem:[#allocation7 + $0x5c] sm:$0xf]
    %v1184 = vld [vmem:[#allocation7 + $0x84] sm:$0xff]
    %v1185 = vld [vmem:[#allocation7 + $0x8c] sm:$0xf]
    %v1186 = vld [vmem:[#allocation7 + $0xb4] sm:$0xff]
    %v1187 = vld [vmem:[#allocation7 + $0xbc] sm:$0xf]
    %v1188 = vld [vmem:[#allocation7 + $0xe4] sm:$0xff]
    %v1189 = vld [vmem:[#allocation7 + $0xec] sm:$0xf]
    %v1190 = vld [vmem:[#allocation7 + $0x114] sm:$0xff]
    %v1191 = vld [vmem:[#allocation7 + $0x11c] sm:$0xf]
    %v1192 = vld [vmem:[#allocation7 + $0x144] sm:$0xff]
    %v1193 = vld [vmem:[#allocation7 + $0x14c] sm:$0xf]
    %v1194 = vld [vmem:[#allocation7 + $0x174] sm:$0xff]
    %v1195 = vld [vmem:[#allocation7 + $0x17c] sm:$0xf]
    %v1196 = vld [vmem:[#allocation7 + $0x1a4] sm:$0xff]
    %v1197 = vld [vmem:[#allocation7 + $0x1ac] sm:$0xf]
    %v1198 = vld [vmem:[#allocation7 + $0x1d4] sm:$0xff]
    %v1199 = vld [vmem:[#allocation7 + $0x1dc] sm:$0xf]
    %v1200 = vld [vmem:[#allocation7 + $0x204] sm:$0xff]
    %v1201 = vld [vmem:[#allocation7 + $0x20c] sm:$0xf]
    %v1202 = vld [vmem:[#allocation7 + $0x234] sm:$0xff]
    %v1203 = vld [vmem:[#allocation7 + $0x23c] sm:$0xf]
    %v1204 = vld [vmem:[#allocation7 + $0x264] sm:$0xff]
    %v1205 = vld [vmem:[#allocation7 + $0x26c] sm:$0xf]
    %v1206 = vld [vmem:[#allocation7 + $0x294] sm:$0xff]
    %v1207 = vld [vmem:[#allocation7 + $0x29c] sm:$0xf]
    %v1208 = vld [vmem:[#allocation7 + $0x2c4] sm:$0xff]
    %v1209 = vld [vmem:[#allocation7 + $0x2cc] sm:$0xf]
    %v1210 = vld [vmem:[#allocation7 + $0x2f4] sm:$0xff]
    %v1211 = vld [vmem:[#allocation7 + $0x2fc] sm:$0xf]
    %v1213 = vlaneseq
    %v1214 = vshrl.u32 %v1213, 7
    %v1215 = vsub.s32 0, %v1214
    %v1216 = vrot.slane %v111, %v1215
    %v1217 = vlaneseq
    %v1218 = vshrl.u32 %v1217, 7
    %v1219 = vsub.s32 1, %v1218
    %v1220 = vrot.slane %v111, %v1219
    %v1221 = vlaneseq
    %v1222 = vshrl.u32 %v1221, 7
    %v1223 = vsub.s32 2, %v1222
    %v1224 = vrot.slane %v111, %v1223
    %v1260 = vunpack.c.l.b16 %v1180
    %v1261 = vunpack.c.h.b16 %v1180
    %v1262 = vunpack.c.l.b16 %v1181
    %v1263 = vunpack.c.l.b16 %v1182
    %v1264 = vunpack.c.h.b16 %v1182
    %v1265 = vunpack.c.l.b16 %v1183
    %v1266 = vunpack.c.l.b16 %v1184
    %v1267 = vunpack.c.h.b16 %v1184
    %v1268 = vunpack.c.l.b16 %v1185
    %v1269 = vunpack.c.l.b16 %v1186
    %v1270 = vunpack.c.h.b16 %v1186
    %v1271 = vunpack.c.l.b16 %v1187
    %v1272 = vunpack.c.l.b16 %v1188
    %v1273 = vunpack.c.h.b16 %v1188
    %v1274 = vunpack.c.l.b16 %v1189
    %v1275 = vunpack.c.l.b16 %v1190
    %v1276 = vunpack.c.h.b16 %v1190
    %v1277 = vunpack.c.l.b16 %v1191
    %v1278 = vunpack.c.l.b16 %v1192
    %v1279 = vunpack.c.h.b16 %v1192
    %v1280 = vunpack.c.l.b16 %v1193
    %v1281 = vunpack.c.l.b16 %v1194
    %v1282 = vunpack.c.h.b16 %v1194
    %v1283 = vunpack.c.l.b16 %v1195
    %v1284 = vunpack.c.l.b16 %v1196
    %v1285 = vunpack.c.h.b16 %v1196
    %v1286 = vunpack.c.l.b16 %v1197
    %v1287 = vunpack.c.l.b16 %v1198
    %v1288 = vunpack.c.h.b16 %v1198
    %v1289 = vunpack.c.l.b16 %v1199
    %v1290 = vunpack.c.l.b16 %v1200
    %v1291 = vunpack.c.h.b16 %v1200
    %v1292 = vunpack.c.l.b16 %v1201
    %v1293 = vunpack.c.l.b16 %v1202
    %v1294 = vunpack.c.h.b16 %v1202
    %v1295 = vunpack.c.l.b16 %v1203
    %v1296 = vunpack.c.l.b16 %v1204
    %v1297 = vunpack.c.h.b16 %v1204
    %v1298 = vunpack.c.l.b16 %v1205
    %v1299 = vunpack.c.l.b16 %v1206
    %v1300 = vunpack.c.h.b16 %v1206
    %v1301 = vunpack.c.l.b16 %v1207
    %v1302 = vunpack.c.l.b16 %v1208
    %v1303 = vunpack.c.h.b16 %v1208
    %v1304 = vunpack.c.l.b16 %v1209
    %v1305 = vunpack.c.l.b16 %v1210
    %v1306 = vunpack.c.h.b16 %v1210
    %v1307 = vunpack.c.l.b16 %v1211
    %v1308 = vpack.c.b16 %v1263, %v1260
    %v1309 = vpack.c.b16 %v1264, %v1261
    %v1310 = vpack.c.b16 %v1265, %v1262
    %v1311 = vpack.c.b16 %v1269, %v1266
    %v1312 = vpack.c.b16 %v1270, %v1267
    %v1313 = vpack.c.b16 %v1271, %v1268
    %v1314 = vpack.c.b16 %v1275, %v1272
    %v1315 = vpack.c.b16 %v1276, %v1273
    %v1316 = vpack.c.b16 %v1277, %v1274
    %v1317 = vpack.c.b16 %v1281, %v1278
    %v1318 = vpack.c.b16 %v1282, %v1279
    %v1319 = vpack.c.b16 %v1283, %v1280
    %v1320 = vpack.c.b16 %v1287, %v1284
    %v1321 = vpack.c.b16 %v1288, %v1285
    %v1322 = vpack.c.b16 %v1289, %v1286
    %v1323 = vpack.c.b16 %v1293, %v1290
    %v1324 = vpack.c.b16 %v1294, %v1291
    %v1325 = vpack.c.b16 %v1295, %v1292
    %v1326 = vpack.c.b16 %v1299, %v1296
    %v1327 = vpack.c.b16 %v1300, %v1297
    %v1328 = vpack.c.b16 %v1301, %v1298
    %v1329 = vpack.c.b16 %v1305, %v1302
    %v1330 = vpack.c.b16 %v1306, %v1303
    %v1331 = vpack.c.b16 %v1307, %v1304
    %1356 = vmatprep.subr.bf16.mxu0 %v1309
    %1357 = vmatpush1.bf16.msra.mxu0 %v1308
    %1358 = vmatprep.subr.bf16.mxu0 %v1312
    %1359 = vmatpush1.bf16.msra.mxu0 %v1311
    %1360 = vmatprep.subr.bf16.mxu0 %v1315
    %1361 = vmatpush1.bf16.msra.mxu0 %v1314
    %1362 = vmatprep.subr.bf16.mxu0 %v1318
    %1363 = vmatpush1.bf16.msra.mxu0 %v1317
    %1364 = vmatprep.subr.bf16.mxu0 %v1321
    %1365 = vmatpush1.bf16.msra.mxu0 %v1320
    %1366 = vmatprep.subr.bf16.mxu0 %v1324
    %1367 = vmatpush1.bf16.msra.mxu0 %v1323
    %1368 = vmatprep.subr.bf16.mxu0 %v1327
    %1369 = vmatpush1.bf16.msra.mxu0 %v1326
    %1370 = vmatprep.subr.bf16.mxu0 %v1330
    %1371 = vmatpush1.bf16.msra.mxu0 %v1329
    %1372 = vmatprep.subr.bf16.mxu0 0
    %1373 = vmatpush1.bf16.msra.mxu0 0
    %1374 = vmatprep.subr.bf16.mxu0 0
    %1375 = vmatpush1.bf16.msra.mxu0 0
    %1376 = vmatprep.subr.bf16.mxu0 0
    %1377 = vmatpush1.bf16.msra.mxu0 0
    %1378 = vmatprep.subr.bf16.mxu0 0
    %1379 = vmatpush1.bf16.msra.mxu0 0
    %1380 = vmatprep.subr.bf16.mxu0 0
    %1381 = vmatpush1.bf16.msra.mxu0 0
    %1382 = vmatprep.subr.bf16.mxu0 0
    %1383 = vmatpush1.bf16.msra.mxu0 0
    %1384 = vmatprep.subr.bf16.mxu0 0
    %1385 = vmatpush1.bf16.msra.mxu0 0
    %1386 = vmatprep.subr.bf16.mxu0 0
    %1387 = vmatpush1.bf16.msra.mxu0 0
    %1388 = vmatprep.mubr.bf16.mxu0 0
    %1389 = vmatmul.mubr.bf16.gmra.mrb[0].mxu0 0
    %v1390 = vpop.f32.mrb[0].mxu0
    %v1391 = vadd.f32 %v1216, %v1390
    %v1392 = vpop.f32.mrb[0].mxu0
    %v1393 = vadd.f32 %v1220, %v1392
    %v1394 = vpop.f32.mrb[0].mxu0
    %v1395 = vpop.f32.mrb[0].mxu0
    %1396 = vdwg.mxu0
    %1397 = vmatprep.subr.bf16.mxu0 0
    %1398 = vmatpush1.bf16.msra.mxu0 %v1310
    %1399 = vmatprep.subr.bf16.mxu0 0
    %1400 = vmatpush1.bf16.msra.mxu0 %v1313
    %1401 = vmatprep.subr.bf16.mxu0 0
    %1402 = vmatpush1.bf16.msra.mxu0 %v1316
    %1403 = vmatprep.subr.bf16.mxu0 0
    %1404 = vmatpush1.bf16.msra.mxu0 %v1319
    %1405 = vmatprep.subr.bf16.mxu0 0
    %1406 = vmatpush1.bf16.msra.mxu0 %v1322
    %1407 = vmatprep.subr.bf16.mxu0 0
    %1408 = vmatpush1.bf16.msra.mxu0 %v1325
    %1409 = vmatprep.subr.bf16.mxu0 0
    %1410 = vmatpush1.bf16.msra.mxu0 %v1328
    %1411 = vmatprep.subr.bf16.mxu0 0
    %1412 = vmatpush1.bf16.msra.mxu0 %v1331
    %1413 = vmatprep.subr.bf16.mxu0 0
    %1414 = vmatpush1.bf16.msra.mxu0 0
    %1415 = vmatprep.subr.bf16.mxu0 0
    %1416 = vmatpush1.bf16.msra.mxu0 0
    %1417 = vmatprep.subr.bf16.mxu0 0
    %1418 = vmatpush1.bf16.msra.mxu0 0
    %1419 = vmatprep.subr.bf16.mxu0 0
    %1420 = vmatpush1.bf16.msra.mxu0 0
    %1421 = vmatprep.subr.bf16.mxu0 0
    %1422 = vmatpush1.bf16.msra.mxu0 0
    %1423 = vmatprep.subr.bf16.mxu0 0
    %1424 = vmatpush1.bf16.msra.mxu0 0
    %1425 = vmatprep.subr.bf16.mxu0 0
    %1426 = vmatpush1.bf16.msra.mxu0 0
    %1427 = vmatprep.subr.bf16.mxu0 0
    %1428 = vmatpush1.bf16.msra.mxu0 0
    %1429 = vmatprep.mubr.bf16.mxu0 0
    %1430 = vmatmul.mubr.bf16.gmra.mrb[0].mxu0 0
    %v1431 = vpop.f32.mrb[0].mxu0
    %v1432 = vadd.f32 %v1224, %v1431
    %v1433 = vpop.f32.mrb[0].mxu0
    %v1434 = vpop.f32.mrb[0].mxu0
    %v1435 = vpop.f32.mrb[0].mxu0
    %1436 = vdwg.mxu0
    %v1437 = vadd.f32 %v1134, %v1391
    %v1438 = vxor.u32 %v1437, 2147483648
    %v1439 = vmul.f32 %v1438, 1.442695
    %v1440 = vpow.pop %v1439
    %v1441 = vadd.f32 %v1440, 1.0
    %v1442 = vrcp.pop %v1441
    %v1443 = vmul.f32 1.0, %v1442
    %v1444 = vadd.f32 %v1136, %v1393
    %v1445 = vxor.u32 %v1444, 2147483648
    %v1446 = vmul.f32 %v1445, 1.442695
    %v1447 = vpow.pop %v1446
    %v1448 = vadd.f32 %v1447, 1.0
    %v1449 = vrcp.pop %v1448
    %v1450 = vmul.f32 1.0, %v1449
    %v1451 = vmul.f32 %v1443, %v1432
    %v1452 = vadd.f32 %v1175, %v1451
    %v1453 = vtanh.pop %v1452
    %v1454 = vsub.f32 1.0, %v1450
    %v1455 = vmul.f32 %v1454, %v1453
    %v1456 = vmul.f32 %v1450, 0.0
    %v1457 = vadd.f32 %v1455, %v1456
    %v1458 = vsel %vm920, %v1457, 0.0
    %1459 = vmatprep.subr.bf16.mxu0 %v767
    %1460 = vmatpush1.bf16.msra.mxu0 %v766
    %1461 = vmatprep.subr.bf16.mxu0 %v770
    %1462 = vmatpush1.bf16.msra.mxu0 %v769
    %1463 = vmatprep.subr.bf16.mxu0 %v773
    %1464 = vmatpush1.bf16.msra.mxu0 %v772
    %1465 = vmatprep.subr.bf16.mxu0 %v776
    %1466 = vmatpush1.bf16.msra.mxu0 %v775
    %1467 = vmatprep.subr.bf16.mxu0 %v779
    %1468 = vmatpush1.bf16.msra.mxu0 %v778
    %1469 = vmatprep.subr.bf16.mxu0 %v782
    %1470 = vmatpush1.bf16.msra.mxu0 %v781
    %1471 = vmatprep.subr.bf16.mxu0 %v785
    %1472 = vmatpush1.bf16.msra.mxu0 %v784
    %1473 = vmatprep.subr.bf16.mxu0 %v788
    %1474 = vmatpush1.bf16.msra.mxu0 %v787
    %1475 = vmatprep.subr.bf16.mxu0 0
    %1476 = vmatpush1.bf16.msra.mxu0 0
    %1477 = vmatprep.subr.bf16.mxu0 0
    %1478 = vmatpush1.bf16.msra.mxu0 0
    %1479 = vmatprep.subr.bf16.mxu0 0
    %1480 = vmatpush1.bf16.msra.mxu0 0
    %1481 = vmatprep.subr.bf16.mxu0 0
    %1482 = vmatpush1.bf16.msra.mxu0 0
    %1483 = vmatprep.subr.bf16.mxu0 0
    %1484 = vmatpush1.bf16.msra.mxu0 0
    %1485 = vmatprep.subr.bf16.mxu0 0
    %1486 = vmatpush1.bf16.msra.mxu0 0
    %1487 = vmatprep.subr.bf16.mxu0 0
    %1488 = vmatpush1.bf16.msra.mxu0 0
    %1489 = vmatprep.subr.bf16.mxu0 0
    %1490 = vmatpush1.bf16.msra.mxu0 0
    %1491 = vmatprep.mubr.bf16.mxu0 0
    %1492 = vmatmul.mubr.bf16.gmra.mrb[0].mxu0 %v922
    %v1493 = vpop.f32.mrb[0].mxu0
    %v1494 = vadd.f32 %v674, %v1493
    %v1495 = vpop.f32.mrb[0].mxu0
    %v1496 = vadd.f32 %v678, %v1495
    %v1497 = vpop.f32.mrb[0].mxu0
    %v1498 = vpop.f32.mrb[0].mxu0
    %1499 = vdwg.mxu0
    %1500 = vmatprep.subr.bf16.mxu0 0
    %1501 = vmatpush1.bf16.msra.mxu0 %v768
    %1502 = vmatprep.subr.bf16.mxu0 0
    %1503 = vmatpush1.bf16.msra.mxu0 %v771
    %1504 = vmatprep.subr.bf16.mxu0 0
    %1505 = vmatpush1.bf16.msra.mxu0 %v774
    %1506 = vmatprep.subr.bf16.mxu0 0
    %1507 = vmatpush1.bf16.msra.mxu0 %v777
    %1508 = vmatprep.subr.bf16.mxu0 0
    %1509 = vmatpush1.bf16.msra.mxu0 %v780
    %1510 = vmatprep.subr.bf16.mxu0 0
    %1511 = vmatpush1.bf16.msra.mxu0 %v783
    %1512 = vmatprep.subr.bf16.mxu0 0
    %1513 = vmatpush1.bf16.msra.mxu0 %v786
    %1514 = vmatprep.subr.bf16.mxu0 0
    %1515 = vmatpush1.bf16.msra.mxu0 %v789
    %1516 = vmatprep.subr.bf16.mxu0 0
    %1517 = vmatpush1.bf16.msra.mxu0 0
    %1518 = vmatprep.subr.bf16.mxu0 0
    %1519 = vmatpush1.bf16.msra.mxu0 0
    %1520 = vmatprep.subr.bf16.mxu0 0
    %1521 = vmatpush1.bf16.msra.mxu0 0
    %1522 = vmatprep.subr.bf16.mxu0 0
    %1523 = vmatpush1.bf16.msra.mxu0 0
    %1524 = vmatprep.subr.bf16.mxu0 0
    %1525 = vmatpush1.bf16.msra.mxu0 0
    %1526 = vmatprep.subr.bf16.mxu0 0
    %1527 = vmatpush1.bf16.msra.mxu0 0
    %1528 = vmatprep.subr.bf16.mxu0 0
    %1529 = vmatpush1.bf16.msra.mxu0 0
    %1530 = vmatprep.subr.bf16.mxu0 0
    %1531 = vmatpush1.bf16.msra.mxu0 0
    %1532 = vmatprep.mubr.bf16.mxu0 0
    %1533 = vmatmul.mubr.bf16.gmra.mrb[0].mxu0 %v922
    %v1534 = vpop.f32.mrb[0].mxu0
    %v1535 = vadd.f32 %v682, %v1534
    %v1536 = vpop.f32.mrb[0].mxu0
    %v1537 = vpop.f32.mrb[0].mxu0
    %v1538 = vpop.f32.mrb[0].mxu0
    %1539 = vdwg.mxu0
    %v1540 = vadd.f32 %v575, %v1494
    %v1541 = vxor.u32 %v1540, 2147483648
    %v1542 = vmul.f32 %v1541, 1.442695
    %v1543 = vpow.pop %v1542
    %v1544 = vadd.f32 %v1543, 1.0
    %v1545 = vrcp.pop %v1544
    %v1546 = vmul.f32 1.0, %v1545
    %v1547 = vadd.f32 %v577, %v1496
    %v1548 = vxor.u32 %v1547, 2147483648
    %v1549 = vmul.f32 %v1548, 1.442695
    %v1550 = vpow.pop %v1549
    %v1551 = vadd.f32 %v1550, 1.0
    %v1552 = vrcp.pop %v1551
    %v1553 = vmul.f32 1.0, %v1552
    %v1554 = vmul.f32 %v1546, %v1535
    %v1555 = vadd.f32 %v627, %v1554
    %v1556 = vtanh.pop %v1555
    %v1557 = vsub.f32 1.0, %v1553
    %v1558 = vmul.f32 %v1557, %v1556
    %v1559 = vmul.f32 %v1553, %v921
    %v1560 = vadd.f32 %v1558, %v1559
    %v1561 = vsel %vm355, 1, 0
    %1562 = vset.pattern.permute.xlu0 0
    %1563 = vperm.xlu0 %1562, %v1561
    %v1564 = vpop.permute.xlu0 %1563
    %vm1565 = vcmp.eq.s32.totalorder %v1564, 1
    %v1566 = vsel %vm1565, %v1560, %v921
    %v1567 = vpack.c.bf16 %v1566, %v1566
    %1568 = vmatprep.subr.bf16.mxu0 %v1052
    %1569 = vmatpush1.bf16.msra.mxu0 %v1051
    %1570 = vmatprep.subr.bf16.mxu0 %v1055
    %1571 = vmatpush1.bf16.msra.mxu0 %v1054
    %1572 = vmatprep.subr.bf16.mxu0 %v1058
    %1573 = vmatpush1.bf16.msra.mxu0 %v1057
    %1574 = vmatprep.subr.bf16.mxu0 %v1061
    %1575 = vmatpush1.bf16.msra.mxu0 %v1060
    %1576 = vmatprep.subr.bf16.mxu0 %v1064
    %1577 = vmatpush1.bf16.msra.mxu0 %v1063
    %1578 = vmatprep.subr.bf16.mxu0 %v1067
    %1579 = vmatpush1.bf16.msra.mxu0 %v1066
    %1580 = vmatprep.subr.bf16.mxu0 %v1070
    %1581 = vmatpush1.bf16.msra.mxu0 %v1069
    %1582 = vmatprep.subr.bf16.mxu0 %v1073
    %1583 = vmatpush1.bf16.msra.mxu0 %v1072
    %1584 = vmatprep.subr.bf16.mxu0 0
    %1585 = vmatpush1.bf16.msra.mxu0 0
    %1586 = vmatprep.subr.bf16.mxu0 0
    %1587 = vmatpush1.bf16.msra.mxu0 0
    %1588 = vmatprep.subr.bf16.mxu0 0
    %1589 = vmatpush1.bf16.msra.mxu0 0
    %1590 = vmatprep.subr.bf16.mxu0 0
    %1591 = vmatpush1.bf16.msra.mxu0 0
    %1592 = vmatprep.subr.bf16.mxu0 0
    %1593 = vmatpush1.bf16.msra.mxu0 0
    %1594 = vmatprep.subr.bf16.mxu0 0
    %1595 = vmatpush1.bf16.msra.mxu0 0
    %1596 = vmatprep.subr.bf16.mxu0 0
    %1597 = vmatpush1.bf16.msra.mxu0 0
    %1598 = vmatprep.subr.bf16.mxu0 0
    %1599 = vmatpush1.bf16.msra.mxu0 0
    %1600 = vmatprep.mubr.bf16.mxu0 0
    %1601 = vmatmul.mubr.bf16.gmra.mrb[0].mxu0 %v1567
    %v1602 = vpop.f32.mrb[0].mxu0
    %v1603 = vadd.f32 %v959, %v1602
    %v1604 = vpop.f32.mrb[0].mxu0
    %v1605 = vadd.f32 %v963, %v1604
    %v1606 = vpop.f32.mrb[0].mxu0
    %v1607 = vpop.f32.mrb[0].mxu0
    %1608 = vdwg.mxu0
    %1609 = vmatprep.subr.bf16.mxu0 0
    %1610 = vmatpush1.bf16.msra.mxu0 %v1053
    %1611 = vmatprep.subr.bf16.mxu0 0
    %1612 = vmatpush1.bf16.msra.mxu0 %v1056
    %1613 = vmatprep.subr.bf16.mxu0 0
    %1614 = vmatpush1.bf16.msra.mxu0 %v1059
    %1615 = vmatprep.subr.bf16.mxu0 0
    %1616 = vmatpush1.bf16.msra.mxu0 %v1062
    %1617 = vmatprep.subr.bf16.mxu0 0
    %1618 = vmatpush1.bf16.msra.mxu0 %v1065
    %1619 = vmatprep.subr.bf16.mxu0 0
    %1620 = vmatpush1.bf16.msra.mxu0 %v1068
    %1621 = vmatprep.subr.bf16.mxu0 0
    %1622 = vmatpush1.bf16.msra.mxu0 %v1071
    %1623 = vmatprep.subr.bf16.mxu0 0
    %1624 = vmatpush1.bf16.msra.mxu0 %v1074
    %1625 = vmatprep.subr.bf16.mxu0 0
    %1626 = vmatpush1.bf16.msra.mxu0 0
    %1627 = vmatprep.subr.bf16.mxu0 0
    %1628 = vmatpush1.bf16.msra.mxu0 0
    %1629 = vmatprep.subr.bf16.mxu0 0
    %1630 = vmatpush1.bf16.msra.mxu0 0
    %1631 = vmatprep.subr.bf16.mxu0 0
    %1632 = vmatpush1.bf16.msra.mxu0 0
    %1633 = vmatprep.subr.bf16.mxu0 0
    %1634 = vmatpush1.bf16.msra.mxu0 0
    %1635 = vmatprep.subr.bf16.mxu0 0
    %1636 = vmatpush1.bf16.msra.mxu0 0
    %1637 = vmatprep.subr.bf16.mxu0 0
    %1638 = vmatpush1.bf16.msra.mxu0 0
    %1639 = vmatprep.subr.bf16.mxu0 0
    %1640 = vmatpush1.bf16.msra.mxu0 0
    %1641 = vmatprep.mubr.bf16.mxu0 0
    %1642 = vmatmul.mubr.bf16.gmra.mrb[0].mxu0 %v1567
    %v1643 = vpop.f32.mrb[0].mxu0
    %v1644 = vadd.f32 %v967, %v1643
    %v1645 = vpop.f32.mrb[0].mxu0
    %v1646 = vpop.f32.mrb[0].mxu0
    %v1647 = vpop.f32.mrb[0].mxu0
    %1648 = vdwg.mxu0
    %v1649 = vpack.c.bf16 %v1458, %v1458
    %1650 = vmatprep.subr.bf16.mxu0 %v1309
    %1651 = vmatpush1.bf16.msra.mxu0 %v1308
    %1652 = vmatprep.subr.bf16.mxu0 %v1312
    %1653 = vmatpush1.bf16.msra.mxu0 %v1311
    %1654 = vmatprep.subr.bf16.mxu0 %v1315
    %1655 = vmatpush1.bf16.msra.mxu0 %v1314
    %1656 = vmatprep.subr.bf16.mxu0 %v1318
    %1657 = vmatpush1.bf16.msra.mxu0 %v1317
    %1658 = vmatprep.subr.bf16.mxu0 %v1321
    %1659 = vmatpush1.bf16.msra.mxu0 %v1320
    %1660 = vmatprep.subr.bf16.mxu0 %v1324
    %1661 = vmatpush1.bf16.msra.mxu0 %v1323
    %1662 = vmatprep.subr.bf16.mxu0 %v1327
    %1663 = vmatpush1.bf16.msra.mxu0 %v1326
    %1664 = vmatprep.subr.bf16.mxu0 %v1330
    %1665 = vmatpush1.bf16.msra.mxu0 %v1329
    %1666 = vmatprep.subr.bf16.mxu0 0
    %1667 = vmatpush1.bf16.msra.mxu0 0
    %1668 = vmatprep.subr.bf16.mxu0 0
    %1669 = vmatpush1.bf16.msra.mxu0 0
    %1670 = vmatprep.subr.bf16.mxu0 0
    %1671 = vmatpush1.bf16.msra.mxu0 0
    %1672 = vmatprep.subr.bf16.mxu0 0
    %1673 = vmatpush1.bf16.msra.mxu0 0
    %1674 = vmatprep.subr.bf16.mxu0 0
    %1675 = vmatpush1.bf16.msra.mxu0 0
    %1676 = vmatprep.subr.bf16.mxu0 0
    %1677 = vmatpush1.bf16.msra.mxu0 0
    %1678 = vmatprep.subr.bf16.mxu0 0
    %1679 = vmatpush1.bf16.msra.mxu0 0
    %1680 = vmatprep.subr.bf16.mxu0 0
    %1681 = vmatpush1.bf16.msra.mxu0 0
    %1682 = vmatprep.mubr.bf16.mxu0 0
    %1683 = vmatmul.mubr.bf16.gmra.mrb[0].mxu0 %v1649
    %v1684 = vpop.f32.mrb[0].mxu0
    %v1685 = vadd.f32 %v1216, %v1684
    %v1686 = vpop.f32.mrb[0].mxu0
    %v1687 = vadd.f32 %v1220, %v1686
    %v1688 = vpop.f32.mrb[0].mxu0
    %v1689 = vpop.f32.mrb[0].mxu0
    %1690 = vdwg.mxu0
    %1691 = vmatprep.subr.bf16.mxu0 0
    %1692 = vmatpush1.bf16.msra.mxu0 %v1310
    %1693 = vmatprep.subr.bf16.mxu0 0
    %1694 = vmatpush1.bf16.msra.mxu0 %v1313
    %1695 = vmatprep.subr.bf16.mxu0 0
    %1696 = vmatpush1.bf16.msra.mxu0 %v1316
    %1697 = vmatprep.subr.bf16.mxu0 0
    %1698 = vmatpush1.bf16.msra.mxu0 %v1319
    %1699 = vmatprep.subr.bf16.mxu0 0
    %1700 = vmatpush1.bf16.msra.mxu0 %v1322
    %1701 = vmatprep.subr.bf16.mxu0 0
    %1702 = vmatpush1.bf16.msra.mxu0 %v1325
    %1703 = vmatprep.subr.bf16.mxu0 0
    %1704 = vmatpush1.bf16.msra.mxu0 %v1328
    %1705 = vmatprep.subr.bf16.mxu0 0
    %1706 = vmatpush1.bf16.msra.mxu0 %v1331
    %1707 = vmatprep.subr.bf16.mxu0 0
    %1708 = vmatpush1.bf16.msra.mxu0 0
    %1709 = vmatprep.subr.bf16.mxu0 0
    %1710 = vmatpush1.bf16.msra.mxu0 0
    %1711 = vmatprep.subr.bf16.mxu0 0
    %1712 = vmatpush1.bf16.msra.mxu0 0
    %1713 = vmatprep.subr.bf16.mxu0 0
    %1714 = vmatpush1.bf16.msra.mxu0 0
    %1715 = vmatprep.subr.bf16.mxu0 0
    %1716 = vmatpush1.bf16.msra.mxu0 0
    %1717 = vmatprep.subr.bf16.mxu0 0
    %1718 = vmatpush1.bf16.msra.mxu0 0
    %1719 = vmatprep.subr.bf16.mxu0 0
    %1720 = vmatpush1.bf16.msra.mxu0 0
    %1721 = vmatprep.subr.bf16.mxu0 0
    %1722 = vmatpush1.bf16.msra.mxu0 0
    %1723 = vmatprep.mubr.bf16.mxu0 0
    %1724 = vmatmul.mubr.bf16.gmra.mrb[0].mxu0 %v1649
    %v1725 = vpop.f32.mrb[0].mxu0
    %v1726 = vadd.f32 %v1224, %v1725
    %v1727 = vpop.f32.mrb[0].mxu0
    %v1728 = vpop.f32.mrb[0].mxu0
    %v1729 = vpop.f32.mrb[0].mxu0
    %1730 = vdwg.mxu0
    %v1731 = vadd.f32 %v1603, %v1685
    %v1732 = vxor.u32 %v1731, 2147483648
    %v1733 = vmul.f32 %v1732, 1.442695
    %v1734 = vpow.pop %v1733
    %v1735 = vadd.f32 %v1734, 1.0
    %v1736 = vrcp.pop %v1735
    %v1737 = vmul.f32 1.0, %v1736
    %v1738 = vadd.f32 %v1605, %v1687
    %v1739 = vxor.u32 %v1738, 2147483648
    %v1740 = vmul.f32 %v1739, 1.442695
    %v1741 = vpow.pop %v1740
    %v1742 = vadd.f32 %v1741, 1.0
    %v1743 = vrcp.pop %v1742
    %v1744 = vmul.f32 1.0, %v1743
    %v1745 = vmul.f32 %v1737, %v1726
    %v1746 = vadd.f32 %v1644, %v1745
    %v1747 = vtanh.pop %v1746
    %v1748 = vsub.f32 1.0, %v1744
    %v1749 = vmul.f32 %v1748, %v1747
    %v1750 = vmul.f32 %v1744, %v1458
    %v1751 = vadd.f32 %v1749, %v1750
    %v1752 = vsel %vm1565, %v1751, %v1458
    %1753 = vmatprep.subr.bf16.mxu0 %v767
    %1754 = vmatpush1.bf16.msra.mxu0 %v766
    %1755 = vmatprep.subr.bf16.mxu0 %v770
    %1756 = vmatpush1.bf16.msra.mxu0 %v769
    %1757 = vmatprep.subr.bf16.mxu0 %v773
    %1758 = vmatpush1.bf16.msra.mxu0 %v772
    %1759 = vmatprep.subr.bf16.mxu0 %v776
    %1760 = vmatpush1.bf16.msra.mxu0 %v775
    %1761 = vmatprep.subr.bf16.mxu0 %v779
    %1762 = vmatpush1.bf16.msra.mxu0 %v778
    %1763 = vmatprep.subr.bf16.mxu0 %v782
    %1764 = vmatpush1.bf16.msra.mxu0 %v781
    %1765 = vmatprep.subr.bf16.mxu0 %v785
    %1766 = vmatpush1.bf16.msra.mxu0 %v784
    %1767 = vmatprep.subr.bf16.mxu0 %v788
    %1768 = vmatpush1.bf16.msra.mxu0 %v787
    %1769 = vmatprep.subr.bf16.mxu0 0
    %1770 = vmatpush1.bf16.msra.mxu0 0
    %1771 = vmatprep.subr.bf16.mxu0 0
    %1772 = vmatpush1.bf16.msra.mxu0 0
    %1773 = vmatprep.subr.bf16.mxu0 0
    %1774 = vmatpush1.bf16.msra.mxu0 0
    %1775 = vmatprep.subr.bf16.mxu0 0
    %1776 = vmatpush1.bf16.msra.mxu0 0
    %1777 = vmatprep.subr.bf16.mxu0 0
    %1778 = vmatpush1.bf16.msra.mxu0 0
    %1779 = vmatprep.subr.bf16.mxu0 0
    %1780 = vmatpush1.bf16.msra.mxu0 0
    %1781 = vmatprep.subr.bf16.mxu0 0
    %1782 = vmatpush1.bf16.msra.mxu0 0
    %1783 = vmatprep.subr.bf16.mxu0 0
    %1784 = vmatpush1.bf16.msra.mxu0 0
    %1785 = vmatprep.mubr.bf16.mxu0 0
    %1786 = vmatmul.mubr.bf16.gmra.mrb[0].mxu0 %v1567
    %v1787 = vpop.f32.mrb[0].mxu0
    %v1788 = vadd.f32 %v674, %v1787
    %v1789 = vpop.f32.mrb[0].mxu0
    %v1790 = vadd.f32 %v678, %v1789
    %v1791 = vpop.f32.mrb[0].mxu0
    %v1792 = vpop.f32.mrb[0].mxu0
    %1793 = vdwg.mxu0
    %1794 = vmatprep.subr.bf16.mxu0 0
    %1795 = vmatpush1.bf16.msra.mxu0 %v768
    %1796 = vmatprep.subr.bf16.mxu0 0
    %1797 = vmatpush1.bf16.msra.mxu0 %v771
    %1798 = vmatprep.subr.bf16.mxu0 0
    %1799 = vmatpush1.bf16.msra.mxu0 %v774
    %1800 = vmatprep.subr.bf16.mxu0 0
    %1801 = vmatpush1.bf16.msra.mxu0 %v777
    %1802 = vmatprep.subr.bf16.mxu0 0
    %1803 = vmatpush1.bf16.msra.mxu0 %v780
    %1804 = vmatprep.subr.bf16.mxu0 0
    %1805 = vmatpush1.bf16.msra.mxu0 %v783
    %1806 = vmatprep.subr.bf16.mxu0 0
    %1807 = vmatpush1.bf16.msra.mxu0 %v786
    %1808 = vmatprep.subr.bf16.mxu0 0
    %1809 = vmatpush1.bf16.msra.mxu0 %v789
    %1810 = vmatprep.subr.bf16.mxu0 0
    %1811 = vmatpush1.bf16.msra.mxu0 0
    %1812 = vmatprep.subr.bf16.mxu0 0
    %1813 = vmatpush1.bf16.msra.mxu0 0
    %1814 = vmatprep.subr.bf16.mxu0 0
    %1815 = vmatpush1.bf16.msra.mxu0 0
    %1816 = vmatprep.subr.bf16.mxu0 0
    %1817 = vmatpush1.bf16.msra.mxu0 0
    %1818 = vmatprep.subr.bf16.mxu0 0
    %1819 = vmatpush1.bf16.msra.mxu0 0
    %1820 = vmatprep.subr.bf16.mxu0 0
    %1821 = vmatpush1.bf16.msra.mxu0 0
    %1822 = vmatprep.subr.bf16.mxu0 0
    %1823 = vmatpush1.bf16.msra.mxu0 0
    %1824 = vmatprep.subr.bf16.mxu0 0
    %1825 = vmatpush1.bf16.msra.mxu0 0
    %1826 = vmatprep.mubr.bf16.mxu0 0
    %1827 = vmatmul.mubr.bf16.gmra.mrb[0].mxu0 %v1567
    %v1828 = vpop.f32.mrb[0].mxu0
    %v1829 = vadd.f32 %v682, %v1828
    %v1830 = vpop.f32.mrb[0].mxu0
    %v1831 = vpop.f32.mrb[0].mxu0
    %v1832 = vpop.f32.mrb[0].mxu0
    %1833 = vdwg.mxu0
    %v1834 = vadd.f32 %v581, %v1788
    %v1835 = vxor.u32 %v1834, 2147483648
    %v1836 = vmul.f32 %v1835, 1.442695
    %v1837 = vpow.pop %v1836
    %v1838 = vadd.f32 %v1837, 1.0
    %v1839 = vrcp.pop %v1838
    %v1840 = vmul.f32 1.0, %v1839
    %v1841 = vadd.f32 %v583, %v1790
    %v1842 = vxor.u32 %v1841, 2147483648
    %v1843 = vmul.f32 %v1842, 1.442695
    %v1844 = vpow.pop %v1843
    %v1845 = vadd.f32 %v1844, 1.0
    %v1846 = vrcp.pop %v1845
    %v1847 = vmul.f32 1.0, %v1846
    %v1848 = vmul.f32 %v1840, %v1829
    %v1849 = vadd.f32 %v632, %v1848
    %v1850 = vtanh.pop %v1849
    %v1851 = vsub.f32 1.0, %v1847
    %v1852 = vmul.f32 %v1851, %v1850
    %v1853 = vmul.f32 %v1847, %v1566
    %v1854 = vadd.f32 %v1852, %v1853
    %v1855 = vsel %vm356, 1, 0
    %1856 = vset.pattern.permute.xlu0 0
    %1857 = vperm.xlu0 %1856, %v1855
    %v1858 = vpop.permute.xlu0 %1857
    %vm1859 = vcmp.eq.s32.totalorder %v1858, 1
    %v1860 = vsel %vm1859, %v1854, %v1566
    %v1861 = vpack.c.bf16 %v1860, %v1860
    %1862 = vmatprep.subr.bf16.mxu0 %v1052
    %1863 = vmatpush1.bf16.msra.mxu0 %v1051
    %1864 = vmatprep.subr.bf16.mxu0 %v1055
    %1865 = vmatpush1.bf16.msra.mxu0 %v1054
    %1866 = vmatprep.subr.bf16.mxu0 %v1058
    %1867 = vmatpush1.bf16.msra.mxu0 %v1057
    %1868 = vmatprep.subr.bf16.mxu0 %v1061
    %1869 = vmatpush1.bf16.msra.mxu0 %v1060
    %1870 = vmatprep.subr.bf16.mxu0 %v1064
    %1871 = vmatpush1.bf16.msra.mxu0 %v1063
    %1872 = vmatprep.subr.bf16.mxu0 %v1067
    %1873 = vmatpush1.bf16.msra.mxu0 %v1066
    %1874 = vmatprep.subr.bf16.mxu0 %v1070
    %1875 = vmatpush1.bf16.msra.mxu0 %v1069
    %1876 = vmatprep.subr.bf16.mxu0 %v1073
    %1877 = vmatpush1.bf16.msra.mxu0 %v1072
    %1878 = vmatprep.subr.bf16.mxu0 0
    %1879 = vmatpush1.bf16.msra.mxu0 0
    %1880 = vmatprep.subr.bf16.mxu0 0
    %1881 = vmatpush1.bf16.msra.mxu0 0
    %1882 = vmatprep.subr.bf16.mxu0 0
    %1883 = vmatpush1.bf16.msra.mxu0 0
    %1884 = vmatprep.subr.bf16.mxu0 0
    %1885 = vmatpush1.bf16.msra.mxu0 0
    %1886 = vmatprep.subr.bf16.mxu0 0
    %1887 = vmatpush1.bf16.msra.mxu0 0
    %1888 = vmatprep.subr.bf16.mxu0 0
    %1889 = vmatpush1.bf16.msra.mxu0 0
    %1890 = vmatprep.subr.bf16.mxu0 0
    %1891 = vmatpush1.bf16.msra.mxu0 0
    %1892 = vmatprep.subr.bf16.mxu0 0
    %1893 = vmatpush1.bf16.msra.mxu0 0
    %1894 = vmatprep.mubr.bf16.mxu0 0
    %1895 = vmatmul.mubr.bf16.gmra.mrb[0].mxu0 %v1861
    %v1896 = vpop.f32.mrb[0].mxu0
    %v1897 = vadd.f32 %v959, %v1896
    %v1898 = vpop.f32.mrb[0].mxu0
    %v1899 = vadd.f32 %v963, %v1898
    %v1900 = vpop.f32.mrb[0].mxu0
    %v1901 = vpop.f32.mrb[0].mxu0
    %1902 = vdwg.mxu0
    %1903 = vmatprep.subr.bf16.mxu0 0
    %1904 = vmatpush1.bf16.msra.mxu0 %v1053
    %1905 = vmatprep.subr.bf16.mxu0 0
    %1906 = vmatpush1.bf16.msra.mxu0 %v1056
    %1907 = vmatprep.subr.bf16.mxu0 0
    %1908 = vmatpush1.bf16.msra.mxu0 %v1059
    %1909 = vmatprep.subr.bf16.mxu0 0
    %1910 = vmatpush1.bf16.msra.mxu0 %v1062
    %1911 = vmatprep.subr.bf16.mxu0 0
    %1912 = vmatpush1.bf16.msra.mxu0 %v1065
    %1913 = vmatprep.subr.bf16.mxu0 0
    %1914 = vmatpush1.bf16.msra.mxu0 %v1068
    %1915 = vmatprep.subr.bf16.mxu0 0
    %1916 = vmatpush1.bf16.msra.mxu0 %v1071
    %1917 = vmatprep.subr.bf16.mxu0 0
    %1918 = vmatpush1.bf16.msra.mxu0 %v1074
    %1919 = vmatprep.subr.bf16.mxu0 0
    %1920 = vmatpush1.bf16.msra.mxu0 0
    %1921 = vmatprep.subr.bf16.mxu0 0
    %1922 = vmatpush1.bf16.msra.mxu0 0
    %1923 = vmatprep.subr.bf16.mxu0 0
    %1924 = vmatpush1.bf16.msra.mxu0 0
    %1925 = vmatprep.subr.bf16.mxu0 0
    %1926 = vmatpush1.bf16.msra.mxu0 0
    %1927 = vmatprep.subr.bf16.mxu0 0
    %1928 = vmatpush1.bf16.msra.mxu0 0
    %1929 = vmatprep.subr.bf16.mxu0 0
    %1930 = vmatpush1.bf16.msra.mxu0 0
    %1931 = vmatprep.subr.bf16.mxu0 0
    %1932 = vmatpush1.bf16.msra.mxu0 0
    %1933 = vmatprep.subr.bf16.mxu0 0
    %1934 = vmatpush1.bf16.msra.mxu0 0
    %1935 = vmatprep.mubr.bf16.mxu0 0
    %1936 = vmatmul.mubr.bf16.gmra.mrb[0].mxu0 %v1861
    %v1937 = vpop.f32.mrb[0].mxu0
    %v1938 = vadd.f32 %v967, %v1937
    %v1939 = vpop.f32.mrb[0].mxu0
    %v1940 = vpop.f32.mrb[0].mxu0
    %v1941 = vpop.f32.mrb[0].mxu0
    %1942 = vdwg.mxu0
    %v1943 = vpack.c.bf16 %v1752, %v1752
    %1944 = vmatprep.subr.bf16.mxu0 %v1309
    %1945 = vmatpush1.bf16.msra.mxu0 %v1308
    %1946 = vmatprep.subr.bf16.mxu0 %v1312
    %1947 = vmatpush1.bf16.msra.mxu0 %v1311
    %1948 = vmatprep.subr.bf16.mxu0 %v1315
    %1949 = vmatpush1.bf16.msra.mxu0 %v1314
    %1950 = vmatprep.subr.bf16.mxu0 %v1318
    %1951 = vmatpush1.bf16.msra.mxu0 %v1317
    %1952 = vmatprep.subr.bf16.mxu0 %v1321
    %1953 = vmatpush1.bf16.msra.mxu0 %v1320
    %1954 = vmatprep.subr.bf16.mxu0 %v1324
    %1955 = vmatpush1.bf16.msra.mxu0 %v1323
    %1956 = vmatprep.subr.bf16.mxu0 %v1327
    %1957 = vmatpush1.bf16.msra.mxu0 %v1326
    %1958 = vmatprep.subr.bf16.mxu0 %v1330
    %1959 = vmatpush1.bf16.msra.mxu0 %v1329
    %1960 = vmatprep.subr.bf16.mxu0 0
    %1961 = vmatpush1.bf16.msra.mxu0 0
    %1962 = vmatprep.subr.bf16.mxu0 0
    %1963 = vmatpush1.bf16.msra.mxu0 0
    %1964 = vmatprep.subr.bf16.mxu0 0
    %1965 = vmatpush1.bf16.msra.mxu0 0
    %1966 = vmatprep.subr.bf16.mxu0 0
    %1967 = vmatpush1.bf16.msra.mxu0 0
    %1968 = vmatprep.subr.bf16.mxu0 0
    %1969 = vmatpush1.bf16.msra.mxu0 0
    %1970 = vmatprep.subr.bf16.mxu0 0
    %1971 = vmatpush1.bf16.msra.mxu0 0
    %1972 = vmatprep.subr.bf16.mxu0 0
    %1973 = vmatpush1.bf16.msra.mxu0 0
    %1974 = vmatprep.subr.bf16.mxu0 0
    %1975 = vmatpush1.bf16.msra.mxu0 0
    %1976 = vmatprep.mubr.bf16.mxu0 0
    %1977 = vmatmul.mubr.bf16.gmra.mrb[0].mxu0 %v1943
    %v1978 = vpop.f32.mrb[0].mxu0
    %v1979 = vadd.f32 %v1216, %v1978
    %v1980 = vpop.f32.mrb[0].mxu0
    %v1981 = vadd.f32 %v1220, %v1980
    %v1982 = vpop.f32.mrb[0].mxu0
    %v1983 = vpop.f32.mrb[0].mxu0
    %1984 = vdwg.mxu0
    %1985 = vmatprep.subr.bf16.mxu0 0
    %1986 = vmatpush1.bf16.msra.mxu0 %v1310
    %1987 = vmatprep.subr.bf16.mxu0 0
    %1988 = vmatpush1.bf16.msra.mxu0 %v1313
    %1989 = vmatprep.subr.bf16.mxu0 0
    %1990 = vmatpush1.bf16.msra.mxu0 %v1316
    %1991 = vmatprep.subr.bf16.mxu0 0
    %1992 = vmatpush1.bf16.msra.mxu0 %v1319
    %1993 = vmatprep.subr.bf16.mxu0 0
    %1994 = vmatpush1.bf16.msra.mxu0 %v1322
    %1995 = vmatprep.subr.bf16.mxu0 0
    %1996 = vmatpush1.bf16.msra.mxu0 %v1325
    %1997 = vmatprep.subr.bf16.mxu0 0
    %1998 = vmatpush1.bf16.msra.mxu0 %v1328
    %1999 = vmatprep.subr.bf16.mxu0 0
    %2000 = vmatpush1.bf16.msra.mxu0 %v1331
    %2001 = vmatprep.subr.bf16.mxu0 0
    %2002 = vmatpush1.bf16.msra.mxu0 0
    %2003 = vmatprep.subr.bf16.mxu0 0
    %2004 = vmatpush1.bf16.msra.mxu0 0
    %2005 = vmatprep.subr.bf16.mxu0 0
    %2006 = vmatpush1.bf16.msra.mxu0 0
    %2007 = vmatprep.subr.bf16.mxu0 0
    %2008 = vmatpush1.bf16.msra.mxu0 0
    %2009 = vmatprep.subr.bf16.mxu0 0
    %2010 = vmatpush1.bf16.msra.mxu0 0
    %2011 = vmatprep.subr.bf16.mxu0 0
    %2012 = vmatpush1.bf16.msra.mxu0 0
    %2013 = vmatprep.subr.bf16.mxu0 0
    %2014 = vmatpush1.bf16.msra.mxu0 0
    %2015 = vmatprep.subr.bf16.mxu0 0
    %2016 = vmatpush1.bf16.msra.mxu0 0
    %2017 = vmatprep.mubr.bf16.mxu0 0
    %2018 = vmatmul.mubr.bf16.gmra.mrb[0].mxu0 %v1943
    %v2019 = vpop.f32.mrb[0].mxu0
    %v2020 = vadd.f32 %v1224, %v2019
    %v2021 = vpop.f32.mrb[0].mxu0
    %v2022 = vpop.f32.mrb[0].mxu0
    %v2023 = vpop.f32.mrb[0].mxu0
    %2024 = vdwg.mxu0
    %v2025 = vadd.f32 %v1897, %v1979
    %v2026 = vxor.u32 %v2025, 2147483648
    %v2027 = vmul.f32 %v2026, 1.442695
    %v2028 = vpow.pop %v2027
    %v2029 = vadd.f32 %v2028, 1.0
    %v2030 = vrcp.pop %v2029
    %v2031 = vmul.f32 1.0, %v2030
    %v2032 = vadd.f32 %v1899, %v1981
    %v2033 = vxor.u32 %v2032, 2147483648
    %v2034 = vmul.f32 %v2033, 1.442695
    %v2035 = vpow.pop %v2034
    %v2036 = vadd.f32 %v2035, 1.0
    %v2037 = vrcp.pop %v2036
    %v2038 = vmul.f32 1.0, %v2037
    %v2039 = vmul.f32 %v2031, %v2020
    %v2040 = vadd.f32 %v1938, %v2039
    %v2041 = vtanh.pop %v2040
    %v2042 = vsub.f32 1.0, %v2038
    %v2043 = vmul.f32 %v2042, %v2041
    %v2044 = vmul.f32 %v2038, %v1752
    %v2045 = vadd.f32 %v2043, %v2044
    %v2046 = vsel %vm1859, %v2045, %v1752
    %2047 = vmatprep.subr.bf16.mxu0 %v767
    %2048 = vmatpush1.bf16.msra.mxu0 %v766
    %2049 = vmatprep.subr.bf16.mxu0 %v770
    %2050 = vmatpush1.bf16.msra.mxu0 %v769
    %2051 = vmatprep.subr.bf16.mxu0 %v773
    %2052 = vmatpush1.bf16.msra.mxu0 %v772
    %2053 = vmatprep.subr.bf16.mxu0 %v776
    %2054 = vmatpush1.bf16.msra.mxu0 %v775
    %2055 = vmatprep.subr.bf16.mxu0 %v779
    %2056 = vmatpush1.bf16.msra.mxu0 %v778
    %2057 = vmatprep.subr.bf16.mxu0 %v782
    %2058 = vmatpush1.bf16.msra.mxu0 %v781
    %2059 = vmatprep.subr.bf16.mxu0 %v785
    %2060 = vmatpush1.bf16.msra.mxu0 %v784
    %2061 = vmatprep.subr.bf16.mxu0 %v788
    %2062 = vmatpush1.bf16.msra.mxu0 %v787
    %2063 = vmatprep.subr.bf16.mxu0 0
    %2064 = vmatpush1.bf16.msra.mxu0 0
    %2065 = vmatprep.subr.bf16.mxu0 0
    %2066 = vmatpush1.bf16.msra.mxu0 0
    %2067 = vmatprep.subr.bf16.mxu0 0
    %2068 = vmatpush1.bf16.msra.mxu0 0
    %2069 = vmatprep.subr.bf16.mxu0 0
    %2070 = vmatpush1.bf16.msra.mxu0 0
    %2071 = vmatprep.subr.bf16.mxu0 0
    %2072 = vmatpush1.bf16.msra.mxu0 0
    %2073 = vmatprep.subr.bf16.mxu0 0
    %2074 = vmatpush1.bf16.msra.mxu0 0
    %2075 = vmatprep.subr.bf16.mxu0 0
    %2076 = vmatpush1.bf16.msra.mxu0 0
    %2077 = vmatprep.subr.bf16.mxu0 0
    %2078 = vmatpush1.bf16.msra.mxu0 0
    %2079 = vmatprep.mubr.bf16.mxu0 0
    %2080 = vmatmul.mubr.bf16.gmra.mrb[0].mxu0 %v1861
    %v2081 = vpop.f32.mrb[0].mxu0
    %v2082 = vadd.f32 %v674, %v2081
    %v2083 = vpop.f32.mrb[0].mxu0
    %v2084 = vadd.f32 %v678, %v2083
    %v2085 = vpop.f32.mrb[0].mxu0
    %v2086 = vpop.f32.mrb[0].mxu0
    %2087 = vdwg.mxu0
    %2088 = vmatprep.subr.bf16.mxu0 0
    %2089 = vmatpush1.bf16.msra.mxu0 %v768
    %2090 = vmatprep.subr.bf16.mxu0 0
    %2091 = vmatpush1.bf16.msra.mxu0 %v771
    %2092 = vmatprep.subr.bf16.mxu0 0
    %2093 = vmatpush1.bf16.msra.mxu0 %v774
    %2094 = vmatprep.subr.bf16.mxu0 0
    %2095 = vmatpush1.bf16.msra.mxu0 %v777
    %2096 = vmatprep.subr.bf16.mxu0 0
    %2097 = vmatpush1.bf16.msra.mxu0 %v780
    %2098 = vmatprep.subr.bf16.mxu0 0
    %2099 = vmatpush1.bf16.msra.mxu0 %v783
    %2100 = vmatprep.subr.bf16.mxu0 0
    %2101 = vmatpush1.bf16.msra.mxu0 %v786
    %2102 = vmatprep.subr.bf16.mxu0 0
    %2103 = vmatpush1.bf16.msra.mxu0 %v789
    %2104 = vmatprep.subr.bf16.mxu0 0
    %2105 = vmatpush1.bf16.msra.mxu0 0
    %2106 = vmatprep.subr.bf16.mxu0 0
    %2107 = vmatpush1.bf16.msra.mxu0 0
    %2108 = vmatprep.subr.bf16.mxu0 0
    %2109 = vmatpush1.bf16.msra.mxu0 0
    %2110 = vmatprep.subr.bf16.mxu0 0
    %2111 = vmatpush1.bf16.msra.mxu0 0
    %2112 = vmatprep.subr.bf16.mxu0 0
    %2113 = vmatpush1.bf16.msra.mxu0 0
    %2114 = vmatprep.subr.bf16.mxu0 0
    %2115 = vmatpush1.bf16.msra.mxu0 0
    %2116 = vmatprep.subr.bf16.mxu0 0
    %2117 = vmatpush1.bf16.msra.mxu0 0
    %2118 = vmatprep.subr.bf16.mxu0 0
    %2119 = vmatpush1.bf16.msra.mxu0 0
    %2120 = vmatprep.mubr.bf16.mxu0 0
    %2121 = vmatmul.mubr.bf16.gmra.mrb[0].mxu0 %v1861
    %v2122 = vpop.f32.mrb[0].mxu0
    %v2123 = vadd.f32 %v682, %v2122
    %v2124 = vpop.f32.mrb[0].mxu0
    %v2125 = vpop.f32.mrb[0].mxu0
    %v2126 = vpop.f32.mrb[0].mxu0
    %2127 = vdwg.mxu0
    %v2128 = vadd.f32 %v585, %v2082
    %v2129 = vxor.u32 %v2128, 2147483648
    %v2130 = vmul.f32 %v2129, 1.442695
    %v2131 = vpow.pop %v2130
    %v2132 = vadd.f32 %v2131, 1.0
    %v2133 = vrcp.pop %v2132
    %v2134 = vmul.f32 1.0, %v2133
    %v2135 = vadd.f32 %v587, %v2084
    %v2136 = vxor.u32 %v2135, 2147483648
    %v2137 = vmul.f32 %v2136, 1.442695
    %v2138 = vpow.pop %v2137
    %v2139 = vadd.f32 %v2138, 1.0
    %v2140 = vrcp.pop %v2139
    %v2141 = vmul.f32 1.0, %v2140
    %v2142 = vmul.f32 %v2134, %v2123
    %v2143 = vadd.f32 %v635, %v2142
    %v2144 = vtanh.pop %v2143
    %v2145 = vsub.f32 1.0, %v2141
    %v2146 = vmul.f32 %v2145, %v2144
    %v2147 = vmul.f32 %v2141, %v1860
    %v2148 = vadd.f32 %v2146, %v2147
    %v2149 = vsel %vm357, 1, 0
    %2150 = vset.pattern.permute.xlu0 0
    %2151 = vperm.xlu0 %2150, %v2149
    %v2152 = vpop.permute.xlu0 %2151
    %vm2153 = vcmp.eq.s32.totalorder %v2152, 1
    %v2154 = vsel %vm2153, %v2148, %v1860
    %v2155 = vpack.c.bf16 %v2154, %v2154
    %2156 = vmatprep.subr.bf16.mxu0 %v1052
    %2157 = vmatpush1.bf16.msra.mxu0 %v1051
    %2158 = vmatprep.subr.bf16.mxu0 %v1055
    %2159 = vmatpush1.bf16.msra.mxu0 %v1054
    %2160 = vmatprep.subr.bf16.mxu0 %v1058
    %2161 = vmatpush1.bf16.msra.mxu0 %v1057
    %2162 = vmatprep.subr.bf16.mxu0 %v1061
    %2163 = vmatpush1.bf16.msra.mxu0 %v1060
    %2164 = vmatprep.subr.bf16.mxu0 %v1064
    %2165 = vmatpush1.bf16.msra.mxu0 %v1063
    %2166 = vmatprep.subr.bf16.mxu0 %v1067
    %2167 = vmatpush1.bf16.msra.mxu0 %v1066
    %2168 = vmatprep.subr.bf16.mxu0 %v1070
    %2169 = vmatpush1.bf16.msra.mxu0 %v1069
    %2170 = vmatprep.subr.bf16.mxu0 %v1073
    %2171 = vmatpush1.bf16.msra.mxu0 %v1072
    %2172 = vmatprep.subr.bf16.mxu0 0
    %2173 = vmatpush1.bf16.msra.mxu0 0
    %2174 = vmatprep.subr.bf16.mxu0 0
    %2175 = vmatpush1.bf16.msra.mxu0 0
    %2176 = vmatprep.subr.bf16.mxu0 0
    %2177 = vmatpush1.bf16.msra.mxu0 0
    %2178 = vmatprep.subr.bf16.mxu0 0
    %2179 = vmatpush1.bf16.msra.mxu0 0
    %2180 = vmatprep.subr.bf16.mxu0 0
    %2181 = vmatpush1.bf16.msra.mxu0 0
    %2182 = vmatprep.subr.bf16.mxu0 0
    %2183 = vmatpush1.bf16.msra.mxu0 0
    %2184 = vmatprep.subr.bf16.mxu0 0
    %2185 = vmatpush1.bf16.msra.mxu0 0
    %2186 = vmatprep.subr.bf16.mxu0 0
    %2187 = vmatpush1.bf16.msra.mxu0 0
    %2188 = vmatprep.mubr.bf16.mxu0 0
    %2189 = vmatmul.mubr.bf16.gmra.mrb[0].mxu0 %v2155
    %v2190 = vpop.f32.mrb[0].mxu0
    %v2191 = vadd.f32 %v959, %v2190
    %v2192 = vpop.f32.mrb[0].mxu0
    %v2193 = vadd.f32 %v963, %v2192
    %v2194 = vpop.f32.mrb[0].mxu0
    %v2195 = vpop.f32.mrb[0].mxu0
    %2196 = vdwg.mxu0
    %2197 = vmatprep.subr.bf16.mxu0 0
    %2198 = vmatpush1.bf16.msra.mxu0 %v1053
    %2199 = vmatprep.subr.bf16.mxu0 0
    %2200 = vmatpush1.bf16.msra.mxu0 %v1056
    %2201 = vmatprep.subr.bf16.mxu0 0
    %2202 = vmatpush1.bf16.msra.mxu0 %v1059
    %2203 = vmatprep.subr.bf16.mxu0 0
    %2204 = vmatpush1.bf16.msra.mxu0 %v1062
    %2205 = vmatprep.subr.bf16.mxu0 0
    %2206 = vmatpush1.bf16.msra.mxu0 %v1065
    %2207 = vmatprep.subr.bf16.mxu0 0
    %2208 = vmatpush1.bf16.msra.mxu0 %v1068
    %2209 = vmatprep.subr.bf16.mxu0 0
    %2210 = vmatpush1.bf16.msra.mxu0 %v1071
    %2211 = vmatprep.subr.bf16.mxu0 0
    %2212 = vmatpush1.bf16.msra.mxu0 %v1074
    %2213 = vmatprep.subr.bf16.mxu0 0
    %2214 = vmatpush1.bf16.msra.mxu0 0
    %2215 = vmatprep.subr.bf16.mxu0 0
    %2216 = vmatpush1.bf16.msra.mxu0 0
    %2217 = vmatprep.subr.bf16.mxu0 0
    %2218 = vmatpush1.bf16.msra.mxu0 0
    %2219 = vmatprep.subr.bf16.mxu0 0
    %2220 = vmatpush1.bf16.msra.mxu0 0
    %2221 = vmatprep.subr.bf16.mxu0 0
    %2222 = vmatpush1.bf16.msra.mxu0 0
    %2223 = vmatprep.subr.bf16.mxu0 0
    %2224 = vmatpush1.bf16.msra.mxu0 0
    %2225 = vmatprep.subr.bf16.mxu0 0
    %2226 = vmatpush1.bf16.msra.mxu0 0
    %2227 = vmatprep.subr.bf16.mxu0 0
    %2228 = vmatpush1.bf16.msra.mxu0 0
    %2229 = vmatprep.mubr.bf16.mxu0 0
    %2230 = vmatmul.mubr.bf16.gmra.mrb[0].mxu0 %v2155
    %v2231 = vpop.f32.mrb[0].mxu0
    %v2232 = vadd.f32 %v967, %v2231
    %v2233 = vpop.f32.mrb[0].mxu0
    %v2234 = vpop.f32.mrb[0].mxu0
    %v2235 = vpop.f32.mrb[0].mxu0
    %2236 = vdwg.mxu0
    %v2237 = vpack.c.bf16 %v2046, %v2046
    %2238 = vmatprep.subr.bf16.mxu0 %v1309
    %2239 = vmatpush1.bf16.msra.mxu0 %v1308
    %2240 = vmatprep.subr.bf16.mxu0 %v1312
    %2241 = vmatpush1.bf16.msra.mxu0 %v1311
    %2242 = vmatprep.subr.bf16.mxu0 %v1315
    %2243 = vmatpush1.bf16.msra.mxu0 %v1314
    %2244 = vmatprep.subr.bf16.mxu0 %v1318
    %2245 = vmatpush1.bf16.msra.mxu0 %v1317
    %2246 = vmatprep.subr.bf16.mxu0 %v1321
    %2247 = vmatpush1.bf16.msra.mxu0 %v1320
    %2248 = vmatprep.subr.bf16.mxu0 %v1324
    %2249 = vmatpush1.bf16.msra.mxu0 %v1323
    %2250 = vmatprep.subr.bf16.mxu0 %v1327
    %2251 = vmatpush1.bf16.msra.mxu0 %v1326
    %2252 = vmatprep.subr.bf16.mxu0 %v1330
    %2253 = vmatpush1.bf16.msra.mxu0 %v1329
    %2254 = vmatprep.subr.bf16.mxu0 0
    %2255 = vmatpush1.bf16.msra.mxu0 0
    %2256 = vmatprep.subr.bf16.mxu0 0
    %2257 = vmatpush1.bf16.msra.mxu0 0
    %2258 = vmatprep.subr.bf16.mxu0 0
    %2259 = vmatpush1.bf16.msra.mxu0 0
    %2260 = vmatprep.subr.bf16.mxu0 0
    %2261 = vmatpush1.bf16.msra.mxu0 0
    %2262 = vmatprep.subr.bf16.mxu0 0
    %2263 = vmatpush1.bf16.msra.mxu0 0
    %2264 = vmatprep.subr.bf16.mxu0 0
    %2265 = vmatpush1.bf16.msra.mxu0 0
    %2266 = vmatprep.subr.bf16.mxu0 0
    %2267 = vmatpush1.bf16.msra.mxu0 0
    %2268 = vmatprep.subr.bf16.mxu0 0
    %2269 = vmatpush1.bf16.msra.mxu0 0
    %2270 = vmatprep.mubr.bf16.mxu0 0
    %2271 = vmatmul.mubr.bf16.gmra.mrb[0].mxu0 %v2237
    %v2272 = vpop.f32.mrb[0].mxu0
    %v2273 = vadd.f32 %v1216, %v2272
    %v2274 = vpop.f32.mrb[0].mxu0
    %v2275 = vadd.f32 %v1220, %v2274
    %v2276 = vpop.f32.mrb[0].mxu0
    %v2277 = vpop.f32.mrb[0].mxu0
    %2278 = vdwg.mxu0
    %2279 = vmatprep.subr.bf16.mxu0 0
    %2280 = vmatpush1.bf16.msra.mxu0 %v1310
    %2281 = vmatprep.subr.bf16.mxu0 0
    %2282 = vmatpush1.bf16.msra.mxu0 %v1313
    %2283 = vmatprep.subr.bf16.mxu0 0
    %2284 = vmatpush1.bf16.msra.mxu0 %v1316
    %2285 = vmatprep.subr.bf16.mxu0 0
    %2286 = vmatpush1.bf16.msra.mxu0 %v1319
    %2287 = vmatprep.subr.bf16.mxu0 0
    %2288 = vmatpush1.bf16.msra.mxu0 %v1322
    %2289 = vmatprep.subr.bf16.mxu0 0
    %2290 = vmatpush1.bf16.msra.mxu0 %v1325
    %2291 = vmatprep.subr.bf16.mxu0 0
    %2292 = vmatpush1.bf16.msra.mxu0 %v1328
    %2293 = vmatprep.subr.bf16.mxu0 0
    %2294 = vmatpush1.bf16.msra.mxu0 %v1331
    %2295 = vmatprep.subr.bf16.mxu0 0
    %2296 = vmatpush1.bf16.msra.mxu0 0
    %2297 = vmatprep.subr.bf16.mxu0 0
    %2298 = vmatpush1.bf16.msra.mxu0 0
    %2299 = vmatprep.subr.bf16.mxu0 0
    %2300 = vmatpush1.bf16.msra.mxu0 0
    %2301 = vmatprep.subr.bf16.mxu0 0
    %2302 = vmatpush1.bf16.msra.mxu0 0
    %2303 = vmatprep.subr.bf16.mxu0 0
    %2304 = vmatpush1.bf16.msra.mxu0 0
    %2305 = vmatprep.subr.bf16.mxu0 0
    %2306 = vmatpush1.bf16.msra.mxu0 0
    %2307 = vmatprep.subr.bf16.mxu0 0
    %2308 = vmatpush1.bf16.msra.mxu0 0
    %2309 = vmatprep.subr.bf16.mxu0 0
    %2310 = vmatpush1.bf16.msra.mxu0 0
    %2311 = vmatprep.mubr.bf16.mxu0 0
    %2312 = vmatmul.mubr.bf16.gmra.mrb[0].mxu0 %v2237
    %v2313 = vpop.f32.mrb[0].mxu0
    %v2314 = vadd.f32 %v1224, %v2313
    %v2315 = vpop.f32.mrb[0].mxu0
    %v2316 = vpop.f32.mrb[0].mxu0
    %v2317 = vpop.f32.mrb[0].mxu0
    %2318 = vdwg.mxu0
    %v2319 = vadd.f32 %v2191, %v2273
    %v2320 = vxor.u32 %v2319, 2147483648
    %v2321 = vmul.f32 %v2320, 1.442695
    %v2322 = vpow.pop %v2321
    %v2323 = vadd.f32 %v2322, 1.0
    %v2324 = vrcp.pop %v2323
    %v2325 = vmul.f32 1.0, %v2324
    %v2326 = vadd.f32 %v2193, %v2275
    %v2327 = vxor.u32 %v2326, 2147483648
    %v2328 = vmul.f32 %v2327, 1.442695
    %v2329 = vpow.pop %v2328
    %v2330 = vadd.f32 %v2329, 1.0
    %v2331 = vrcp.pop %v2330
    %v2332 = vmul.f32 1.0, %v2331
    %v2333 = vmul.f32 %v2325, %v2314
    %v2334 = vadd.f32 %v2232, %v2333
    %v2335 = vtanh.pop %v2334
    %v2336 = vsub.f32 1.0, %v2332
    %v2337 = vmul.f32 %v2336, %v2335
    %v2338 = vmul.f32 %v2332, %v2046
    %v2339 = vadd.f32 %v2337, %v2338
    %v2340 = vsel %vm2153, %v2339, %v2046
    %v2341 = vpack.c.bf16 %v2340, %v2340
    %v2342 = vld [vmem:[#allocation8] sm:$0xf]
    %v2343 = vld [vmem:[#allocation8 + $0x4] sm:$0xf]
    %v2344 = vld [vmem:[#allocation8 + $0x8] sm:$0xf]
    %v2345 = vld [vmem:[#allocation8 + $0xc] sm:$0xf]
    %v2346 = vld [vmem:[#allocation8 + $0x10] sm:$0xf]
    %v2347 = vld [vmem:[#allocation8 + $0x14] sm:$0xf]
    %v2348 = vld [vmem:[#allocation8 + $0x18] sm:$0xf]
    %v2349 = vld [vmem:[#allocation8 + $0x1c] sm:$0xf]
    %v2350 = vld [vmem:[#allocation8 + $0x20] sm:$0xf]
    %v2351 = vld [vmem:[#allocation8 + $0x24] sm:$0xf]
    %v2352 = vld [vmem:[#allocation8 + $0x28] sm:$0xf]
    %v2353 = vld [vmem:[#allocation8 + $0x2c] sm:$0xf]
    %v2354 = vld [vmem:[#allocation8 + $0x30] sm:$0xf]
    %v2355 = vld [vmem:[#allocation8 + $0x34] sm:$0xf]
    %v2356 = vld [vmem:[#allocation8 + $0x38] sm:$0xf]
    %v2357 = vld [vmem:[#allocation8 + $0x3c] sm:$0xf]
    %v2374 = vunpack.c.l.b16 %v2342
    %v2375 = vunpack.c.l.b16 %v2343
    %v2376 = vunpack.c.l.b16 %v2344
    %v2377 = vunpack.c.l.b16 %v2345
    %v2378 = vunpack.c.l.b16 %v2346
    %v2379 = vunpack.c.l.b16 %v2347
    %v2380 = vunpack.c.l.b16 %v2348
    %v2381 = vunpack.c.l.b16 %v2349
    %v2382 = vunpack.c.l.b16 %v2350
    %v2383 = vunpack.c.l.b16 %v2351
    %v2384 = vunpack.c.l.b16 %v2352
    %v2385 = vunpack.c.l.b16 %v2353
    %v2386 = vunpack.c.l.b16 %v2354
    %v2387 = vunpack.c.l.b16 %v2355
    %v2388 = vunpack.c.l.b16 %v2356
    %v2389 = vunpack.c.l.b16 %v2357
    %v2390 = vpack.c.b16 %v2375, %v2374
    %v2391 = vpack.c.b16 %v2377, %v2376
    %v2392 = vpack.c.b16 %v2379, %v2378
    %v2393 = vpack.c.b16 %v2381, %v2380
    %v2394 = vpack.c.b16 %v2383, %v2382
    %v2395 = vpack.c.b16 %v2385, %v2384
    %v2396 = vpack.c.b16 %v2387, %v2386
    %v2397 = vpack.c.b16 %v2389, %v2388
    %2406 = vmatprep.subr.bf16.mxu0 0
    %2407 = vmatpush1.bf16.msra.mxu0 %v2390
    %2408 = vmatprep.subr.bf16.mxu0 0
    %2409 = vmatpush1.bf16.msra.mxu0 %v2391
    %2410 = vmatprep.subr.bf16.mxu0 0
    %2411 = vmatpush1.bf16.msra.mxu0 %v2392
    %2412 = vmatprep.subr.bf16.mxu0 0
    %2413 = vmatpush1.bf16.msra.mxu0 %v2393
    %2414 = vmatprep.subr.bf16.mxu0 0
    %2415 = vmatpush1.bf16.msra.mxu0 %v2394
    %2416 = vmatprep.subr.bf16.mxu0 0
    %2417 = vmatpush1.bf16.msra.mxu0 %v2395
    %2418 = vmatprep.subr.bf16.mxu0 0
    %2419 = vmatpush1.bf16.msra.mxu0 %v2396
    %2420 = vmatprep.subr.bf16.mxu0 0
    %2421 = vmatpush1.bf16.msra.mxu0 %v2397
    %2422 = vmatprep.subr.bf16.mxu0 0
    %2423 = vmatpush1.bf16.msra.mxu0 0
    %2424 = vmatprep.subr.bf16.mxu0 0
    %2425 = vmatpush1.bf16.msra.mxu0 0
    %2426 = vmatprep.subr.bf16.mxu0 0
    %2427 = vmatpush1.bf16.msra.mxu0 0
    %2428 = vmatprep.subr.bf16.mxu0 0
    %2429 = vmatpush1.bf16.msra.mxu0 0
    %2430 = vmatprep.subr.bf16.mxu0 0
    %2431 = vmatpush1.bf16.msra.mxu0 0
    %2432 = vmatprep.subr.bf16.mxu0 0
    %2433 = vmatpush1.bf16.msra.mxu0 0
    %2434 = vmatprep.subr.bf16.mxu0 0
    %2435 = vmatpush1.bf16.msra.mxu0 0
    %2436 = vmatprep.subr.bf16.mxu0 0
    %2437 = vmatpush1.bf16.msra.mxu0 0
    %2438 = vmatprep.mubr.bf16.mxu0 0
    %2439 = vmatmul.mubr.bf16.gmra.mrb[0].mxu0 %v2341
    %v2440 = vpop.f32.mrb[0].mxu0
    %v2441 = vadd.f32 0.0, %v2440
    %v2442 = vpop.f32.mrb[0].mxu0
    %v2443 = vpop.f32.mrb[0].mxu0
    %v2444 = vpop.f32.mrb[0].mxu0
    %2445 = vdwg.mxu0
    %v2446 = vadd.f32 %v219, %v2441
    %v2447 = vadd.f32 %v2446, %v112
    %v2448 = vld [vmem:[%s3] sm:$0xff]
    %v2449 = vpack.c.bf16 %v2447, %v2447
    %v2450 = vpack.c.bf16 %v2448, %v2448
    %v2451 = vld [vmem:[#allocation10] sm:$0xf]
    %v2452 = vld [vmem:[#allocation10 + $0x4] sm:$0xf]
    %v2453 = vld [vmem:[#allocation10 + $0x8] sm:$0xf]
    %v2454 = vld [vmem:[#allocation10 + $0xc] sm:$0xf]
    %v2455 = vld [vmem:[#allocation10 + $0x10] sm:$0xf]
    %v2456 = vld [vmem:[#allocation10 + $0x14] sm:$0xf]
    %v2457 = vld [vmem:[#allocation10 + $0x18] sm:$0xf]
    %v2458 = vld [vmem:[#allocation10 + $0x1c] sm:$0xf]
    %v2459 = vld [vmem:[#allocation10 + $0x20] sm:$0xf]
    %v2460 = vld [vmem:[#allocation10 + $0x24] sm:$0xf]
    %v2461 = vld [vmem:[#allocation10 + $0x28] sm:$0xf]
    %v2462 = vld [vmem:[#allocation10 + $0x2c] sm:$0xf]
    %v2463 = vld [vmem:[#allocation10 + $0x30] sm:$0xf]
    %v2464 = vld [vmem:[#allocation10 + $0x34] sm:$0xf]
    %v2465 = vld [vmem:[#allocation10 + $0x38] sm:$0xf]
    %v2466 = vld [vmem:[#allocation10 + $0x3c] sm:$0xf]
    %v2467 = vld [vmem:[#allocation10 + $0x40] sm:$0xf]
    %v2468 = vld [vmem:[#allocation10 + $0x44] sm:$0xf]
    %v2469 = vld [vmem:[#allocation10 + $0x48] sm:$0xf]
    %v2470 = vld [vmem:[#allocation10 + $0x4c] sm:$0xf]
    %v2471 = vld [vmem:[#allocation10 + $0x50] sm:$0xf]
    %v2472 = vld [vmem:[#allocation10 + $0x54] sm:$0xf]
    %v2473 = vld [vmem:[#allocation10 + $0x58] sm:$0xf]
    %v2474 = vld [vmem:[#allocation10 + $0x5c] sm:$0xf]
    %v2475 = vld [vmem:[#allocation10 + $0x60] sm:$0xf]
    %v2476 = vld [vmem:[#allocation10 + $0x64] sm:$0xf]
    %v2477 = vld [vmem:[#allocation10 + $0x68] sm:$0xf]
    %v2478 = vld [vmem:[#allocation10 + $0x6c] sm:$0xf]
    %v2479 = vld [vmem:[#allocation10 + $0x70] sm:$0xf]
    %v2480 = vld [vmem:[#allocation10 + $0x74] sm:$0xf]
    %v2481 = vld [vmem:[#allocation10 + $0x78] sm:$0xf]
    %v2482 = vld [vmem:[#allocation10 + $0x7c] sm:$0xf]
    %v2515 = vunpack.c.l.b16 %v2451
    %v2516 = vunpack.c.l.b16 %v2452
    %v2517 = vunpack.c.l.b16 %v2453
    %v2518 = vunpack.c.l.b16 %v2454
    %v2519 = vunpack.c.l.b16 %v2455
    %v2520 = vunpack.c.l.b16 %v2456
    %v2521 = vunpack.c.l.b16 %v2457
    %v2522 = vunpack.c.l.b16 %v2458
    %v2523 = vunpack.c.l.b16 %v2459
    %v2524 = vunpack.c.l.b16 %v2460
    %v2525 = vunpack.c.l.b16 %v2461
    %v2526 = vunpack.c.l.b16 %v2462
    %v2527 = vunpack.c.l.b16 %v2463
    %v2528 = vunpack.c.l.b16 %v2464
    %v2529 = vunpack.c.l.b16 %v2465
    %v2530 = vunpack.c.l.b16 %v2466
    %v2531 = vunpack.c.l.b16 %v2467
    %v2532 = vunpack.c.l.b16 %v2468
    %v2533 = vunpack.c.l.b16 %v2469
    %v2534 = vunpack.c.l.b16 %v2470
    %v2535 = vunpack.c.l.b16 %v2471
    %v2536 = vunpack.c.l.b16 %v2472
    %v2537 = vunpack.c.l.b16 %v2473
    %v2538 = vunpack.c.l.b16 %v2474
    %v2539 = vunpack.c.l.b16 %v2475
    %v2540 = vunpack.c.l.b16 %v2476
    %v2541 = vunpack.c.l.b16 %v2477
    %v2542 = vunpack.c.l.b16 %v2478
    %v2543 = vunpack.c.l.b16 %v2479
    %v2544 = vunpack.c.l.b16 %v2480
    %v2545 = vunpack.c.l.b16 %v2481
    %v2546 = vunpack.c.l.b16 %v2482
    %v2547 = vpack.c.b16 %v2516, %v2515
    %v2548 = vpack.c.b16 %v2518, %v2517
    %v2549 = vpack.c.b16 %v2520, %v2519
    %v2550 = vpack.c.b16 %v2522, %v2521
    %v2551 = vpack.c.b16 %v2524, %v2523
    %v2552 = vpack.c.b16 %v2526, %v2525
    %v2553 = vpack.c.b16 %v2528, %v2527
    %v2554 = vpack.c.b16 %v2530, %v2529
    %v2555 = vpack.c.b16 %v2532, %v2531
    %v2556 = vpack.c.b16 %v2534, %v2533
    %v2557 = vpack.c.b16 %v2536, %v2535
    %v2558 = vpack.c.b16 %v2538, %v2537
    %v2559 = vpack.c.b16 %v2540, %v2539
    %v2560 = vpack.c.b16 %v2542, %v2541
    %v2561 = vpack.c.b16 %v2544, %v2543
    %v2562 = vpack.c.b16 %v2546, %v2545
    %2579 = vmatprep.subr.bf16.mxu0 0
    %2580 = vmatpush1.bf16.msra.mxu0 %v2547
    %2581 = vmatprep.subr.bf16.mxu0 0
    %2582 = vmatpush1.bf16.msra.mxu0 %v2548
    %2583 = vmatprep.subr.bf16.mxu0 0
    %2584 = vmatpush1.bf16.msra.mxu0 %v2549
    %2585 = vmatprep.subr.bf16.mxu0 0
    %2586 = vmatpush1.bf16.msra.mxu0 %v2550
    %2587 = vmatprep.subr.bf16.mxu0 0
    %2588 = vmatpush1.bf16.msra.mxu0 %v2551
    %2589 = vmatprep.subr.bf16.mxu0 0
    %2590 = vmatpush1.bf16.msra.mxu0 %v2552
    %2591 = vmatprep.subr.bf16.mxu0 0
    %2592 = vmatpush1.bf16.msra.mxu0 %v2553
    %2593 = vmatprep.subr.bf16.mxu0 0
    %2594 = vmatpush1.bf16.msra.mxu0 %v2554
    %2595 = vmatprep.subr.bf16.mxu0 0
    %2596 = vmatpush1.bf16.msra.mxu0 %v2555
    %2597 = vmatprep.subr.bf16.mxu0 0
    %2598 = vmatpush1.bf16.msra.mxu0 %v2556
    %2599 = vmatprep.subr.bf16.mxu0 0
    %2600 = vmatpush1.bf16.msra.mxu0 %v2557
    %2601 = vmatprep.subr.bf16.mxu0 0
    %2602 = vmatpush1.bf16.msra.mxu0 %v2558
    %2603 = vmatprep.subr.bf16.mxu0 0
    %2604 = vmatpush1.bf16.msra.mxu0 %v2559
    %2605 = vmatprep.subr.bf16.mxu0 0
    %2606 = vmatpush1.bf16.msra.mxu0 %v2560
    %2607 = vmatprep.subr.bf16.mxu0 0
    %2608 = vmatpush1.bf16.msra.mxu0 %v2561
    %2609 = vmatprep.subr.bf16.mxu0 0
    %2610 = vmatpush1.bf16.msra.mxu0 %v2562
    %2611 = vmatprep.mubr.bf16.mxu0 %v2450
    %2612 = vmatmul.mubr.bf16.gmra.mrb[0].mxu0 %v2449
    %v2613 = vpop.f32.mrb[0].mxu0
    %v2614 = vadd.f32 %v113, %v2613
    %v2615 = vpop.f32.mrb[0].mxu0
    %v2616 = vpop.f32.mrb[0].mxu0
    %v2617 = vpop.f32.mrb[0].mxu0
    %2618 = vdwg.mxu0
    %2619 = vst [vmem:[#allocation11] sm:$0xff] %v2614
    // Predicated region
    $region58: #{tpu_custom_call.1} parent=1 // pred_check
      _
    $region59: #{tpu_custom_call.1} parent=1 // pred_check_branch
      %2621 = sbr.rel (0) target = $region61
    $region60: #{tpu_custom_call.1} parent=1 // pred_region
      %s2623 = ssub.s32 128, 128
      %2624 = vsyncadd [#allocation4], %s2623
      %s2626 = sshll.u32 [#allocation11], 4
      %s2627 = int_to_ptr.vmem [resolvable:$true] %s2626
      %2629 = dma.vmem_to_hbm [thread:$0]  %s2627, 128, %s9, [#allocation4]
    $region61: #{tpu_custom_call.1} parent=1 // pred_fallthru
      _
    // Predicated region
    $region62: #{tpu_custom_call.1} parent=1 // pred_check
      _
    $region63: #{tpu_custom_call.1} parent=1 // pred_check_branch
      %2631 = sbr.rel (0) target = $region65
    $region64: #{tpu_custom_call.1} parent=1 // pred_region
      %2632 = dma.done [#allocation4], 128
    $region65: #{tpu_custom_call.1} parent=1 // pred_fallthru
      _
    %2633 = vsyncpa [#allocation3], 1
    %2634 = vsyncpa [#allocation6], 1
    %2635 = vsyncpa [#allocation9], 1
    %2636 = vsyncpa [#allocation4], 1

</llo_original>
